<compile_context>
chip_gen: v5e
topology: v5e:2x2
jax: 0.10.0
libtpu: 0.0.40
codegen_flags: <defaults>
</compile_context>

<pallas_src>
import numpy as np
import jax
import jax.numpy as jnp
from jax.experimental import pallas as pl
from jax.experimental.pallas import tpu as pltpu


# --------------------------------------------------------------------------
# Kernels
# --------------------------------------------------------------------------

def _bigru_fc_kernel(x_ref,
                     wih_f_ref, bih_f_ref,
                     wih_b_ref, bih_b_ref,
                     whh_rf_ref, whh_zf_ref, whh_nf_ref,
                     bhh_rf_ref, bhh_zf_ref, bhh_nf_ref,
                     whh_rb_ref, whh_zb_ref, whh_nb_ref,
                     bhh_rb_ref, bhh_zb_ref, bhh_nb_ref,
                     fcw_f_ref, fcw_b_ref, fcb_ref,
                     out_ref,
                     gi_rf, gi_zf, gi_nf,
                     gi_rb, gi_zb, gi_nb,
                     hf_all, hb_all):
    """Bidirectional single-layer GRU + fused final Linear (time-major).

    x_ref:    (T, Bp, D)   time-major, batch padded to sublane width
    wih_*:    (D, 3H)      pre-transposed input-projection weights (r,z,n)
    bih_*:    (1, 3H)
    whh_{r,z,n}{f,b}: (H, H)   per-gate recurrent weights (pre-transposed)
    bhh_{r,z,n}{f,b}: (1, H)
    fcw_f/fcw_b: (H, O), fcb: (1, O)
    out_ref:  (T, Bp, O)
    gi_*:     (T, Bp, H) scratch -- hoisted per-gate input projections
    hf_all/hb_all: (T, Bp, H) scratch -- per-direction hidden states
    """
    T, Bp, D = x_ref.shape
    H = whh_rf_ref.shape[0]
    O = fcb_ref.shape[-1]

    # --- 1. Hoisted input projections: one big MXU matmul per direction ----
    x_flat = x_ref[...].reshape(T * Bp, D)
    gi_f = (jnp.dot(x_flat, wih_f_ref[...], preferred_element_type=jnp.float32)
            + bih_f_ref[...])
    gi_b = (jnp.dot(x_flat, wih_b_ref[...], preferred_element_type=jnp.float32)
            + bih_b_ref[...])
    # Split once per gate (r, z, n): the hot loop never slices at H offsets.
    gi_rf[...] = gi_f[:, 0:H].reshape(T, Bp, H)
    gi_zf[...] = gi_f[:, H:2 * H].reshape(T, Bp, H)
    gi_nf[...] = gi_f[:, 2 * H:3 * H].reshape(T, Bp, H)
    gi_rb[...] = gi_b[:, 0:H].reshape(T, Bp, H)
    gi_zb[...] = gi_b[:, H:2 * H].reshape(T, Bp, H)
    gi_nb[...] = gi_b[:, 2 * H:3 * H].reshape(T, Bp, H)

    # Loop-invariant recurrent weights, loaded once.
    whh_rf = whh_rf_ref[...]; whh_zf = whh_zf_ref[...]; whh_nf = whh_nf_ref[...]
    bhh_rf = bhh_rf_ref[...]; bhh_zf = bhh_zf_ref[...]; bhh_nf = bhh_nf_ref[...]
    whh_rb = whh_rb_ref[...]; whh_zb = whh_zb_ref[...]; whh_nb = whh_nb_ref[...]
    bhh_rb = bhh_rb_ref[...]; bhh_zb = bhh_zb_ref[...]; bhh_nb = bhh_nb_ref[...]

    def gru_step(gi_r, gi_z, gi_n, h, w_r, w_z, w_n, b_r, b_z, b_n):
        r = jax.nn.sigmoid(
            gi_r + jnp.dot(h, w_r, preferred_element_type=jnp.float32) + b_r)
        z = jax.nn.sigmoid(
            gi_z + jnp.dot(h, w_z, preferred_element_type=jnp.float32) + b_z)
        n = jnp.tanh(
            gi_n + r * (jnp.dot(h, w_n, preferred_element_type=jnp.float32) + b_n))
        return (1.0 - z) * n + z * h

    h0 = jnp.zeros((Bp, H), jnp.float32)

    # --- 2. Single fused, unrolled loop over the two independent chains ----
    def body(i, carry):
        h_f, h_b = carry
        t_b = T - 1 - i
        h_f = gru_step(gi_rf[i], gi_zf[i], gi_nf[i], h_f,
                       whh_rf, whh_zf, whh_nf, bhh_rf, bhh_zf, bhh_nf)
        h_b = gru_step(gi_rb[t_b], gi_zb[t_b], gi_nb[t_b], h_b,
                       whh_rb, whh_zb, whh_nb, bhh_rb, bhh_zb, bhh_nb)
        hf_all[i] = h_f
        hb_all[t_b] = h_b
        return (h_f, h_b)

    jax.lax.fori_loop(0, T, body, (h0, h0), unroll=True)

    # --- 3. Final Linear batched over all timesteps (no per-step concat) ---
    hf_flat = hf_all[...].reshape(T * Bp, H)
    hb_flat = hb_all[...].reshape(T * Bp, H)
    out = (jnp.dot(hf_flat, fcw_f_ref[...], preferred_element_type=jnp.float32)
           + jnp.dot(hb_flat, fcw_b_ref[...], preferred_element_type=jnp.float32)
           + fcb_ref[...])
    out_ref[...] = out.reshape(T, Bp, O)


def _linear_kernel(x_ref, w_ref, b_ref, out_ref):
    """Plain fc branch tile: out = x @ W + b.  x_ref: (TILE_N, D), w_ref: (D, O)."""
    out_ref[...] = (jnp.dot(x_ref[...], w_ref[...],
                            preferred_element_type=jnp.float32)
                    + b_ref[...])


# --------------------------------------------------------------------------
# Module wrapper
# --------------------------------------------------------------------------

class Classifier:
    """JAX/Pallas port of Classifier (bidirectional GRU branch + plain fc branch)."""

    def __init__(self, key, classifier, input_size, hidden_size, out_size,
                 num_layers=1):
        # TODO(synk): num_layers > 1 (stacked RNN) not implemented.
        assert num_layers == 1
        self.classifier = classifier
        self.input_size = input_size
        self.hidden_size = hidden_size
        self.out_size = out_size

        def u(kk, shape, lo, hi):
            return jax.random.uniform(kk, shape, jnp.float32, lo, hi)

        if classifier == 'gru':
            H = hidden_size // 2
            self.H = H
            k = 1.0 / float(np.sqrt(H))
            keys = jax.random.split(key, 9)
            # PyTorch GRU layout: weight_ih (3H, D), weight_hh (3H, H),
            # gate order r, z, n; default init U(-1/sqrt(H), 1/sqrt(H)).
            self.wih_f = u(keys[0], (3 * H, input_size), -k, k)
            self.whh_f = u(keys[1], (3 * H, H), -k, k)
            self.bih_f = u(keys[2], (3 * H,), -k, k)
            self.bhh_f = u(keys[3], (3 * H,), -k, k)
            self.wih_b = u(keys[4], (3 * H, input_size), -k, k)
            self.whh_b = u(keys[5], (3 * H, H), -k, k)
            self.bih_b = u(keys[6], (3 * H,), -k, k)
            self.bhh_b = u(keys[7], (3 * H,), -k, k)
            f_dim = hidden_size
            fc_key = keys[8]
        elif classifier == 'lstm':
            # TODO(synk): LSTM branch not implemented; use 'gru' or the fc path.
            raise NotImplementedError("lstm branch not implemented")
        else:
            f_dim = input_size
            fc_key = key

        wk, bk = jax.random.split(fc_key)
        # nn.init.uniform_(fc.weight, -0.5, 0.5); nn.init.uniform_(fc.bias, -0.1, 0.1)
        self.fc_w = u(wk, (out_size, f_dim), -0.5, 0.5)
        self.fc_b = u(bk, (out_size,), -0.1, 0.1)

        # ---- kernel-layout parameters (pre-transposed / pre-split, built once) ----
        self._k_fcb = self.fc_b.reshape(1, -1)
        if classifier == 'gru':
            H = self.H

            def split_whh(w):  # (3H, H) -> three (H, H) transposed for h @ W
                return (w[0:H].T, w[H:2 * H].T, w[2 * H:3 * H].T)

            def split_b(b):    # (3H,) -> three (1, H)
                return (b[0:H].reshape(1, -1), b[H:2 * H].reshape(1, -1),
                        b[2 * H:3 * H].reshape(1, -1))

            self._k_wih_f = self.wih_f.T            # (D, 3H)
            self._k_bih_f = self.bih_f.reshape(1, -1)
            self._k_wih_b = self.wih_b.T
            self._k_bih_b = self.bih_b.reshape(1, -1)
            self._k_whh_f = split_whh(self.whh_f)
            self._k_whh_b = split_whh(self.whh_b)
            self._k_bhh_f = split_b(self.bhh_f)
            self._k_bhh_b = split_b(self.bhh_b)
            self._k_fcw_f = self.fc_w[:, :H].T      # (H, O)
            self._k_fcw_b = self.fc_w[:, H:].T      # (H, O)
        else:
            self._k_fcw = self.fc_w.T               # (D, O)

    # ---- forward paths -------------------------------------------------

    def _forward_gru(self, x):
        B, T, D = x.shape
        H, O = self.H, self.out_size

        # Pad batch to the sublane width so in-kernel vreg ops / stores are
        # full (8, lane) tiles instead of masked partials.
        Bp = ((B + 7) // 8) * 8
        x32 = x.astype(jnp.float32)
        if Bp != B:
            x32 = jnp.concatenate(
                [x32, jnp.zeros((Bp - B, T, D), jnp.float32)], axis=0)
        x_tbd = jnp.transpose(x32, (1, 0, 2))                      # (T, Bp, D)

        args = (
            x_tbd,
            self._k_wih_f, self._k_bih_f,
            self._k_wih_b, self._k_bih_b,
            self._k_whh_f[0], self._k_whh_f[1], self._k_whh_f[2],
            self._k_bhh_f[0], self._k_bhh_f[1], self._k_bhh_f[2],
            self._k_whh_b[0], self._k_whh_b[1], self._k_whh_b[2],
            self._k_bhh_b[0], self._k_bhh_b[1], self._k_bhh_b[2],
            self._k_fcw_f, self._k_fcw_b, self._k_fcb,
        )

        flops = (2 * 2 * T * Bp * D * 3 * H          # hoisted input projections
                 + 2 * T * 3 * 2 * Bp * H * H        # h-recurrence matmuls
                 + 2 * 2 * T * Bp * H * O)           # final linear
        transcendentals = 2 * T * Bp * 3 * H
        bytes_accessed = 4 * (T * Bp * D + T * Bp * O
                              + 2 * (D * 3 * H + 3 * H)
                              + 2 * 3 * (H * H + H)
                              + 2 * H * O + O)

        out_tbo = pl.pallas_call(
            _bigru_fc_kernel,
            out_shape=jax.ShapeDtypeStruct((T, Bp, O), jnp.float32),
            in_specs=[pl.BlockSpec(memory_space=pltpu.MemorySpace.VMEM)] * len(args),
            out_specs=pl.BlockSpec(memory_space=pltpu.MemorySpace.VMEM),
            scratch_shapes=[pltpu.VMEM((T, Bp, H), jnp.float32)] * 8,
            cost_estimate=pl.CostEstimate(flops=flops,
                                          transcendentals=transcendentals,
                                          bytes_accessed=bytes_accessed),
        )(*args)
        # TODO(synk): for long T this whole-array-in-VMEM layout should be
        # replaced by a T-chunked grid (v7x has only 64 MiB VMEM).
        return jnp.transpose(out_tbo, (1, 0, 2))[:B]               # (B, T, O)

    def _forward_fc(self, x):
        orig = x.shape
        D = orig[-1]
        O = self.out_size
        flat = x.reshape(-1, D).astype(jnp.float32)
        N = flat.shape[0]

        TILE_N = N if N <= 512 else 512
        grid = (pl.cdiv(N, TILE_N),)
        cost = pl.CostEstimate(flops=2 * N * D * O, transcendentals=0,
                               bytes_accessed=4 * (N * D + D * O + O + N * O))
        out = pl.pallas_call(
            _linear_kernel,
            out_shape=jax.ShapeDtypeStruct((N, O), jnp.float32),
            grid=grid,
            in_specs=[pl.BlockSpec((TILE_N, D), lambda i: (i, 0)),
                      pl.BlockSpec((D, O), lambda i: (0, 0)),
                      pl.BlockSpec((1, O), lambda i: (0, 0))],
            out_specs=pl.BlockSpec((TILE_N, O), lambda i: (i, 0)),
            compiler_params=pltpu.CompilerParams(
                dimension_semantics=("parallel",)),
            cost_estimate=cost,
        )(flat, self._k_fcw, self._k_fcb)
        return out.reshape(orig[:-1] + (O,))

    def __call__(self, x):
        if self.classifier == 'gru':
            return self._forward_gru(x)
        return self._forward_fc(x)


# ---- pure-JAX reference (mirrors PyTorch semantics) ---------------------

def _gru_ref(x, wih, whh, bih, bhh, reverse=False):
    B, T, _ = x.shape
    H = whh.shape[1]
    h = jnp.zeros((B, H), jnp.float32)
    ts = range(T - 1, -1, -1) if reverse else range(T)
    outs = [None] * T
    for t in ts:
        gi = x[:, t, :] @ wih.T + bih
        gh = h @ whh.T + bhh
        r = jax.nn.sigmoid(gi[:, :H] + gh[:, :H])
        z = jax.nn.sigmoid(gi[:, H:2 * H] + gh[:, H:2 * H])
        n = jnp.tanh(gi[:, 2 * H:] + r * gh[:, 2 * H:])
        h = (1.0 - z) * n + z * h
        outs[t] = h
    return jnp.stack(outs, axis=1)                                   # (B, T, H)


def classifier_ref(m, x):
    if m.classifier == 'gru':
        hf = _gru_ref(x, m.wih_f, m.whh_f, m.bih_f, m.bhh_f, reverse=False)
        hb = _gru_ref(x, m.wih_b, m.whh_b, m.bih_b, m.bhh_b, reverse=True)
        out = jnp.concatenate([hf, hb], axis=-1)
    else:
        out = x
    return out @ m.fc_w.T + m.fc_b


if __name__ == "__main__":
    key = jax.random.PRNGKey(0)
    pkey, xkey = jax.random.split(key)

    B, T, D, HIDDEN, OUT = 2, 8, 32, 32, 8
    x = jax.random.normal(xkey, (B, T, D), jnp.float32)

    # GRU branch
    model = Classifier(pkey, 'gru', D, HIDDEN, OUT)
    out = jax.block_until_ready(model(x))
    assert out.shape == (B, T, OUT)
    ref = classifier_ref(model, x)
    np.testing.assert_allclose(np.asarray(out), np.asarray(ref),
                               rtol=5e-3, atol=5e-3)

    # plain fc branch (classifier not gru/lstm)
    model2 = Classifier(pkey, 'none', D, HIDDEN, OUT)
    out2 = jax.block_until_ready(model2(x))
    assert out2.shape == (B, T, OUT)
    ref2 = classifier_ref(model2, x)
    np.testing.assert_allclose(np.asarray(out2), np.asarray(ref2),
                               rtol=5e-3, atol=5e-3)

    print("KERNEL_OK")
</pallas_src>

<mosaic_0001>
module attributes {stable_mosaic.version = 11 : i64} {
  func.func @_bigru_fc_kernel(%arg0: memref<8x8x32xf32, #tpu.memory_space<vmem>>, %arg1: memref<32x48xf32, #tpu.memory_space<vmem>>, %arg2: memref<1x48xf32, #tpu.memory_space<vmem>>, %arg3: memref<32x48xf32, #tpu.memory_space<vmem>>, %arg4: memref<1x48xf32, #tpu.memory_space<vmem>>, %arg5: memref<16x16xf32, #tpu.memory_space<vmem>>, %arg6: memref<16x16xf32, #tpu.memory_space<vmem>>, %arg7: memref<16x16xf32, #tpu.memory_space<vmem>>, %arg8: memref<1x16xf32, #tpu.memory_space<vmem>>, %arg9: memref<1x16xf32, #tpu.memory_space<vmem>>, %arg10: memref<1x16xf32, #tpu.memory_space<vmem>>, %arg11: memref<16x16xf32, #tpu.memory_space<vmem>>, %arg12: memref<16x16xf32, #tpu.memory_space<vmem>>, %arg13: memref<16x16xf32, #tpu.memory_space<vmem>>, %arg14: memref<1x16xf32, #tpu.memory_space<vmem>>, %arg15: memref<1x16xf32, #tpu.memory_space<vmem>>, %arg16: memref<1x16xf32, #tpu.memory_space<vmem>>, %arg17: memref<16x8xf32, #tpu.memory_space<vmem>>, %arg18: memref<16x8xf32, #tpu.memory_space<vmem>>, %arg19: memref<1x8xf32, #tpu.memory_space<vmem>>, %arg20: memref<8x8x8xf32, #tpu.memory_space<vmem>>, %arg21: memref<8x8x16xf32, #tpu.memory_space<vmem>>, %arg22: memref<8x8x16xf32, #tpu.memory_space<vmem>>, %arg23: memref<8x8x16xf32, #tpu.memory_space<vmem>>, %arg24: memref<8x8x16xf32, #tpu.memory_space<vmem>>, %arg25: memref<8x8x16xf32, #tpu.memory_space<vmem>>, %arg26: memref<8x8x16xf32, #tpu.memory_space<vmem>>, %arg27: memref<8x8x16xf32, #tpu.memory_space<vmem>>, %arg28: memref<8x8x16xf32, #tpu.memory_space<vmem>>) attributes {dimension_semantics = [], scalar_prefetch = 0 : i64, scratch_operands = 8 : i64, tpu.core_type = #tpu.core_type<tc>} {
    %c0 = arith.constant 0 : index
    %c0_0 = arith.constant 0 : index
    %c0_1 = arith.constant 0 : index
    %0 = vector.load %arg0[%c0, %c0_0, %c0_1] : memref<8x8x32xf32, #tpu.memory_space<vmem>>, vector<8x8x32xf32>
    %1 = vector.shape_cast %0 : vector<8x8x32xf32> to vector<64x32xf32>
    %c0_2 = arith.constant 0 : index
    %c0_3 = arith.constant 0 : index
    %2 = vector.load %arg1[%c0_2, %c0_3] : memref<32x48xf32, #tpu.memory_space<vmem>>, vector<32x48xf32>
    %cst = arith.constant dense<0.000000e+00> : vector<64x48xf32>
    %3 = tpu.matmul %1, %2, %cst {dimension_numbers = #tpu.dot_dimension_numbers<[1], [0], [0], [1], [0, 0, 1, 1], [], []>} : vector<64x32xf32>, vector<32x48xf32>, vector<64x48xf32> -> vector<64x48xf32>
    %c0_4 = arith.constant 0 : index
    %c0_5 = arith.constant 0 : index
    %4 = vector.load %arg2[%c0_4, %c0_5] : memref<1x48xf32, #tpu.memory_space<vmem>>, vector<1x48xf32>
    %5 = vector.broadcast %4 : vector<1x48xf32> to vector<64x48xf32>
    %6 = arith.addf %3, %5 : vector<64x48xf32>
    %c0_6 = arith.constant 0 : index
    %c0_7 = arith.constant 0 : index
    %7 = vector.load %arg3[%c0_6, %c0_7] : memref<32x48xf32, #tpu.memory_space<vmem>>, vector<32x48xf32>
    %cst_8 = arith.constant dense<0.000000e+00> : vector<64x48xf32>
    %8 = tpu.matmul %1, %7, %cst_8 {dimension_numbers = #tpu.dot_dimension_numbers<[1], [0], [0], [1], [0, 0, 1, 1], [], []>} : vector<64x32xf32>, vector<32x48xf32>, vector<64x48xf32> -> vector<64x48xf32>
    %c0_9 = arith.constant 0 : index
    %c0_10 = arith.constant 0 : index
    %9 = vector.load %arg4[%c0_9, %c0_10] : memref<1x48xf32, #tpu.memory_space<vmem>>, vector<1x48xf32>
    %10 = vector.broadcast %9 : vector<1x48xf32> to vector<64x48xf32>
    %11 = arith.addf %8, %10 : vector<64x48xf32>
    %12 = vector.extract_strided_slice %6 {offsets = [0, 0], sizes = [64, 16], strides = [1, 1]} : vector<64x48xf32> to vector<64x16xf32>
    %13 = vector.shape_cast %12 : vector<64x16xf32> to vector<8x8x16xf32>
    %c0_11 = arith.constant 0 : index
    %c0_12 = arith.constant 0 : index
    %c0_13 = arith.constant 0 : index
    %14 = vector.load %arg21[%c0_11, %c0_12, %c0_13] : memref<8x8x16xf32, #tpu.memory_space<vmem>>, vector<8x8x16xf32>
    tpu.vector_store %arg21[%c0_11, %c0_12, %c0_13], %13 {strides = array<i32>} : memref<8x8x16xf32, #tpu.memory_space<vmem>>, vector<8x8x16xf32>,
    %15 = vector.extract_strided_slice %6 {offsets = [0, 16], sizes = [64, 16], strides = [1, 1]} : vector<64x48xf32> to vector<64x16xf32>
    %16 = vector.shape_cast %15 : vector<64x16xf32> to vector<8x8x16xf32>
    %c0_14 = arith.constant 0 : index
    %c0_15 = arith.constant 0 : index
    %c0_16 = arith.constant 0 : index
    %17 = vector.load %arg22[%c0_14, %c0_15, %c0_16] : memref<8x8x16xf32, #tpu.memory_space<vmem>>, vector<8x8x16xf32>
    tpu.vector_store %arg22[%c0_14, %c0_15, %c0_16], %16 {strides = array<i32>} : memref<8x8x16xf32, #tpu.memory_space<vmem>>, vector<8x8x16xf32>,
    %18 = vector.extract_strided_slice %6 {offsets = [0, 32], sizes = [64, 16], strides = [1, 1]} : vector<64x48xf32> to vector<64x16xf32>
    %19 = vector.shape_cast %18 : vector<64x16xf32> to vector<8x8x16xf32>
    %c0_17 = arith.constant 0 : index
    %c0_18 = arith.constant 0 : index
    %c0_19 = arith.constant 0 : index
    %20 = vector.load %arg23[%c0_17, %c0_18, %c0_19] : memref<8x8x16xf32, #tpu.memory_space<vmem>>, vector<8x8x16xf32>
    tpu.vector_store %arg23[%c0_17, %c0_18, %c0_19], %19 {strides = array<i32>} : memref<8x8x16xf32, #tpu.memory_space<vmem>>, vector<8x8x16xf32>,
    %21 = vector.extract_strided_slice %11 {offsets = [0, 0], sizes = [64, 16], strides = [1, 1]} : vector<64x48xf32> to vector<64x16xf32>
    %22 = vector.shape_cast %21 : vector<64x16xf32> to vector<8x8x16xf32>
    %c0_20 = arith.constant 0 : index
    %c0_21 = arith.constant 0 : index
    %c0_22 = arith.constant 0 : index
    %23 = vector.load %arg24[%c0_20, %c0_21, %c0_22] : memref<8x8x16xf32, #tpu.memory_space<vmem>>, vector<8x8x16xf32>
    tpu.vector_store %arg24[%c0_20, %c0_21, %c0_22], %22 {strides = array<i32>} : memref<8x8x16xf32, #tpu.memory_space<vmem>>, vector<8x8x16xf32>,
    %24 = vector.extract_strided_slice %11 {offsets = [0, 16], sizes = [64, 16], strides = [1, 1]} : vector<64x48xf32> to vector<64x16xf32>
    %25 = vector.shape_cast %24 : vector<64x16xf32> to vector<8x8x16xf32>
    %c0_23 = arith.constant 0 : index
    %c0_24 = arith.constant 0 : index
    %c0_25 = arith.constant 0 : index
    %26 = vector.load %arg25[%c0_23, %c0_24, %c0_25] : memref<8x8x16xf32, #tpu.memory_space<vmem>>, vector<8x8x16xf32>
    tpu.vector_store %arg25[%c0_23, %c0_24, %c0_25], %25 {strides = array<i32>} : memref<8x8x16xf32, #tpu.memory_space<vmem>>, vector<8x8x16xf32>,
    %27 = vector.extract_strided_slice %11 {offsets = [0, 32], sizes = [64, 16], strides = [1, 1]} : vector<64x48xf32> to vector<64x16xf32>
    %28 = vector.shape_cast %27 : vector<64x16xf32> to vector<8x8x16xf32>
    %c0_26 = arith.constant 0 : index
    %c0_27 = arith.constant 0 : index
    %c0_28 = arith.constant 0 : index
    %29 = vector.load %arg26[%c0_26, %c0_27, %c0_28] : memref<8x8x16xf32, #tpu.memory_space<vmem>>, vector<8x8x16xf32>
    tpu.vector_store %arg26[%c0_26, %c0_27, %c0_28], %28 {strides = array<i32>} : memref<8x8x16xf32, #tpu.memory_space<vmem>>, vector<8x8x16xf32>,
    %c0_29 = arith.constant 0 : index
    %c0_30 = arith.constant 0 : index
    %30 = vector.load %arg5[%c0_29, %c0_30] : memref<16x16xf32, #tpu.memory_space<vmem>>, vector<16x16xf32>
    %c0_31 = arith.constant 0 : index
    %c0_32 = arith.constant 0 : index
    %31 = vector.load %arg6[%c0_31, %c0_32] : memref<16x16xf32, #tpu.memory_space<vmem>>, vector<16x16xf32>
    %c0_33 = arith.constant 0 : index
    %c0_34 = arith.constant 0 : index
    %32 = vector.load %arg7[%c0_33, %c0_34] : memref<16x16xf32, #tpu.memory_space<vmem>>, vector<16x16xf32>
    %c0_35 = arith.constant 0 : index
    %c0_36 = arith.constant 0 : index
    %33 = vector.load %arg8[%c0_35, %c0_36] : memref<1x16xf32, #tpu.memory_space<vmem>>, vector<1x16xf32>
    %c0_37 = arith.constant 0 : index
    %c0_38 = arith.constant 0 : index
    %34 = vector.load %arg9[%c0_37, %c0_38] : memref<1x16xf32, #tpu.memory_space<vmem>>, vector<1x16xf32>
    %c0_39 = arith.constant 0 : index
    %c0_40 = arith.constant 0 : index
    %35 = vector.load %arg10[%c0_39, %c0_40] : memref<1x16xf32, #tpu.memory_space<vmem>>, vector<1x16xf32>
    %c0_41 = arith.constant 0 : index
    %c0_42 = arith.constant 0 : index
    %36 = vector.load %arg11[%c0_41, %c0_42] : memref<16x16xf32, #tpu.memory_space<vmem>>, vector<16x16xf32>
    %c0_43 = arith.constant 0 : index
    %c0_44 = arith.constant 0 : index
    %37 = vector.load %arg12[%c0_43, %c0_44] : memref<16x16xf32, #tpu.memory_space<vmem>>, vector<16x16xf32>
    %c0_45 = arith.constant 0 : index
    %c0_46 = arith.constant 0 : index
    %38 = vector.load %arg13[%c0_45, %c0_46] : memref<16x16xf32, #tpu.memory_space<vmem>>, vector<16x16xf32>
    %c0_47 = arith.constant 0 : index
    %c0_48 = arith.constant 0 : index
    %39 = vector.load %arg14[%c0_47, %c0_48] : memref<1x16xf32, #tpu.memory_space<vmem>>, vector<1x16xf32>
    %c0_49 = arith.constant 0 : index
    %c0_50 = arith.constant 0 : index
    %40 = vector.load %arg15[%c0_49, %c0_50] : memref<1x16xf32, #tpu.memory_space<vmem>>, vector<1x16xf32>
    %c0_51 = arith.constant 0 : index
    %c0_52 = arith.constant 0 : index
    %41 = vector.load %arg16[%c0_51, %c0_52] : memref<1x16xf32, #tpu.memory_space<vmem>>, vector<1x16xf32>
    %cst_53 = arith.constant 0.000000e+00 : f32
    %42 = vector.broadcast %cst_53 : f32 to vector<8x16xf32>
    %c0_i32 = arith.constant 0 : i32
    %c7_i32 = arith.constant 7 : i32
    %43 = arith.subi %c7_i32, %c0_i32 : i32
    %44 = arith.index_cast %c0_i32 : i32 to index
    %c0_54 = arith.constant 0 : index
    %c0_55 = arith.constant 0 : index
    %45 = vector.load %arg21[%44, %c0_54, %c0_55] : memref<8x8x16xf32, #tpu.memory_space<vmem>>, vector<1x8x16xf32>
    %46 = vector.shape_cast %45 : vector<1x8x16xf32> to vector<8x16xf32>
    %47 = arith.index_cast %c0_i32 : i32 to index
    %c0_56 = arith.constant 0 : index
    %c0_57 = arith.constant 0 : index
    %48 = vector.load %arg22[%47, %c0_56, %c0_57] : memref<8x8x16xf32, #tpu.memory_space<vmem>>, vector<1x8x16xf32>
    %49 = vector.shape_cast %48 : vector<1x8x16xf32> to vector<8x16xf32>
    %50 = arith.index_cast %c0_i32 : i32 to index
    %c0_58 = arith.constant 0 : index
    %c0_59 = arith.constant 0 : index
    %51 = vector.load %arg23[%50, %c0_58, %c0_59] : memref<8x8x16xf32, #tpu.memory_space<vmem>>, vector<1x8x16xf32>
    %52 = vector.shape_cast %51 : vector<1x8x16xf32> to vector<8x16xf32>
    %cst_60 = arith.constant dense<0.000000e+00> : vector<8x16xf32>
    %53 = tpu.matmul %42, %30, %cst_60 {dimension_numbers = #tpu.dot_dimension_numbers<[1], [0], [0], [1], [0, 0, 1, 1], [], []>} : vector<8x16xf32>, vector<16x16xf32>, vector<8x16xf32> -> vector<8x16xf32>
    %54 = arith.addf %46, %53 : vector<8x16xf32>
    %55 = vector.broadcast %33 : vector<1x16xf32> to vector<8x16xf32>
    %56 = arith.addf %54, %55 : vector<8x16xf32>
    %57 = arith.negf %56 : vector<8x16xf32>
    %58 = math.exp %57 : vector<8x16xf32>
    %cst_61 = arith.constant 1.000000e+00 : f32
    %59 = vector.broadcast %cst_61 : f32 to vector<8x16xf32>
    %60 = arith.addf %59, %58 : vector<8x16xf32>
    %61 = arith.divf %59, %60 : vector<8x16xf32>
    %cst_62 = arith.constant dense<0.000000e+00> : vector<8x16xf32>
    %62 = tpu.matmul %42, %31, %cst_62 {dimension_numbers = #tpu.dot_dimension_numbers<[1], [0], [0], [1], [0, 0, 1, 1], [], []>} : vector<8x16xf32>, vector<16x16xf32>, vector<8x16xf32> -> vector<8x16xf32>
    %63 = arith.addf %49, %62 : vector<8x16xf32>
    %64 = vector.broadcast %34 : vector<1x16xf32> to vector<8x16xf32>
    %65 = arith.addf %63, %64 : vector<8x16xf32>
    %66 = arith.negf %65 : vector<8x16xf32>
    %67 = math.exp %66 : vector<8x16xf32>
    %cst_63 = arith.constant 1.000000e+00 : f32
    %68 = vector.broadcast %cst_63 : f32 to vector<8x16xf32>
    %69 = arith.addf %68, %67 : vector<8x16xf32>
    %70 = arith.divf %68, %69 : vector<8x16xf32>
    %cst_64 = arith.constant dense<0.000000e+00> : vector<8x16xf32>
    %71 = tpu.matmul %42, %32, %cst_64 {dimension_numbers = #tpu.dot_dimension_numbers<[1], [0], [0], [1], [0, 0, 1, 1], [], []>} : vector<8x16xf32>, vector<16x16xf32>, vector<8x16xf32> -> vector<8x16xf32>
    %72 = vector.broadcast %35 : vector<1x16xf32> to vector<8x16xf32>
    %73 = arith.addf %71, %72 : vector<8x16xf32>
    %74 = arith.mulf %61, %73 : vector<8x16xf32>
    %75 = arith.addf %52, %74 : vector<8x16xf32>
    %76 = math.tanh %75 : vector<8x16xf32>
    %cst_65 = arith.constant 1.000000e+00 : f32
    %77 = vector.broadcast %cst_65 : f32 to vector<8x16xf32>
    %78 = arith.subf %77, %70 : vector<8x16xf32>
    %79 = arith.mulf %78, %76 : vector<8x16xf32>
    %80 = arith.mulf %70, %42 : vector<8x16xf32>
    %81 = arith.addf %79, %80 : vector<8x16xf32>
    %82 = arith.index_cast %43 : i32 to index
    %c0_66 = arith.constant 0 : index
    %c0_67 = arith.constant 0 : index
    %83 = vector.load %arg24[%82, %c0_66, %c0_67] : memref<8x8x16xf32, #tpu.memory_space<vmem>>, vector<1x8x16xf32>
    %84 = vector.shape_cast %83 : vector<1x8x16xf32> to vector<8x16xf32>
    %85 = arith.index_cast %43 : i32 to index
    %c0_68 = arith.constant 0 : index
    %c0_69 = arith.constant 0 : index
    %86 = vector.load %arg25[%85, %c0_68, %c0_69] : memref<8x8x16xf32, #tpu.memory_space<vmem>>, vector<1x8x16xf32>
    %87 = vector.shape_cast %86 : vector<1x8x16xf32> to vector<8x16xf32>
    %88 = arith.index_cast %43 : i32 to index
    %c0_70 = arith.constant 0 : index
    %c0_71 = arith.constant 0 : index
    %89 = vector.load %arg26[%88, %c0_70, %c0_71] : memref<8x8x16xf32, #tpu.memory_space<vmem>>, vector<1x8x16xf32>
    %90 = vector.shape_cast %89 : vector<1x8x16xf32> to vector<8x16xf32>
    %cst_72 = arith.constant dense<0.000000e+00> : vector<8x16xf32>
    %91 = tpu.matmul %42, %36, %cst_72 {dimension_numbers = #tpu.dot_dimension_numbers<[1], [0], [0], [1], [0, 0, 1, 1], [], []>} : vector<8x16xf32>, vector<16x16xf32>, vector<8x16xf32> -> vector<8x16xf32>
    %92 = arith.addf %84, %91 : vector<8x16xf32>
    %93 = vector.broadcast %39 : vector<1x16xf32> to vector<8x16xf32>
    %94 = arith.addf %92, %93 : vector<8x16xf32>
    %95 = arith.negf %94 : vector<8x16xf32>
    %96 = math.exp %95 : vector<8x16xf32>
    %cst_73 = arith.constant 1.000000e+00 : f32
    %97 = vector.broadcast %cst_73 : f32 to vector<8x16xf32>
    %98 = arith.addf %97, %96 : vector<8x16xf32>
    %99 = arith.divf %97, %98 : vector<8x16xf32>
    %cst_74 = arith.constant dense<0.000000e+00> : vector<8x16xf32>
    %100 = tpu.matmul %42, %37, %cst_74 {dimension_numbers = #tpu.dot_dimension_numbers<[1], [0], [0], [1], [0, 0, 1, 1], [], []>} : vector<8x16xf32>, vector<16x16xf32>, vector<8x16xf32> -> vector<8x16xf32>
    %101 = arith.addf %87, %100 : vector<8x16xf32>
    %102 = vector.broadcast %40 : vector<1x16xf32> to vector<8x16xf32>
    %103 = arith.addf %101, %102 : vector<8x16xf32>
    %104 = arith.negf %103 : vector<8x16xf32>
    %105 = math.exp %104 : vector<8x16xf32>
    %cst_75 = arith.constant 1.000000e+00 : f32
    %106 = vector.broadcast %cst_75 : f32 to vector<8x16xf32>
    %107 = arith.addf %106, %105 : vector<8x16xf32>
    %108 = arith.divf %106, %107 : vector<8x16xf32>
    %cst_76 = arith.constant dense<0.000000e+00> : vector<8x16xf32>
    %109 = tpu.matmul %42, %38, %cst_76 {dimension_numbers = #tpu.dot_dimension_numbers<[1], [0], [0], [1], [0, 0, 1, 1], [], []>} : vector<8x16xf32>, vector<16x16xf32>, vector<8x16xf32> -> vector<8x16xf32>
    %110 = vector.broadcast %41 : vector<1x16xf32> to vector<8x16xf32>
    %111 = arith.addf %109, %110 : vector<8x16xf32>
    %112 = arith.mulf %99, %111 : vector<8x16xf32>
    %113 = arith.addf %90, %112 : vector<8x16xf32>
    %114 = math.tanh %113 : vector<8x16xf32>
    %cst_77 = arith.constant 1.000000e+00 : f32
    %115 = vector.broadcast %cst_77 : f32 to vector<8x16xf32>
    %116 = arith.subf %115, %108 : vector<8x16xf32>
    %117 = arith.mulf %116, %114 : vector<8x16xf32>
    %118 = arith.mulf %108, %42 : vector<8x16xf32>
    %119 = arith.addf %117, %118 : vector<8x16xf32>
    %120 = arith.index_cast %c0_i32 : i32 to index
    %c0_78 = arith.constant 0 : index
    %c0_79 = arith.constant 0 : index
    %121 = vector.load %arg27[%120, %c0_78, %c0_79] : memref<8x8x16xf32, #tpu.memory_space<vmem>>, vector<1x8x16xf32>
    %122 = vector.shape_cast %121 : vector<1x8x16xf32> to vector<8x16xf32>
    %123 = vector.shape_cast %81 : vector<8x16xf32> to vector<1x8x16xf32>
    tpu.vector_store %arg27[%120, %c0_78, %c0_79], %123 {strides = array<i32>} : memref<8x8x16xf32, #tpu.memory_space<vmem>>, vector<1x8x16xf32>,
    %124 = arith.index_cast %43 : i32 to index
    %c0_80 = arith.constant 0 : index
    %c0_81 = arith.constant 0 : index
    %125 = vector.load %arg28[%124, %c0_80, %c0_81] : memref<8x8x16xf32, #tpu.memory_space<vmem>>, vector<1x8x16xf32>
    %126 = vector.shape_cast %125 : vector<1x8x16xf32> to vector<8x16xf32>
    %127 = vector.shape_cast %119 : vector<8x16xf32> to vector<1x8x16xf32>
    tpu.vector_store %arg28[%124, %c0_80, %c0_81], %127 {strides = array<i32>} : memref<8x8x16xf32, #tpu.memory_space<vmem>>, vector<1x8x16xf32>,
    %c1_i32 = arith.constant 1 : i32
    %c7_i32_82 = arith.constant 7 : i32
    %128 = arith.subi %c7_i32_82, %c1_i32 : i32
    %129 = arith.index_cast %c1_i32 : i32 to index
    %c0_83 = arith.constant 0 : index
    %c0_84 = arith.constant 0 : index
    %130 = vector.load %arg21[%129, %c0_83, %c0_84] : memref<8x8x16xf32, #tpu.memory_space<vmem>>, vector<1x8x16xf32>
    %131 = vector.shape_cast %130 : vector<1x8x16xf32> to vector<8x16xf32>
    %132 = arith.index_cast %c1_i32 : i32 to index
    %c0_85 = arith.constant 0 : index
    %c0_86 = arith.constant 0 : index
    %133 = vector.load %arg22[%132, %c0_85, %c0_86] : memref<8x8x16xf32, #tpu.memory_space<vmem>>, vector<1x8x16xf32>
    %134 = vector.shape_cast %133 : vector<1x8x16xf32> to vector<8x16xf32>
    %135 = arith.index_cast %c1_i32 : i32 to index
    %c0_87 = arith.constant 0 : index
    %c0_88 = arith.constant 0 : index
    %136 = vector.load %arg23[%135, %c0_87, %c0_88] : memref<8x8x16xf32, #tpu.memory_space<vmem>>, vector<1x8x16xf32>
    %137 = vector.shape_cast %136 : vector<1x8x16xf32> to vector<8x16xf32>
    %cst_89 = arith.constant dense<0.000000e+00> : vector<8x16xf32>
    %138 = tpu.matmul %81, %30, %cst_89 {dimension_numbers = #tpu.dot_dimension_numbers<[1], [0], [0], [1], [0, 0, 1, 1], [], []>} : vector<8x16xf32>, vector<16x16xf32>, vector<8x16xf32> -> vector<8x16xf32>
    %139 = arith.addf %131, %138 : vector<8x16xf32>
    %140 = vector.broadcast %33 : vector<1x16xf32> to vector<8x16xf32>
    %141 = arith.addf %139, %140 : vector<8x16xf32>
    %142 = arith.negf %141 : vector<8x16xf32>
    %143 = math.exp %142 : vector<8x16xf32>
    %cst_90 = arith.constant 1.000000e+00 : f32
    %144 = vector.broadcast %cst_90 : f32 to vector<8x16xf32>
    %145 = arith.addf %144, %143 : vector<8x16xf32>
    %146 = arith.divf %144, %145 : vector<8x16xf32>
    %cst_91 = arith.constant dense<0.000000e+00> : vector<8x16xf32>
    %147 = tpu.matmul %81, %31, %cst_91 {dimension_numbers = #tpu.dot_dimension_numbers<[1], [0], [0], [1], [0, 0, 1, 1], [], []>} : vector<8x16xf32>, vector<16x16xf32>, vector<8x16xf32> -> vector<8x16xf32>
    %148 = arith.addf %134, %147 : vector<8x16xf32>
    %149 = vector.broadcast %34 : vector<1x16xf32> to vector<8x16xf32>
    %150 = arith.addf %148, %149 : vector<8x16xf32>
    %151 = arith.negf %150 : vector<8x16xf32>
    %152 = math.exp %151 : vector<8x16xf32>
    %cst_92 = arith.constant 1.000000e+00 : f32
    %153 = vector.broadcast %cst_92 : f32 to vector<8x16xf32>
    %154 = arith.addf %153, %152 : vector<8x16xf32>
    %155 = arith.divf %153, %154 : vector<8x16xf32>
    %cst_93 = arith.constant dense<0.000000e+00> : vector<8x16xf32>
    %156 = tpu.matmul %81, %32, %cst_93 {dimension_numbers = #tpu.dot_dimension_numbers<[1], [0], [0], [1], [0, 0, 1, 1], [], []>} : vector<8x16xf32>, vector<16x16xf32>, vector<8x16xf32> -> vector<8x16xf32>
    %157 = vector.broadcast %35 : vector<1x16xf32> to vector<8x16xf32>
    %158 = arith.addf %156, %157 : vector<8x16xf32>
    %159 = arith.mulf %146, %158 : vector<8x16xf32>
    %160 = arith.addf %137, %159 : vector<8x16xf32>
    %161 = math.tanh %160 : vector<8x16xf32>
    %cst_94 = arith.constant 1.000000e+00 : f32
    %162 = vector.broadcast %cst_94 : f32 to vector<8x16xf32>
    %163 = arith.subf %162, %155 : vector<8x16xf32>
    %164 = arith.mulf %163, %161 : vector<8x16xf32>
    %165 = arith.mulf %155, %81 : vector<8x16xf32>
    %166 = arith.addf %164, %165 : vector<8x16xf32>
    %167 = arith.index_cast %128 : i32 to index
    %c0_95 = arith.constant 0 : index
    %c0_96 = arith.constant 0 : index
    %168 = vector.load %arg24[%167, %c0_95, %c0_96] : memref<8x8x16xf32, #tpu.memory_space<vmem>>, vector<1x8x16xf32>
    %169 = vector.shape_cast %168 : vector<1x8x16xf32> to vector<8x16xf32>
    %170 = arith.index_cast %128 : i32 to index
    %c0_97 = arith.constant 0 : index
    %c0_98 = arith.constant 0 : index
    %171 = vector.load %arg25[%170, %c0_97, %c0_98] : memref<8x8x16xf32, #tpu.memory_space<vmem>>, vector<1x8x16xf32>
    %172 = vector.shape_cast %171 : vector<1x8x16xf32> to vector<8x16xf32>
    %173 = arith.index_cast %128 : i32 to index
    %c0_99 = arith.constant 0 : index
    %c0_100 = arith.constant 0 : index
    %174 = vector.load %arg26[%173, %c0_99, %c0_100] : memref<8x8x16xf32, #tpu.memory_space<vmem>>, vector<1x8x16xf32>
    %175 = vector.shape_cast %174 : vector<1x8x16xf32> to vector<8x16xf32>
    %cst_101 = arith.constant dense<0.000000e+00> : vector<8x16xf32>
    %176 = tpu.matmul %119, %36, %cst_101 {dimension_numbers = #tpu.dot_dimension_numbers<[1], [0], [0], [1], [0, 0, 1, 1], [], []>} : vector<8x16xf32>, vector<16x16xf32>, vector<8x16xf32> -> vector<8x16xf32>
    %177 = arith.addf %169, %176 : vector<8x16xf32>
    %178 = vector.broadcast %39 : vector<1x16xf32> to vector<8x16xf32>
    %179 = arith.addf %177, %178 : vector<8x16xf32>
    %180 = arith.negf %179 : vector<8x16xf32>
    %181 = math.exp %180 : vector<8x16xf32>
    %cst_102 = arith.constant 1.000000e+00 : f32
    %182 = vector.broadcast %cst_102 : f32 to vector<8x16xf32>
    %183 = arith.addf %182, %181 : vector<8x16xf32>
    %184 = arith.divf %182, %183 : vector<8x16xf32>
    %cst_103 = arith.constant dense<0.000000e+00> : vector<8x16xf32>
    %185 = tpu.matmul %119, %37, %cst_103 {dimension_numbers = #tpu.dot_dimension_numbers<[1], [0], [0], [1], [0, 0, 1, 1], [], []>} : vector<8x16xf32>, vector<16x16xf32>, vector<8x16xf32> -> vector<8x16xf32>
    %186 = arith.addf %172, %185 : vector<8x16xf32>
    %187 = vector.broadcast %40 : vector<1x16xf32> to vector<8x16xf32>
    %188 = arith.addf %186, %187 : vector<8x16xf32>
    %189 = arith.negf %188 : vector<8x16xf32>
    %190 = math.exp %189 : vector<8x16xf32>
    %cst_104 = arith.constant 1.000000e+00 : f32
    %191 = vector.broadcast %cst_104 : f32 to vector<8x16xf32>
    %192 = arith.addf %191, %190 : vector<8x16xf32>
    %193 = arith.divf %191, %192 : vector<8x16xf32>
    %cst_105 = arith.constant dense<0.000000e+00> : vector<8x16xf32>
    %194 = tpu.matmul %119, %38, %cst_105 {dimension_numbers = #tpu.dot_dimension_numbers<[1], [0], [0], [1], [0, 0, 1, 1], [], []>} : vector<8x16xf32>, vector<16x16xf32>, vector<8x16xf32> -> vector<8x16xf32>
    %195 = vector.broadcast %41 : vector<1x16xf32> to vector<8x16xf32>
    %196 = arith.addf %194, %195 : vector<8x16xf32>
    %197 = arith.mulf %184, %196 : vector<8x16xf32>
    %198 = arith.addf %175, %197 : vector<8x16xf32>
    %199 = math.tanh %198 : vector<8x16xf32>
    %cst_106 = arith.constant 1.000000e+00 : f32
    %200 = vector.broadcast %cst_106 : f32 to vector<8x16xf32>
    %201 = arith.subf %200, %193 : vector<8x16xf32>
    %202 = arith.mulf %201, %199 : vector<8x16xf32>
    %203 = arith.mulf %193, %119 : vector<8x16xf32>
    %204 = arith.addf %202, %203 : vector<8x16xf32>
    %205 = arith.index_cast %c1_i32 : i32 to index
    %c0_107 = arith.constant 0 : index
    %c0_108 = arith.constant 0 : index
    %206 = vector.load %arg27[%205, %c0_107, %c0_108] : memref<8x8x16xf32, #tpu.memory_space<vmem>>, vector<1x8x16xf32>
    %207 = vector.shape_cast %206 : vector<1x8x16xf32> to vector<8x16xf32>
    %208 = vector.shape_cast %166 : vector<8x16xf32> to vector<1x8x16xf32>
    tpu.vector_store %arg27[%205, %c0_107, %c0_108], %208 {strides = array<i32>} : memref<8x8x16xf32, #tpu.memory_space<vmem>>, vector<1x8x16xf32>,
    %209 = arith.index_cast %128 : i32 to index
    %c0_109 = arith.constant 0 : index
    %c0_110 = arith.constant 0 : index
    %210 = vector.load %arg28[%209, %c0_109, %c0_110] : memref<8x8x16xf32, #tpu.memory_space<vmem>>, vector<1x8x16xf32>
    %211 = vector.shape_cast %210 : vector<1x8x16xf32> to vector<8x16xf32>
    %212 = vector.shape_cast %204 : vector<8x16xf32> to vector<1x8x16xf32>
    tpu.vector_store %arg28[%209, %c0_109, %c0_110], %212 {strides = array<i32>} : memref<8x8x16xf32, #tpu.memory_space<vmem>>, vector<1x8x16xf32>,
    %c2_i32 = arith.constant 2 : i32
    %c7_i32_111 = arith.constant 7 : i32
    %213 = arith.subi %c7_i32_111, %c2_i32 : i32
    %214 = arith.index_cast %c2_i32 : i32 to index
    %c0_112 = arith.constant 0 : index
    %c0_113 = arith.constant 0 : index
    %215 = vector.load %arg21[%214, %c0_112, %c0_113] : memref<8x8x16xf32, #tpu.memory_space<vmem>>, vector<1x8x16xf32>
    %216 = vector.shape_cast %215 : vector<1x8x16xf32> to vector<8x16xf32>
    %217 = arith.index_cast %c2_i32 : i32 to index
    %c0_114 = arith.constant 0 : index
    %c0_115 = arith.constant 0 : index
    %218 = vector.load %arg22[%217, %c0_114, %c0_115] : memref<8x8x16xf32, #tpu.memory_space<vmem>>, vector<1x8x16xf32>
    %219 = vector.shape_cast %218 : vector<1x8x16xf32> to vector<8x16xf32>
    %220 = arith.index_cast %c2_i32 : i32 to index
    %c0_116 = arith.constant 0 : index
    %c0_117 = arith.constant 0 : index
    %221 = vector.load %arg23[%220, %c0_116, %c0_117] : memref<8x8x16xf32, #tpu.memory_space<vmem>>, vector<1x8x16xf32>
    %222 = vector.shape_cast %221 : vector<1x8x16xf32> to vector<8x16xf32>
    %cst_118 = arith.constant dense<0.000000e+00> : vector<8x16xf32>
    %223 = tpu.matmul %166, %30, %cst_118 {dimension_numbers = #tpu.dot_dimension_numbers<[1], [0], [0], [1], [0, 0, 1, 1], [], []>} : vector<8x16xf32>, vector<16x16xf32>, vector<8x16xf32> -> vector<8x16xf32>
    %224 = arith.addf %216, %223 : vector<8x16xf32>
    %225 = vector.broadcast %33 : vector<1x16xf32> to vector<8x16xf32>
    %226 = arith.addf %224, %225 : vector<8x16xf32>
    %227 = arith.negf %226 : vector<8x16xf32>
    %228 = math.exp %227 : vector<8x16xf32>
    %cst_119 = arith.constant 1.000000e+00 : f32
    %229 = vector.broadcast %cst_119 : f32 to vector<8x16xf32>
    %230 = arith.addf %229, %228 : vector<8x16xf32>
    %231 = arith.divf %229, %230 : vector<8x16xf32>
    %cst_120 = arith.constant dense<0.000000e+00> : vector<8x16xf32>
    %232 = tpu.matmul %166, %31, %cst_120 {dimension_numbers = #tpu.dot_dimension_numbers<[1], [0], [0], [1], [0, 0, 1, 1], [], []>} : vector<8x16xf32>, vector<16x16xf32>, vector<8x16xf32> -> vector<8x16xf32>
    %233 = arith.addf %219, %232 : vector<8x16xf32>
    %234 = vector.broadcast %34 : vector<1x16xf32> to vector<8x16xf32>
    %235 = arith.addf %233, %234 : vector<8x16xf32>
    %236 = arith.negf %235 : vector<8x16xf32>
    %237 = math.exp %236 : vector<8x16xf32>
    %cst_121 = arith.constant 1.000000e+00 : f32
    %238 = vector.broadcast %cst_121 : f32 to vector<8x16xf32>
    %239 = arith.addf %238, %237 : vector<8x16xf32>
    %240 = arith.divf %238, %239 : vector<8x16xf32>
    %cst_122 = arith.constant dense<0.000000e+00> : vector<8x16xf32>
    %241 = tpu.matmul %166, %32, %cst_122 {dimension_numbers = #tpu.dot_dimension_numbers<[1], [0], [0], [1], [0, 0, 1, 1], [], []>} : vector<8x16xf32>, vector<16x16xf32>, vector<8x16xf32> -> vector<8x16xf32>
    %242 = vector.broadcast %35 : vector<1x16xf32> to vector<8x16xf32>
    %243 = arith.addf %241, %242 : vector<8x16xf32>
    %244 = arith.mulf %231, %243 : vector<8x16xf32>
    %245 = arith.addf %222, %244 : vector<8x16xf32>
    %246 = math.tanh %245 : vector<8x16xf32>
    %cst_123 = arith.constant 1.000000e+00 : f32
    %247 = vector.broadcast %cst_123 : f32 to vector<8x16xf32>
    %248 = arith.subf %247, %240 : vector<8x16xf32>
    %249 = arith.mulf %248, %246 : vector<8x16xf32>
    %250 = arith.mulf %240, %166 : vector<8x16xf32>
    %251 = arith.addf %249, %250 : vector<8x16xf32>
    %252 = arith.index_cast %213 : i32 to index
    %c0_124 = arith.constant 0 : index
    %c0_125 = arith.constant 0 : index
    %253 = vector.load %arg24[%252, %c0_124, %c0_125] : memref<8x8x16xf32, #tpu.memory_space<vmem>>, vector<1x8x16xf32>
    %254 = vector.shape_cast %253 : vector<1x8x16xf32> to vector<8x16xf32>
    %255 = arith.index_cast %213 : i32 to index
    %c0_126 = arith.constant 0 : index
    %c0_127 = arith.constant 0 : index
    %256 = vector.load %arg25[%255, %c0_126, %c0_127] : memref<8x8x16xf32, #tpu.memory_space<vmem>>, vector<1x8x16xf32>
    %257 = vector.shape_cast %256 : vector<1x8x16xf32> to vector<8x16xf32>
    %258 = arith.index_cast %213 : i32 to index
    %c0_128 = arith.constant 0 : index
    %c0_129 = arith.constant 0 : index
    %259 = vector.load %arg26[%258, %c0_128, %c0_129] : memref<8x8x16xf32, #tpu.memory_space<vmem>>, vector<1x8x16xf32>
    %260 = vector.shape_cast %259 : vector<1x8x16xf32> to vector<8x16xf32>
    %cst_130 = arith.constant dense<0.000000e+00> : vector<8x16xf32>
    %261 = tpu.matmul %204, %36, %cst_130 {dimension_numbers = #tpu.dot_dimension_numbers<[1], [0], [0], [1], [0, 0, 1, 1], [], []>} : vector<8x16xf32>, vector<16x16xf32>, vector<8x16xf32> -> vector<8x16xf32>
    %262 = arith.addf %254, %261 : vector<8x16xf32>
    %263 = vector.broadcast %39 : vector<1x16xf32> to vector<8x16xf32>
    %264 = arith.addf %262, %263 : vector<8x16xf32>
    %265 = arith.negf %264 : vector<8x16xf32>
    %266 = math.exp %265 : vector<8x16xf32>
    %cst_131 = arith.constant 1.000000e+00 : f32
    %267 = vector.broadcast %cst_131 : f32 to vector<8x16xf32>
    %268 = arith.addf %267, %266 : vector<8x16xf32>
    %269 = arith.divf %267, %268 : vector<8x16xf32>
    %cst_132 = arith.constant dense<0.000000e+00> : vector<8x16xf32>
    %270 = tpu.matmul %204, %37, %cst_132 {dimension_numbers = #tpu.dot_dimension_numbers<[1], [0], [0], [1], [0, 0, 1, 1], [], []>} : vector<8x16xf32>, vector<16x16xf32>, vector<8x16xf32> -> vector<8x16xf32>
    %271 = arith.addf %257, %270 : vector<8x16xf32>
    %272 = vector.broadcast %40 : vector<1x16xf32> to vector<8x16xf32>
    %273 = arith.addf %271, %272 : vector<8x16xf32>
    %274 = arith.negf %273 : vector<8x16xf32>
    %275 = math.exp %274 : vector<8x16xf32>
    %cst_133 = arith.constant 1.000000e+00 : f32
    %276 = vector.broadcast %cst_133 : f32 to vector<8x16xf32>
    %277 = arith.addf %276, %275 : vector<8x16xf32>
    %278 = arith.divf %276, %277 : vector<8x16xf32>
    %cst_134 = arith.constant dense<0.000000e+00> : vector<8x16xf32>
    %279 = tpu.matmul %204, %38, %cst_134 {dimension_numbers = #tpu.dot_dimension_numbers<[1], [0], [0], [1], [0, 0, 1, 1], [], []>} : vector<8x16xf32>, vector<16x16xf32>, vector<8x16xf32> -> vector<8x16xf32>
    %280 = vector.broadcast %41 : vector<1x16xf32> to vector<8x16xf32>
    %281 = arith.addf %279, %280 : vector<8x16xf32>
    %282 = arith.mulf %269, %281 : vector<8x16xf32>
    %283 = arith.addf %260, %282 : vector<8x16xf32>
    %284 = math.tanh %283 : vector<8x16xf32>
    %cst_135 = arith.constant 1.000000e+00 : f32
    %285 = vector.broadcast %cst_135 : f32 to vector<8x16xf32>
    %286 = arith.subf %285, %278 : vector<8x16xf32>
    %287 = arith.mulf %286, %284 : vector<8x16xf32>
    %288 = arith.mulf %278, %204 : vector<8x16xf32>
    %289 = arith.addf %287, %288 : vector<8x16xf32>
    %290 = arith.index_cast %c2_i32 : i32 to index
    %c0_136 = arith.constant 0 : index
    %c0_137 = arith.constant 0 : index
    %291 = vector.load %arg27[%290, %c0_136, %c0_137] : memref<8x8x16xf32, #tpu.memory_space<vmem>>, vector<1x8x16xf32>
    %292 = vector.shape_cast %291 : vector<1x8x16xf32> to vector<8x16xf32>
    %293 = vector.shape_cast %251 : vector<8x16xf32> to vector<1x8x16xf32>
    tpu.vector_store %arg27[%290, %c0_136, %c0_137], %293 {strides = array<i32>} : memref<8x8x16xf32, #tpu.memory_space<vmem>>, vector<1x8x16xf32>,
    %294 = arith.index_cast %213 : i32 to index
    %c0_138 = arith.constant 0 : index
    %c0_139 = arith.constant 0 : index
    %295 = vector.load %arg28[%294, %c0_138, %c0_139] : memref<8x8x16xf32, #tpu.memory_space<vmem>>, vector<1x8x16xf32>
    %296 = vector.shape_cast %295 : vector<1x8x16xf32> to vector<8x16xf32>
    %297 = vector.shape_cast %289 : vector<8x16xf32> to vector<1x8x16xf32>
    tpu.vector_store %arg28[%294, %c0_138, %c0_139], %297 {strides = array<i32>} : memref<8x8x16xf32, #tpu.memory_space<vmem>>, vector<1x8x16xf32>,
    %c3_i32 = arith.constant 3 : i32
    %c7_i32_140 = arith.constant 7 : i32
    %298 = arith.subi %c7_i32_140, %c3_i32 : i32
    %299 = arith.index_cast %c3_i32 : i32 to index
    %c0_141 = arith.constant 0 : index
    %c0_142 = arith.constant 0 : index
    %300 = vector.load %arg21[%299, %c0_141, %c0_142] : memref<8x8x16xf32, #tpu.memory_space<vmem>>, vector<1x8x16xf32>
    %301 = vector.shape_cast %300 : vector<1x8x16xf32> to vector<8x16xf32>
    %302 = arith.index_cast %c3_i32 : i32 to index
    %c0_143 = arith.constant 0 : index
    %c0_144 = arith.constant 0 : index
    %303 = vector.load %arg22[%302, %c0_143, %c0_144] : memref<8x8x16xf32, #tpu.memory_space<vmem>>, vector<1x8x16xf32>
    %304 = vector.shape_cast %303 : vector<1x8x16xf32> to vector<8x16xf32>
    %305 = arith.index_cast %c3_i32 : i32 to index
    %c0_145 = arith.constant 0 : index
    %c0_146 = arith.constant 0 : index
    %306 = vector.load %arg23[%305, %c0_145, %c0_146] : memref<8x8x16xf32, #tpu.memory_space<vmem>>, vector<1x8x16xf32>
    %307 = vector.shape_cast %306 : vector<1x8x16xf32> to vector<8x16xf32>
    %cst_147 = arith.constant dense<0.000000e+00> : vector<8x16xf32>
    %308 = tpu.matmul %251, %30, %cst_147 {dimension_numbers = #tpu.dot_dimension_numbers<[1], [0], [0], [1], [0, 0, 1, 1], [], []>} : vector<8x16xf32>, vector<16x16xf32>, vector<8x16xf32> -> vector<8x16xf32>
    %309 = arith.addf %301, %308 : vector<8x16xf32>
    %310 = vector.broadcast %33 : vector<1x16xf32> to vector<8x16xf32>
    %311 = arith.addf %309, %310 : vector<8x16xf32>
    %312 = arith.negf %311 : vector<8x16xf32>
    %313 = math.exp %312 : vector<8x16xf32>
    %cst_148 = arith.constant 1.000000e+00 : f32
    %314 = vector.broadcast %cst_148 : f32 to vector<8x16xf32>
    %315 = arith.addf %314, %313 : vector<8x16xf32>
    %316 = arith.divf %314, %315 : vector<8x16xf32>
    %cst_149 = arith.constant dense<0.000000e+00> : vector<8x16xf32>
    %317 = tpu.matmul %251, %31, %cst_149 {dimension_numbers = #tpu.dot_dimension_numbers<[1], [0], [0], [1], [0, 0, 1, 1], [], []>} : vector<8x16xf32>, vector<16x16xf32>, vector<8x16xf32> -> vector<8x16xf32>
    %318 = arith.addf %304, %317 : vector<8x16xf32>
    %319 = vector.broadcast %34 : vector<1x16xf32> to vector<8x16xf32>
    %320 = arith.addf %318, %319 : vector<8x16xf32>
    %321 = arith.negf %320 : vector<8x16xf32>
    %322 = math.exp %321 : vector<8x16xf32>
    %cst_150 = arith.constant 1.000000e+00 : f32
    %323 = vector.broadcast %cst_150 : f32 to vector<8x16xf32>
    %324 = arith.addf %323, %322 : vector<8x16xf32>
    %325 = arith.divf %323, %324 : vector<8x16xf32>
    %cst_151 = arith.constant dense<0.000000e+00> : vector<8x16xf32>
    %326 = tpu.matmul %251, %32, %cst_151 {dimension_numbers = #tpu.dot_dimension_numbers<[1], [0], [0], [1], [0, 0, 1, 1], [], []>} : vector<8x16xf32>, vector<16x16xf32>, vector<8x16xf32> -> vector<8x16xf32>
    %327 = vector.broadcast %35 : vector<1x16xf32> to vector<8x16xf32>
    %328 = arith.addf %326, %327 : vector<8x16xf32>
    %329 = arith.mulf %316, %328 : vector<8x16xf32>
    %330 = arith.addf %307, %329 : vector<8x16xf32>
    %331 = math.tanh %330 : vector<8x16xf32>
    %cst_152 = arith.constant 1.000000e+00 : f32
    %332 = vector.broadcast %cst_152 : f32 to vector<8x16xf32>
    %333 = arith.subf %332, %325 : vector<8x16xf32>
    %334 = arith.mulf %333, %331 : vector<8x16xf32>
    %335 = arith.mulf %325, %251 : vector<8x16xf32>
    %336 = arith.addf %334, %335 : vector<8x16xf32>
    %337 = arith.index_cast %298 : i32 to index
    %c0_153 = arith.constant 0 : index
    %c0_154 = arith.constant 0 : index
    %338 = vector.load %arg24[%337, %c0_153, %c0_154] : memref<8x8x16xf32, #tpu.memory_space<vmem>>, vector<1x8x16xf32>
    %339 = vector.shape_cast %338 : vector<1x8x16xf32> to vector<8x16xf32>
    %340 = arith.index_cast %298 : i32 to index
    %c0_155 = arith.constant 0 : index
    %c0_156 = arith.constant 0 : index
    %341 = vector.load %arg25[%340, %c0_155, %c0_156] : memref<8x8x16xf32, #tpu.memory_space<vmem>>, vector<1x8x16xf32>
    %342 = vector.shape_cast %341 : vector<1x8x16xf32> to vector<8x16xf32>
    %343 = arith.index_cast %298 : i32 to index
    %c0_157 = arith.constant 0 : index
    %c0_158 = arith.constant 0 : index
    %344 = vector.load %arg26[%343, %c0_157, %c0_158] : memref<8x8x16xf32, #tpu.memory_space<vmem>>, vector<1x8x16xf32>
    %345 = vector.shape_cast %344 : vector<1x8x16xf32> to vector<8x16xf32>
    %cst_159 = arith.constant dense<0.000000e+00> : vector<8x16xf32>
    %346 = tpu.matmul %289, %36, %cst_159 {dimension_numbers = #tpu.dot_dimension_numbers<[1], [0], [0], [1], [0, 0, 1, 1], [], []>} : vector<8x16xf32>, vector<16x16xf32>, vector<8x16xf32> -> vector<8x16xf32>
    %347 = arith.addf %339, %346 : vector<8x16xf32>
    %348 = vector.broadcast %39 : vector<1x16xf32> to vector<8x16xf32>
    %349 = arith.addf %347, %348 : vector<8x16xf32>
    %350 = arith.negf %349 : vector<8x16xf32>
    %351 = math.exp %350 : vector<8x16xf32>
    %cst_160 = arith.constant 1.000000e+00 : f32
    %352 = vector.broadcast %cst_160 : f32 to vector<8x16xf32>
    %353 = arith.addf %352, %351 : vector<8x16xf32>
    %354 = arith.divf %352, %353 : vector<8x16xf32>
    %cst_161 = arith.constant dense<0.000000e+00> : vector<8x16xf32>
    %355 = tpu.matmul %289, %37, %cst_161 {dimension_numbers = #tpu.dot_dimension_numbers<[1], [0], [0], [1], [0, 0, 1, 1], [], []>} : vector<8x16xf32>, vector<16x16xf32>, vector<8x16xf32> -> vector<8x16xf32>
    %356 = arith.addf %342, %355 : vector<8x16xf32>
    %357 = vector.broadcast %40 : vector<1x16xf32> to vector<8x16xf32>
    %358 = arith.addf %356, %357 : vector<8x16xf32>
    %359 = arith.negf %358 : vector<8x16xf32>
    %360 = math.exp %359 : vector<8x16xf32>
    %cst_162 = arith.constant 1.000000e+00 : f32
    %361 = vector.broadcast %cst_162 : f32 to vector<8x16xf32>
    %362 = arith.addf %361, %360 : vector<8x16xf32>
    %363 = arith.divf %361, %362 : vector<8x16xf32>
    %cst_163 = arith.constant dense<0.000000e+00> : vector<8x16xf32>
    %364 = tpu.matmul %289, %38, %cst_163 {dimension_numbers = #tpu.dot_dimension_numbers<[1], [0], [0], [1], [0, 0, 1, 1], [], []>} : vector<8x16xf32>, vector<16x16xf32>, vector<8x16xf32> -> vector<8x16xf32>
    %365 = vector.broadcast %41 : vector<1x16xf32> to vector<8x16xf32>
    %366 = arith.addf %364, %365 : vector<8x16xf32>
    %367 = arith.mulf %354, %366 : vector<8x16xf32>
    %368 = arith.addf %345, %367 : vector<8x16xf32>
    %369 = math.tanh %368 : vector<8x16xf32>
    %cst_164 = arith.constant 1.000000e+00 : f32
    %370 = vector.broadcast %cst_164 : f32 to vector<8x16xf32>
    %371 = arith.subf %370, %363 : vector<8x16xf32>
    %372 = arith.mulf %371, %369 : vector<8x16xf32>
    %373 = arith.mulf %363, %289 : vector<8x16xf32>
    %374 = arith.addf %372, %373 : vector<8x16xf32>
    %375 = arith.index_cast %c3_i32 : i32 to index
    %c0_165 = arith.constant 0 : index
    %c0_166 = arith.constant 0 : index
    %376 = vector.load %arg27[%375, %c0_165, %c0_166] : memref<8x8x16xf32, #tpu.memory_space<vmem>>, vector<1x8x16xf32>
    %377 = vector.shape_cast %376 : vector<1x8x16xf32> to vector<8x16xf32>
    %378 = vector.shape_cast %336 : vector<8x16xf32> to vector<1x8x16xf32>
    tpu.vector_store %arg27[%375, %c0_165, %c0_166], %378 {strides = array<i32>} : memref<8x8x16xf32, #tpu.memory_space<vmem>>, vector<1x8x16xf32>,
    %379 = arith.index_cast %298 : i32 to index
    %c0_167 = arith.constant 0 : index
    %c0_168 = arith.constant 0 : index
    %380 = vector.load %arg28[%379, %c0_167, %c0_168] : memref<8x8x16xf32, #tpu.memory_space<vmem>>, vector<1x8x16xf32>
    %381 = vector.shape_cast %380 : vector<1x8x16xf32> to vector<8x16xf32>
    %382 = vector.shape_cast %374 : vector<8x16xf32> to vector<1x8x16xf32>
    tpu.vector_store %arg28[%379, %c0_167, %c0_168], %382 {strides = array<i32>} : memref<8x8x16xf32, #tpu.memory_space<vmem>>, vector<1x8x16xf32>,
    %c4_i32 = arith.constant 4 : i32
    %c7_i32_169 = arith.constant 7 : i32
    %383 = arith.subi %c7_i32_169, %c4_i32 : i32
    %384 = arith.index_cast %c4_i32 : i32 to index
    %c0_170 = arith.constant 0 : index
    %c0_171 = arith.constant 0 : index
    %385 = vector.load %arg21[%384, %c0_170, %c0_171] : memref<8x8x16xf32, #tpu.memory_space<vmem>>, vector<1x8x16xf32>
    %386 = vector.shape_cast %385 : vector<1x8x16xf32> to vector<8x16xf32>
    %387 = arith.index_cast %c4_i32 : i32 to index
    %c0_172 = arith.constant 0 : index
    %c0_173 = arith.constant 0 : index
    %388 = vector.load %arg22[%387, %c0_172, %c0_173] : memref<8x8x16xf32, #tpu.memory_space<vmem>>, vector<1x8x16xf32>
    %389 = vector.shape_cast %388 : vector<1x8x16xf32> to vector<8x16xf32>
    %390 = arith.index_cast %c4_i32 : i32 to index
    %c0_174 = arith.constant 0 : index
    %c0_175 = arith.constant 0 : index
    %391 = vector.load %arg23[%390, %c0_174, %c0_175] : memref<8x8x16xf32, #tpu.memory_space<vmem>>, vector<1x8x16xf32>
    %392 = vector.shape_cast %391 : vector<1x8x16xf32> to vector<8x16xf32>
    %cst_176 = arith.constant dense<0.000000e+00> : vector<8x16xf32>
    %393 = tpu.matmul %336, %30, %cst_176 {dimension_numbers = #tpu.dot_dimension_numbers<[1], [0], [0], [1], [0, 0, 1, 1], [], []>} : vector<8x16xf32>, vector<16x16xf32>, vector<8x16xf32> -> vector<8x16xf32>
    %394 = arith.addf %386, %393 : vector<8x16xf32>
    %395 = vector.broadcast %33 : vector<1x16xf32> to vector<8x16xf32>
    %396 = arith.addf %394, %395 : vector<8x16xf32>
    %397 = arith.negf %396 : vector<8x16xf32>
    %398 = math.exp %397 : vector<8x16xf32>
    %cst_177 = arith.constant 1.000000e+00 : f32
    %399 = vector.broadcast %cst_177 : f32 to vector<8x16xf32>
    %400 = arith.addf %399, %398 : vector<8x16xf32>
    %401 = arith.divf %399, %400 : vector<8x16xf32>
    %cst_178 = arith.constant dense<0.000000e+00> : vector<8x16xf32>
    %402 = tpu.matmul %336, %31, %cst_178 {dimension_numbers = #tpu.dot_dimension_numbers<[1], [0], [0], [1], [0, 0, 1, 1], [], []>} : vector<8x16xf32>, vector<16x16xf32>, vector<8x16xf32> -> vector<8x16xf32>
    %403 = arith.addf %389, %402 : vector<8x16xf32>
    %404 = vector.broadcast %34 : vector<1x16xf32> to vector<8x16xf32>
    %405 = arith.addf %403, %404 : vector<8x16xf32>
    %406 = arith.negf %405 : vector<8x16xf32>
    %407 = math.exp %406 : vector<8x16xf32>
    %cst_179 = arith.constant 1.000000e+00 : f32
    %408 = vector.broadcast %cst_179 : f32 to vector<8x16xf32>
    %409 = arith.addf %408, %407 : vector<8x16xf32>
    %410 = arith.divf %408, %409 : vector<8x16xf32>
    %cst_180 = arith.constant dense<0.000000e+00> : vector<8x16xf32>
    %411 = tpu.matmul %336, %32, %cst_180 {dimension_numbers = #tpu.dot_dimension_numbers<[1], [0], [0], [1], [0, 0, 1, 1], [], []>} : vector<8x16xf32>, vector<16x16xf32>, vector<8x16xf32> -> vector<8x16xf32>
    %412 = vector.broadcast %35 : vector<1x16xf32> to vector<8x16xf32>
    %413 = arith.addf %411, %412 : vector<8x16xf32>
    %414 = arith.mulf %401, %413 : vector<8x16xf32>
    %415 = arith.addf %392, %414 : vector<8x16xf32>
    %416 = math.tanh %415 : vector<8x16xf32>
    %cst_181 = arith.constant 1.000000e+00 : f32
    %417 = vector.broadcast %cst_181 : f32 to vector<8x16xf32>
    %418 = arith.subf %417, %410 : vector<8x16xf32>
    %419 = arith.mulf %418, %416 : vector<8x16xf32>
    %420 = arith.mulf %410, %336 : vector<8x16xf32>
    %421 = arith.addf %419, %420 : vector<8x16xf32>
    %422 = arith.index_cast %383 : i32 to index
    %c0_182 = arith.constant 0 : index
    %c0_183 = arith.constant 0 : index
    %423 = vector.load %arg24[%422, %c0_182, %c0_183] : memref<8x8x16xf32, #tpu.memory_space<vmem>>, vector<1x8x16xf32>
    %424 = vector.shape_cast %423 : vector<1x8x16xf32> to vector<8x16xf32>
    %425 = arith.index_cast %383 : i32 to index
    %c0_184 = arith.constant 0 : index
    %c0_185 = arith.constant 0 : index
    %426 = vector.load %arg25[%425, %c0_184, %c0_185] : memref<8x8x16xf32, #tpu.memory_space<vmem>>, vector<1x8x16xf32>
    %427 = vector.shape_cast %426 : vector<1x8x16xf32> to vector<8x16xf32>
    %428 = arith.index_cast %383 : i32 to index
    %c0_186 = arith.constant 0 : index
    %c0_187 = arith.constant 0 : index
    %429 = vector.load %arg26[%428, %c0_186, %c0_187] : memref<8x8x16xf32, #tpu.memory_space<vmem>>, vector<1x8x16xf32>
    %430 = vector.shape_cast %429 : vector<1x8x16xf32> to vector<8x16xf32>
    %cst_188 = arith.constant dense<0.000000e+00> : vector<8x16xf32>
    %431 = tpu.matmul %374, %36, %cst_188 {dimension_numbers = #tpu.dot_dimension_numbers<[1], [0], [0], [1], [0, 0, 1, 1], [], []>} : vector<8x16xf32>, vector<16x16xf32>, vector<8x16xf32> -> vector<8x16xf32>
    %432 = arith.addf %424, %431 : vector<8x16xf32>
    %433 = vector.broadcast %39 : vector<1x16xf32> to vector<8x16xf32>
    %434 = arith.addf %432, %433 : vector<8x16xf32>
    %435 = arith.negf %434 : vector<8x16xf32>
    %436 = math.exp %435 : vector<8x16xf32>
    %cst_189 = arith.constant 1.000000e+00 : f32
    %437 = vector.broadcast %cst_189 : f32 to vector<8x16xf32>
    %438 = arith.addf %437, %436 : vector<8x16xf32>
    %439 = arith.divf %437, %438 : vector<8x16xf32>
    %cst_190 = arith.constant dense<0.000000e+00> : vector<8x16xf32>
    %440 = tpu.matmul %374, %37, %cst_190 {dimension_numbers = #tpu.dot_dimension_numbers<[1], [0], [0], [1], [0, 0, 1, 1], [], []>} : vector<8x16xf32>, vector<16x16xf32>, vector<8x16xf32> -> vector<8x16xf32>
    %441 = arith.addf %427, %440 : vector<8x16xf32>
    %442 = vector.broadcast %40 : vector<1x16xf32> to vector<8x16xf32>
    %443 = arith.addf %441, %442 : vector<8x16xf32>
    %444 = arith.negf %443 : vector<8x16xf32>
    %445 = math.exp %444 : vector<8x16xf32>
    %cst_191 = arith.constant 1.000000e+00 : f32
    %446 = vector.broadcast %cst_191 : f32 to vector<8x16xf32>
    %447 = arith.addf %446, %445 : vector<8x16xf32>
    %448 = arith.divf %446, %447 : vector<8x16xf32>
    %cst_192 = arith.constant dense<0.000000e+00> : vector<8x16xf32>
    %449 = tpu.matmul %374, %38, %cst_192 {dimension_numbers = #tpu.dot_dimension_numbers<[1], [0], [0], [1], [0, 0, 1, 1], [], []>} : vector<8x16xf32>, vector<16x16xf32>, vector<8x16xf32> -> vector<8x16xf32>
    %450 = vector.broadcast %41 : vector<1x16xf32> to vector<8x16xf32>
    %451 = arith.addf %449, %450 : vector<8x16xf32>
    %452 = arith.mulf %439, %451 : vector<8x16xf32>
    %453 = arith.addf %430, %452 : vector<8x16xf32>
    %454 = math.tanh %453 : vector<8x16xf32>
    %cst_193 = arith.constant 1.000000e+00 : f32
    %455 = vector.broadcast %cst_193 : f32 to vector<8x16xf32>
    %456 = arith.subf %455, %448 : vector<8x16xf32>
    %457 = arith.mulf %456, %454 : vector<8x16xf32>
    %458 = arith.mulf %448, %374 : vector<8x16xf32>
    %459 = arith.addf %457, %458 : vector<8x16xf32>
    %460 = arith.index_cast %c4_i32 : i32 to index
    %c0_194 = arith.constant 0 : index
    %c0_195 = arith.constant 0 : index
    %461 = vector.load %arg27[%460, %c0_194, %c0_195] : memref<8x8x16xf32, #tpu.memory_space<vmem>>, vector<1x8x16xf32>
    %462 = vector.shape_cast %461 : vector<1x8x16xf32> to vector<8x16xf32>
    %463 = vector.shape_cast %421 : vector<8x16xf32> to vector<1x8x16xf32>
    tpu.vector_store %arg27[%460, %c0_194, %c0_195], %463 {strides = array<i32>} : memref<8x8x16xf32, #tpu.memory_space<vmem>>, vector<1x8x16xf32>,
    %464 = arith.index_cast %383 : i32 to index
    %c0_196 = arith.constant 0 : index
    %c0_197 = arith.constant 0 : index
    %465 = vector.load %arg28[%464, %c0_196, %c0_197] : memref<8x8x16xf32, #tpu.memory_space<vmem>>, vector<1x8x16xf32>
    %466 = vector.shape_cast %465 : vector<1x8x16xf32> to vector<8x16xf32>
    %467 = vector.shape_cast %459 : vector<8x16xf32> to vector<1x8x16xf32>
    tpu.vector_store %arg28[%464, %c0_196, %c0_197], %467 {strides = array<i32>} : memref<8x8x16xf32, #tpu.memory_space<vmem>>, vector<1x8x16xf32>,
    %c5_i32 = arith.constant 5 : i32
    %c7_i32_198 = arith.constant 7 : i32
    %468 = arith.subi %c7_i32_198, %c5_i32 : i32
    %469 = arith.index_cast %c5_i32 : i32 to index
    %c0_199 = arith.constant 0 : index
    %c0_200 = arith.constant 0 : index
    %470 = vector.load %arg21[%469, %c0_199, %c0_200] : memref<8x8x16xf32, #tpu.memory_space<vmem>>, vector<1x8x16xf32>
    %471 = vector.shape_cast %470 : vector<1x8x16xf32> to vector<8x16xf32>
    %472 = arith.index_cast %c5_i32 : i32 to index
    %c0_201 = arith.constant 0 : index
    %c0_202 = arith.constant 0 : index
    %473 = vector.load %arg22[%472, %c0_201, %c0_202] : memref<8x8x16xf32, #tpu.memory_space<vmem>>, vector<1x8x16xf32>
    %474 = vector.shape_cast %473 : vector<1x8x16xf32> to vector<8x16xf32>
    %475 = arith.index_cast %c5_i32 : i32 to index
    %c0_203 = arith.constant 0 : index
    %c0_204 = arith.constant 0 : index
    %476 = vector.load %arg23[%475, %c0_203, %c0_204] : memref<8x8x16xf32, #tpu.memory_space<vmem>>, vector<1x8x16xf32>
    %477 = vector.shape_cast %476 : vector<1x8x16xf32> to vector<8x16xf32>
    %cst_205 = arith.constant dense<0.000000e+00> : vector<8x16xf32>
    %478 = tpu.matmul %421, %30, %cst_205 {dimension_numbers = #tpu.dot_dimension_numbers<[1], [0], [0], [1], [0, 0, 1, 1], [], []>} : vector<8x16xf32>, vector<16x16xf32>, vector<8x16xf32> -> vector<8x16xf32>
    %479 = arith.addf %471, %478 : vector<8x16xf32>
    %480 = vector.broadcast %33 : vector<1x16xf32> to vector<8x16xf32>
    %481 = arith.addf %479, %480 : vector<8x16xf32>
    %482 = arith.negf %481 : vector<8x16xf32>
    %483 = math.exp %482 : vector<8x16xf32>
    %cst_206 = arith.constant 1.000000e+00 : f32
    %484 = vector.broadcast %cst_206 : f32 to vector<8x16xf32>
    %485 = arith.addf %484, %483 : vector<8x16xf32>
    %486 = arith.divf %484, %485 : vector<8x16xf32>
    %cst_207 = arith.constant dense<0.000000e+00> : vector<8x16xf32>
    %487 = tpu.matmul %421, %31, %cst_207 {dimension_numbers = #tpu.dot_dimension_numbers<[1], [0], [0], [1], [0, 0, 1, 1], [], []>} : vector<8x16xf32>, vector<16x16xf32>, vector<8x16xf32> -> vector<8x16xf32>
    %488 = arith.addf %474, %487 : vector<8x16xf32>
    %489 = vector.broadcast %34 : vector<1x16xf32> to vector<8x16xf32>
    %490 = arith.addf %488, %489 : vector<8x16xf32>
    %491 = arith.negf %490 : vector<8x16xf32>
    %492 = math.exp %491 : vector<8x16xf32>
    %cst_208 = arith.constant 1.000000e+00 : f32
    %493 = vector.broadcast %cst_208 : f32 to vector<8x16xf32>
    %494 = arith.addf %493, %492 : vector<8x16xf32>
    %495 = arith.divf %493, %494 : vector<8x16xf32>
    %cst_209 = arith.constant dense<0.000000e+00> : vector<8x16xf32>
    %496 = tpu.matmul %421, %32, %cst_209 {dimension_numbers = #tpu.dot_dimension_numbers<[1], [0], [0], [1], [0, 0, 1, 1], [], []>} : vector<8x16xf32>, vector<16x16xf32>, vector<8x16xf32> -> vector<8x16xf32>
    %497 = vector.broadcast %35 : vector<1x16xf32> to vector<8x16xf32>
    %498 = arith.addf %496, %497 : vector<8x16xf32>
    %499 = arith.mulf %486, %498 : vector<8x16xf32>
    %500 = arith.addf %477, %499 : vector<8x16xf32>
    %501 = math.tanh %500 : vector<8x16xf32>
    %cst_210 = arith.constant 1.000000e+00 : f32
    %502 = vector.broadcast %cst_210 : f32 to vector<8x16xf32>
    %503 = arith.subf %502, %495 : vector<8x16xf32>
    %504 = arith.mulf %503, %501 : vector<8x16xf32>
    %505 = arith.mulf %495, %421 : vector<8x16xf32>
    %506 = arith.addf %504, %505 : vector<8x16xf32>
    %507 = arith.index_cast %468 : i32 to index
    %c0_211 = arith.constant 0 : index
    %c0_212 = arith.constant 0 : index
    %508 = vector.load %arg24[%507, %c0_211, %c0_212] : memref<8x8x16xf32, #tpu.memory_space<vmem>>, vector<1x8x16xf32>
    %509 = vector.shape_cast %508 : vector<1x8x16xf32> to vector<8x16xf32>
    %510 = arith.index_cast %468 : i32 to index
    %c0_213 = arith.constant 0 : index
    %c0_214 = arith.constant 0 : index
    %511 = vector.load %arg25[%510, %c0_213, %c0_214] : memref<8x8x16xf32, #tpu.memory_space<vmem>>, vector<1x8x16xf32>
    %512 = vector.shape_cast %511 : vector<1x8x16xf32> to vector<8x16xf32>
    %513 = arith.index_cast %468 : i32 to index
    %c0_215 = arith.constant 0 : index
    %c0_216 = arith.constant 0 : index
    %514 = vector.load %arg26[%513, %c0_215, %c0_216] : memref<8x8x16xf32, #tpu.memory_space<vmem>>, vector<1x8x16xf32>
    %515 = vector.shape_cast %514 : vector<1x8x16xf32> to vector<8x16xf32>
    %cst_217 = arith.constant dense<0.000000e+00> : vector<8x16xf32>
    %516 = tpu.matmul %459, %36, %cst_217 {dimension_numbers = #tpu.dot_dimension_numbers<[1], [0], [0], [1], [0, 0, 1, 1], [], []>} : vector<8x16xf32>, vector<16x16xf32>, vector<8x16xf32> -> vector<8x16xf32>
    %517 = arith.addf %509, %516 : vector<8x16xf32>
    %518 = vector.broadcast %39 : vector<1x16xf32> to vector<8x16xf32>
    %519 = arith.addf %517, %518 : vector<8x16xf32>
    %520 = arith.negf %519 : vector<8x16xf32>
    %521 = math.exp %520 : vector<8x16xf32>
    %cst_218 = arith.constant 1.000000e+00 : f32
    %522 = vector.broadcast %cst_218 : f32 to vector<8x16xf32>
    %523 = arith.addf %522, %521 : vector<8x16xf32>
    %524 = arith.divf %522, %523 : vector<8x16xf32>
    %cst_219 = arith.constant dense<0.000000e+00> : vector<8x16xf32>
    %525 = tpu.matmul %459, %37, %cst_219 {dimension_numbers = #tpu.dot_dimension_numbers<[1], [0], [0], [1], [0, 0, 1, 1], [], []>} : vector<8x16xf32>, vector<16x16xf32>, vector<8x16xf32> -> vector<8x16xf32>
    %526 = arith.addf %512, %525 : vector<8x16xf32>
    %527 = vector.broadcast %40 : vector<1x16xf32> to vector<8x16xf32>
    %528 = arith.addf %526, %527 : vector<8x16xf32>
    %529 = arith.negf %528 : vector<8x16xf32>
    %530 = math.exp %529 : vector<8x16xf32>
    %cst_220 = arith.constant 1.000000e+00 : f32
    %531 = vector.broadcast %cst_220 : f32 to vector<8x16xf32>
    %532 = arith.addf %531, %530 : vector<8x16xf32>
    %533 = arith.divf %531, %532 : vector<8x16xf32>
    %cst_221 = arith.constant dense<0.000000e+00> : vector<8x16xf32>
    %534 = tpu.matmul %459, %38, %cst_221 {dimension_numbers = #tpu.dot_dimension_numbers<[1], [0], [0], [1], [0, 0, 1, 1], [], []>} : vector<8x16xf32>, vector<16x16xf32>, vector<8x16xf32> -> vector<8x16xf32>
    %535 = vector.broadcast %41 : vector<1x16xf32> to vector<8x16xf32>
    %536 = arith.addf %534, %535 : vector<8x16xf32>
    %537 = arith.mulf %524, %536 : vector<8x16xf32>
    %538 = arith.addf %515, %537 : vector<8x16xf32>
    %539 = math.tanh %538 : vector<8x16xf32>
    %cst_222 = arith.constant 1.000000e+00 : f32
    %540 = vector.broadcast %cst_222 : f32 to vector<8x16xf32>
    %541 = arith.subf %540, %533 : vector<8x16xf32>
    %542 = arith.mulf %541, %539 : vector<8x16xf32>
    %543 = arith.mulf %533, %459 : vector<8x16xf32>
    %544 = arith.addf %542, %543 : vector<8x16xf32>
    %545 = arith.index_cast %c5_i32 : i32 to index
    %c0_223 = arith.constant 0 : index
    %c0_224 = arith.constant 0 : index
    %546 = vector.load %arg27[%545, %c0_223, %c0_224] : memref<8x8x16xf32, #tpu.memory_space<vmem>>, vector<1x8x16xf32>
    %547 = vector.shape_cast %546 : vector<1x8x16xf32> to vector<8x16xf32>
    %548 = vector.shape_cast %506 : vector<8x16xf32> to vector<1x8x16xf32>
    tpu.vector_store %arg27[%545, %c0_223, %c0_224], %548 {strides = array<i32>} : memref<8x8x16xf32, #tpu.memory_space<vmem>>, vector<1x8x16xf32>,
    %549 = arith.index_cast %468 : i32 to index
    %c0_225 = arith.constant 0 : index
    %c0_226 = arith.constant 0 : index
    %550 = vector.load %arg28[%549, %c0_225, %c0_226] : memref<8x8x16xf32, #tpu.memory_space<vmem>>, vector<1x8x16xf32>
    %551 = vector.shape_cast %550 : vector<1x8x16xf32> to vector<8x16xf32>
    %552 = vector.shape_cast %544 : vector<8x16xf32> to vector<1x8x16xf32>
    tpu.vector_store %arg28[%549, %c0_225, %c0_226], %552 {strides = array<i32>} : memref<8x8x16xf32, #tpu.memory_space<vmem>>, vector<1x8x16xf32>,
    %c6_i32 = arith.constant 6 : i32
    %c7_i32_227 = arith.constant 7 : i32
    %553 = arith.subi %c7_i32_227, %c6_i32 : i32
    %554 = arith.index_cast %c6_i32 : i32 to index
    %c0_228 = arith.constant 0 : index
    %c0_229 = arith.constant 0 : index
    %555 = vector.load %arg21[%554, %c0_228, %c0_229] : memref<8x8x16xf32, #tpu.memory_space<vmem>>, vector<1x8x16xf32>
    %556 = vector.shape_cast %555 : vector<1x8x16xf32> to vector<8x16xf32>
    %557 = arith.index_cast %c6_i32 : i32 to index
    %c0_230 = arith.constant 0 : index
    %c0_231 = arith.constant 0 : index
    %558 = vector.load %arg22[%557, %c0_230, %c0_231] : memref<8x8x16xf32, #tpu.memory_space<vmem>>, vector<1x8x16xf32>
    %559 = vector.shape_cast %558 : vector<1x8x16xf32> to vector<8x16xf32>
    %560 = arith.index_cast %c6_i32 : i32 to index
    %c0_232 = arith.constant 0 : index
    %c0_233 = arith.constant 0 : index
    %561 = vector.load %arg23[%560, %c0_232, %c0_233] : memref<8x8x16xf32, #tpu.memory_space<vmem>>, vector<1x8x16xf32>
    %562 = vector.shape_cast %561 : vector<1x8x16xf32> to vector<8x16xf32>
    %cst_234 = arith.constant dense<0.000000e+00> : vector<8x16xf32>
    %563 = tpu.matmul %506, %30, %cst_234 {dimension_numbers = #tpu.dot_dimension_numbers<[1], [0], [0], [1], [0, 0, 1, 1], [], []>} : vector<8x16xf32>, vector<16x16xf32>, vector<8x16xf32> -> vector<8x16xf32>
    %564 = arith.addf %556, %563 : vector<8x16xf32>
    %565 = vector.broadcast %33 : vector<1x16xf32> to vector<8x16xf32>
    %566 = arith.addf %564, %565 : vector<8x16xf32>
    %567 = arith.negf %566 : vector<8x16xf32>
    %568 = math.exp %567 : vector<8x16xf32>
    %cst_235 = arith.constant 1.000000e+00 : f32
    %569 = vector.broadcast %cst_235 : f32 to vector<8x16xf32>
    %570 = arith.addf %569, %568 : vector<8x16xf32>
    %571 = arith.divf %569, %570 : vector<8x16xf32>
    %cst_236 = arith.constant dense<0.000000e+00> : vector<8x16xf32>
    %572 = tpu.matmul %506, %31, %cst_236 {dimension_numbers = #tpu.dot_dimension_numbers<[1], [0], [0], [1], [0, 0, 1, 1], [], []>} : vector<8x16xf32>, vector<16x16xf32>, vector<8x16xf32> -> vector<8x16xf32>
    %573 = arith.addf %559, %572 : vector<8x16xf32>
    %574 = vector.broadcast %34 : vector<1x16xf32> to vector<8x16xf32>
    %575 = arith.addf %573, %574 : vector<8x16xf32>
    %576 = arith.negf %575 : vector<8x16xf32>
    %577 = math.exp %576 : vector<8x16xf32>
    %cst_237 = arith.constant 1.000000e+00 : f32
    %578 = vector.broadcast %cst_237 : f32 to vector<8x16xf32>
    %579 = arith.addf %578, %577 : vector<8x16xf32>
    %580 = arith.divf %578, %579 : vector<8x16xf32>
    %cst_238 = arith.constant dense<0.000000e+00> : vector<8x16xf32>
    %581 = tpu.matmul %506, %32, %cst_238 {dimension_numbers = #tpu.dot_dimension_numbers<[1], [0], [0], [1], [0, 0, 1, 1], [], []>} : vector<8x16xf32>, vector<16x16xf32>, vector<8x16xf32> -> vector<8x16xf32>
    %582 = vector.broadcast %35 : vector<1x16xf32> to vector<8x16xf32>
    %583 = arith.addf %581, %582 : vector<8x16xf32>
    %584 = arith.mulf %571, %583 : vector<8x16xf32>
    %585 = arith.addf %562, %584 : vector<8x16xf32>
    %586 = math.tanh %585 : vector<8x16xf32>
    %cst_239 = arith.constant 1.000000e+00 : f32
    %587 = vector.broadcast %cst_239 : f32 to vector<8x16xf32>
    %588 = arith.subf %587, %580 : vector<8x16xf32>
    %589 = arith.mulf %588, %586 : vector<8x16xf32>
    %590 = arith.mulf %580, %506 : vector<8x16xf32>
    %591 = arith.addf %589, %590 : vector<8x16xf32>
    %592 = arith.index_cast %553 : i32 to index
    %c0_240 = arith.constant 0 : index
    %c0_241 = arith.constant 0 : index
    %593 = vector.load %arg24[%592, %c0_240, %c0_241] : memref<8x8x16xf32, #tpu.memory_space<vmem>>, vector<1x8x16xf32>
    %594 = vector.shape_cast %593 : vector<1x8x16xf32> to vector<8x16xf32>
    %595 = arith.index_cast %553 : i32 to index
    %c0_242 = arith.constant 0 : index
    %c0_243 = arith.constant 0 : index
    %596 = vector.load %arg25[%595, %c0_242, %c0_243] : memref<8x8x16xf32, #tpu.memory_space<vmem>>, vector<1x8x16xf32>
    %597 = vector.shape_cast %596 : vector<1x8x16xf32> to vector<8x16xf32>
    %598 = arith.index_cast %553 : i32 to index
    %c0_244 = arith.constant 0 : index
    %c0_245 = arith.constant 0 : index
    %599 = vector.load %arg26[%598, %c0_244, %c0_245] : memref<8x8x16xf32, #tpu.memory_space<vmem>>, vector<1x8x16xf32>
    %600 = vector.shape_cast %599 : vector<1x8x16xf32> to vector<8x16xf32>
    %cst_246 = arith.constant dense<0.000000e+00> : vector<8x16xf32>
    %601 = tpu.matmul %544, %36, %cst_246 {dimension_numbers = #tpu.dot_dimension_numbers<[1], [0], [0], [1], [0, 0, 1, 1], [], []>} : vector<8x16xf32>, vector<16x16xf32>, vector<8x16xf32> -> vector<8x16xf32>
    %602 = arith.addf %594, %601 : vector<8x16xf32>
    %603 = vector.broadcast %39 : vector<1x16xf32> to vector<8x16xf32>
    %604 = arith.addf %602, %603 : vector<8x16xf32>
    %605 = arith.negf %604 : vector<8x16xf32>
    %606 = math.exp %605 : vector<8x16xf32>
    %cst_247 = arith.constant 1.000000e+00 : f32
    %607 = vector.broadcast %cst_247 : f32 to vector<8x16xf32>
    %608 = arith.addf %607, %606 : vector<8x16xf32>
    %609 = arith.divf %607, %608 : vector<8x16xf32>
    %cst_248 = arith.constant dense<0.000000e+00> : vector<8x16xf32>
    %610 = tpu.matmul %544, %37, %cst_248 {dimension_numbers = #tpu.dot_dimension_numbers<[1], [0], [0], [1], [0, 0, 1, 1], [], []>} : vector<8x16xf32>, vector<16x16xf32>, vector<8x16xf32> -> vector<8x16xf32>
    %611 = arith.addf %597, %610 : vector<8x16xf32>
    %612 = vector.broadcast %40 : vector<1x16xf32> to vector<8x16xf32>
    %613 = arith.addf %611, %612 : vector<8x16xf32>
    %614 = arith.negf %613 : vector<8x16xf32>
    %615 = math.exp %614 : vector<8x16xf32>
    %cst_249 = arith.constant 1.000000e+00 : f32
    %616 = vector.broadcast %cst_249 : f32 to vector<8x16xf32>
    %617 = arith.addf %616, %615 : vector<8x16xf32>
    %618 = arith.divf %616, %617 : vector<8x16xf32>
    %cst_250 = arith.constant dense<0.000000e+00> : vector<8x16xf32>
    %619 = tpu.matmul %544, %38, %cst_250 {dimension_numbers = #tpu.dot_dimension_numbers<[1], [0], [0], [1], [0, 0, 1, 1], [], []>} : vector<8x16xf32>, vector<16x16xf32>, vector<8x16xf32> -> vector<8x16xf32>
    %620 = vector.broadcast %41 : vector<1x16xf32> to vector<8x16xf32>
    %621 = arith.addf %619, %620 : vector<8x16xf32>
    %622 = arith.mulf %609, %621 : vector<8x16xf32>
    %623 = arith.addf %600, %622 : vector<8x16xf32>
    %624 = math.tanh %623 : vector<8x16xf32>
    %cst_251 = arith.constant 1.000000e+00 : f32
    %625 = vector.broadcast %cst_251 : f32 to vector<8x16xf32>
    %626 = arith.subf %625, %618 : vector<8x16xf32>
    %627 = arith.mulf %626, %624 : vector<8x16xf32>
    %628 = arith.mulf %618, %544 : vector<8x16xf32>
    %629 = arith.addf %627, %628 : vector<8x16xf32>
    %630 = arith.index_cast %c6_i32 : i32 to index
    %c0_252 = arith.constant 0 : index
    %c0_253 = arith.constant 0 : index
    %631 = vector.load %arg27[%630, %c0_252, %c0_253] : memref<8x8x16xf32, #tpu.memory_space<vmem>>, vector<1x8x16xf32>
    %632 = vector.shape_cast %631 : vector<1x8x16xf32> to vector<8x16xf32>
    %633 = vector.shape_cast %591 : vector<8x16xf32> to vector<1x8x16xf32>
    tpu.vector_store %arg27[%630, %c0_252, %c0_253], %633 {strides = array<i32>} : memref<8x8x16xf32, #tpu.memory_space<vmem>>, vector<1x8x16xf32>,
    %634 = arith.index_cast %553 : i32 to index
    %c0_254 = arith.constant 0 : index
    %c0_255 = arith.constant 0 : index
    %635 = vector.load %arg28[%634, %c0_254, %c0_255] : memref<8x8x16xf32, #tpu.memory_space<vmem>>, vector<1x8x16xf32>
    %636 = vector.shape_cast %635 : vector<1x8x16xf32> to vector<8x16xf32>
    %637 = vector.shape_cast %629 : vector<8x16xf32> to vector<1x8x16xf32>
    tpu.vector_store %arg28[%634, %c0_254, %c0_255], %637 {strides = array<i32>} : memref<8x8x16xf32, #tpu.memory_space<vmem>>, vector<1x8x16xf32>,
    %c7_i32_256 = arith.constant 7 : i32
    %c7_i32_257 = arith.constant 7 : i32
    %638 = arith.subi %c7_i32_257, %c7_i32_256 : i32
    %639 = arith.index_cast %c7_i32_256 : i32 to index
    %c0_258 = arith.constant 0 : index
    %c0_259 = arith.constant 0 : index
    %640 = vector.load %arg21[%639, %c0_258, %c0_259] : memref<8x8x16xf32, #tpu.memory_space<vmem>>, vector<1x8x16xf32>
    %641 = vector.shape_cast %640 : vector<1x8x16xf32> to vector<8x16xf32>
    %642 = arith.index_cast %c7_i32_256 : i32 to index
    %c0_260 = arith.constant 0 : index
    %c0_261 = arith.constant 0 : index
    %643 = vector.load %arg22[%642, %c0_260, %c0_261] : memref<8x8x16xf32, #tpu.memory_space<vmem>>, vector<1x8x16xf32>
    %644 = vector.shape_cast %643 : vector<1x8x16xf32> to vector<8x16xf32>
    %645 = arith.index_cast %c7_i32_256 : i32 to index
    %c0_262 = arith.constant 0 : index
    %c0_263 = arith.constant 0 : index
    %646 = vector.load %arg23[%645, %c0_262, %c0_263] : memref<8x8x16xf32, #tpu.memory_space<vmem>>, vector<1x8x16xf32>
    %647 = vector.shape_cast %646 : vector<1x8x16xf32> to vector<8x16xf32>
    %cst_264 = arith.constant dense<0.000000e+00> : vector<8x16xf32>
    %648 = tpu.matmul %591, %30, %cst_264 {dimension_numbers = #tpu.dot_dimension_numbers<[1], [0], [0], [1], [0, 0, 1, 1], [], []>} : vector<8x16xf32>, vector<16x16xf32>, vector<8x16xf32> -> vector<8x16xf32>
    %649 = arith.addf %641, %648 : vector<8x16xf32>
    %650 = vector.broadcast %33 : vector<1x16xf32> to vector<8x16xf32>
    %651 = arith.addf %649, %650 : vector<8x16xf32>
    %652 = arith.negf %651 : vector<8x16xf32>
    %653 = math.exp %652 : vector<8x16xf32>
    %cst_265 = arith.constant 1.000000e+00 : f32
    %654 = vector.broadcast %cst_265 : f32 to vector<8x16xf32>
    %655 = arith.addf %654, %653 : vector<8x16xf32>
    %656 = arith.divf %654, %655 : vector<8x16xf32>
    %cst_266 = arith.constant dense<0.000000e+00> : vector<8x16xf32>
    %657 = tpu.matmul %591, %31, %cst_266 {dimension_numbers = #tpu.dot_dimension_numbers<[1], [0], [0], [1], [0, 0, 1, 1], [], []>} : vector<8x16xf32>, vector<16x16xf32>, vector<8x16xf32> -> vector<8x16xf32>
    %658 = arith.addf %644, %657 : vector<8x16xf32>
    %659 = vector.broadcast %34 : vector<1x16xf32> to vector<8x16xf32>
    %660 = arith.addf %658, %659 : vector<8x16xf32>
    %661 = arith.negf %660 : vector<8x16xf32>
    %662 = math.exp %661 : vector<8x16xf32>
    %cst_267 = arith.constant 1.000000e+00 : f32
    %663 = vector.broadcast %cst_267 : f32 to vector<8x16xf32>
    %664 = arith.addf %663, %662 : vector<8x16xf32>
    %665 = arith.divf %663, %664 : vector<8x16xf32>
    %cst_268 = arith.constant dense<0.000000e+00> : vector<8x16xf32>
    %666 = tpu.matmul %591, %32, %cst_268 {dimension_numbers = #tpu.dot_dimension_numbers<[1], [0], [0], [1], [0, 0, 1, 1], [], []>} : vector<8x16xf32>, vector<16x16xf32>, vector<8x16xf32> -> vector<8x16xf32>
    %667 = vector.broadcast %35 : vector<1x16xf32> to vector<8x16xf32>
    %668 = arith.addf %666, %667 : vector<8x16xf32>
    %669 = arith.mulf %656, %668 : vector<8x16xf32>
    %670 = arith.addf %647, %669 : vector<8x16xf32>
    %671 = math.tanh %670 : vector<8x16xf32>
    %cst_269 = arith.constant 1.000000e+00 : f32
    %672 = vector.broadcast %cst_269 : f32 to vector<8x16xf32>
    %673 = arith.subf %672, %665 : vector<8x16xf32>
    %674 = arith.mulf %673, %671 : vector<8x16xf32>
    %675 = arith.mulf %665, %591 : vector<8x16xf32>
    %676 = arith.addf %674, %675 : vector<8x16xf32>
    %677 = arith.index_cast %638 : i32 to index
    %c0_270 = arith.constant 0 : index
    %c0_271 = arith.constant 0 : index
    %678 = vector.load %arg24[%677, %c0_270, %c0_271] : memref<8x8x16xf32, #tpu.memory_space<vmem>>, vector<1x8x16xf32>
    %679 = vector.shape_cast %678 : vector<1x8x16xf32> to vector<8x16xf32>
    %680 = arith.index_cast %638 : i32 to index
    %c0_272 = arith.constant 0 : index
    %c0_273 = arith.constant 0 : index
    %681 = vector.load %arg25[%680, %c0_272, %c0_273] : memref<8x8x16xf32, #tpu.memory_space<vmem>>, vector<1x8x16xf32>
    %682 = vector.shape_cast %681 : vector<1x8x16xf32> to vector<8x16xf32>
    %683 = arith.index_cast %638 : i32 to index
    %c0_274 = arith.constant 0 : index
    %c0_275 = arith.constant 0 : index
    %684 = vector.load %arg26[%683, %c0_274, %c0_275] : memref<8x8x16xf32, #tpu.memory_space<vmem>>, vector<1x8x16xf32>
    %685 = vector.shape_cast %684 : vector<1x8x16xf32> to vector<8x16xf32>
    %cst_276 = arith.constant dense<0.000000e+00> : vector<8x16xf32>
    %686 = tpu.matmul %629, %36, %cst_276 {dimension_numbers = #tpu.dot_dimension_numbers<[1], [0], [0], [1], [0, 0, 1, 1], [], []>} : vector<8x16xf32>, vector<16x16xf32>, vector<8x16xf32> -> vector<8x16xf32>
    %687 = arith.addf %679, %686 : vector<8x16xf32>
    %688 = vector.broadcast %39 : vector<1x16xf32> to vector<8x16xf32>
    %689 = arith.addf %687, %688 : vector<8x16xf32>
    %690 = arith.negf %689 : vector<8x16xf32>
    %691 = math.exp %690 : vector<8x16xf32>
    %cst_277 = arith.constant 1.000000e+00 : f32
    %692 = vector.broadcast %cst_277 : f32 to vector<8x16xf32>
    %693 = arith.addf %692, %691 : vector<8x16xf32>
    %694 = arith.divf %692, %693 : vector<8x16xf32>
    %cst_278 = arith.constant dense<0.000000e+00> : vector<8x16xf32>
    %695 = tpu.matmul %629, %37, %cst_278 {dimension_numbers = #tpu.dot_dimension_numbers<[1], [0], [0], [1], [0, 0, 1, 1], [], []>} : vector<8x16xf32>, vector<16x16xf32>, vector<8x16xf32> -> vector<8x16xf32>
    %696 = arith.addf %682, %695 : vector<8x16xf32>
    %697 = vector.broadcast %40 : vector<1x16xf32> to vector<8x16xf32>
    %698 = arith.addf %696, %697 : vector<8x16xf32>
    %699 = arith.negf %698 : vector<8x16xf32>
    %700 = math.exp %699 : vector<8x16xf32>
    %cst_279 = arith.constant 1.000000e+00 : f32
    %701 = vector.broadcast %cst_279 : f32 to vector<8x16xf32>
    %702 = arith.addf %701, %700 : vector<8x16xf32>
    %703 = arith.divf %701, %702 : vector<8x16xf32>
    %cst_280 = arith.constant dense<0.000000e+00> : vector<8x16xf32>
    %704 = tpu.matmul %629, %38, %cst_280 {dimension_numbers = #tpu.dot_dimension_numbers<[1], [0], [0], [1], [0, 0, 1, 1], [], []>} : vector<8x16xf32>, vector<16x16xf32>, vector<8x16xf32> -> vector<8x16xf32>
    %705 = vector.broadcast %41 : vector<1x16xf32> to vector<8x16xf32>
    %706 = arith.addf %704, %705 : vector<8x16xf32>
    %707 = arith.mulf %694, %706 : vector<8x16xf32>
    %708 = arith.addf %685, %707 : vector<8x16xf32>
    %709 = math.tanh %708 : vector<8x16xf32>
    %cst_281 = arith.constant 1.000000e+00 : f32
    %710 = vector.broadcast %cst_281 : f32 to vector<8x16xf32>
    %711 = arith.subf %710, %703 : vector<8x16xf32>
    %712 = arith.mulf %711, %709 : vector<8x16xf32>
    %713 = arith.mulf %703, %629 : vector<8x16xf32>
    %714 = arith.addf %712, %713 : vector<8x16xf32>
    %715 = arith.index_cast %c7_i32_256 : i32 to index
    %c0_282 = arith.constant 0 : index
    %c0_283 = arith.constant 0 : index
    %716 = vector.load %arg27[%715, %c0_282, %c0_283] : memref<8x8x16xf32, #tpu.memory_space<vmem>>, vector<1x8x16xf32>
    %717 = vector.shape_cast %716 : vector<1x8x16xf32> to vector<8x16xf32>
    %718 = vector.shape_cast %676 : vector<8x16xf32> to vector<1x8x16xf32>
    tpu.vector_store %arg27[%715, %c0_282, %c0_283], %718 {strides = array<i32>} : memref<8x8x16xf32, #tpu.memory_space<vmem>>, vector<1x8x16xf32>,
    %719 = arith.index_cast %638 : i32 to index
    %c0_284 = arith.constant 0 : index
    %c0_285 = arith.constant 0 : index
    %720 = vector.load %arg28[%719, %c0_284, %c0_285] : memref<8x8x16xf32, #tpu.memory_space<vmem>>, vector<1x8x16xf32>
    %721 = vector.shape_cast %720 : vector<1x8x16xf32> to vector<8x16xf32>
    %722 = vector.shape_cast %714 : vector<8x16xf32> to vector<1x8x16xf32>
    tpu.vector_store %arg28[%719, %c0_284, %c0_285], %722 {strides = array<i32>} : memref<8x8x16xf32, #tpu.memory_space<vmem>>, vector<1x8x16xf32>,
    %c8_i32 = arith.constant 8 : i32
    %c0_286 = arith.constant 0 : index
    %c0_287 = arith.constant 0 : index
    %c0_288 = arith.constant 0 : index
    %723 = vector.load %arg27[%c0_286, %c0_287, %c0_288] : memref<8x8x16xf32, #tpu.memory_space<vmem>>, vector<8x8x16xf32>
    %724 = vector.shape_cast %723 : vector<8x8x16xf32> to vector<64x16xf32>
    %c0_289 = arith.constant 0 : index
    %c0_290 = arith.constant 0 : index
    %c0_291 = arith.constant 0 : index
    %725 = vector.load %arg28[%c0_289, %c0_290, %c0_291] : memref<8x8x16xf32, #tpu.memory_space<vmem>>, vector<8x8x16xf32>
    %726 = vector.shape_cast %725 : vector<8x8x16xf32> to vector<64x16xf32>
    %c0_292 = arith.constant 0 : index
    %c0_293 = arith.constant 0 : index
    %727 = vector.load %arg17[%c0_292, %c0_293] : memref<16x8xf32, #tpu.memory_space<vmem>>, vector<16x8xf32>
    %cst_294 = arith.constant dense<0.000000e+00> : vector<64x8xf32>
    %728 = tpu.matmul %724, %727, %cst_294 {dimension_numbers = #tpu.dot_dimension_numbers<[1], [0], [0], [1], [0, 0, 1, 1], [], []>} : vector<64x16xf32>, vector<16x8xf32>, vector<64x8xf32> -> vector<64x8xf32>
    %c0_295 = arith.constant 0 : index
    %c0_296 = arith.constant 0 : index
    %729 = vector.load %arg18[%c0_295, %c0_296] : memref<16x8xf32, #tpu.memory_space<vmem>>, vector<16x8xf32>
    %cst_297 = arith.constant dense<0.000000e+00> : vector<64x8xf32>
    %730 = tpu.matmul %726, %729, %cst_297 {dimension_numbers = #tpu.dot_dimension_numbers<[1], [0], [0], [1], [0, 0, 1, 1], [], []>} : vector<64x16xf32>, vector<16x8xf32>, vector<64x8xf32> -> vector<64x8xf32>
    %731 = arith.addf %728, %730 : vector<64x8xf32>
    %c0_298 = arith.constant 0 : index
    %c0_299 = arith.constant 0 : index
    %732 = vector.load %arg19[%c0_298, %c0_299] : memref<1x8xf32, #tpu.memory_space<vmem>>, vector<1x8xf32>
    %733 = vector.broadcast %732 : vector<1x8xf32> to vector<64x8xf32>
    %734 = arith.addf %731, %733 : vector<64x8xf32>
    %735 = vector.shape_cast %734 : vector<64x8xf32> to vector<8x8x8xf32>
    %c0_300 = arith.constant 0 : index
    %c0_301 = arith.constant 0 : index
    %c0_302 = arith.constant 0 : index
    %736 = vector.load %arg20[%c0_300, %c0_301, %c0_302] : memref<8x8x8xf32, #tpu.memory_space<vmem>>, vector<8x8x8xf32>
    tpu.vector_store %arg20[%c0_300, %c0_301, %c0_302], %735 {strides = array<i32>} : memref<8x8x8xf32, #tpu.memory_space<vmem>>, vector<8x8x8xf32>,
    return
  }
}

</mosaic_0001>

<llo_original>
// kernel: tpu_custom_call.1
$region0: #{tpu_custom_call.1}
  #allocation0 [shape = 'u32[]', space=smem, size = 0x4, offset = 0x4, fixed_abs, tag = 'smem constant byte address 0x4 - core index']
  #allocation1 [shape = 'u32[72,128]{1,0:T(1,128)}', space=vmem, size = 0x9000, scoped, tag = 'internal scratch']
  #allocation2 [shape = 'f32[8,8,16]{2,1,0:T(8,128)}', space=vmem, size = 0x8000, scoped, tag = 'scratch operand']
  #allocation3 [shape = 'f32[8,8,16]{2,1,0:T(8,128)}', space=vmem, size = 0x8000, scoped, tag = 'scratch operand']
  #allocation4 [shape = 'f32[8,8,16]{2,1,0:T(8,128)}', space=vmem, size = 0x8000, scoped, tag = 'scratch operand']
  #allocation5 [shape = 'f32[8,8,16]{2,1,0:T(8,128)}', space=vmem, size = 0x8000, scoped, tag = 'scratch operand']
  #allocation6 [shape = 'f32[8,8,16]{2,1,0:T(8,128)}', space=vmem, size = 0x8000, scoped, tag = 'scratch operand']
  #allocation7 [shape = 'f32[8,8,16]{2,1,0:T(8,128)}', space=vmem, size = 0x8000, scoped, tag = 'scratch operand']
  #allocation8 [shape = 'f32[8,8,16]{2,1,0:T(8,128)}', space=vmem, size = 0x8000, scoped, tag = 'scratch operand']
  #allocation9 [shape = 'f32[8,8,16]{2,1,0:T(8,128)}', space=vmem, size = 0x8000, scoped, tag = 'scratch operand']
  %s0 = inlined_call_operand.hbm [shape: f32[8,8,32], index: 0, kind: input, shape index: {}]
  %s1 = inlined_call_operand.vmem [shape: f32[32,48], index: 1, kind: input, shape index: {}]
  %s2 = inlined_call_operand.hbm [shape: f32[1,48], index: 2, kind: input, shape index: {}]
  %s3 = inlined_call_operand.hbm [shape: f32[32,48], index: 3, kind: input, shape index: {}]
  %s4 = inlined_call_operand.hbm [shape: f32[1,48], index: 4, kind: input, shape index: {}]
  %s5 = inlined_call_operand.vmem [shape: f32[16,16], index: 5, kind: input, shape index: {}]
  %s6 = inlined_call_operand.hbm [shape: f32[16,16], index: 6, kind: input, shape index: {}]
  %s7 = inlined_call_operand.hbm [shape: f32[16,16], index: 7, kind: input, shape index: {}]
  %s8 = inlined_call_operand.hbm [shape: f32[1,16], index: 8, kind: input, shape index: {}]
  %s9 = inlined_call_operand.hbm [shape: f32[1,16], index: 9, kind: input, shape index: {}]
  %s10 = inlined_call_operand.hbm [shape: f32[1,16], index: 10, kind: input, shape index: {}]
  %s11 = inlined_call_operand.hbm [shape: f32[16,16], index: 11, kind: input, shape index: {}]
  %s12 = inlined_call_operand.hbm [shape: f32[16,16], index: 12, kind: input, shape index: {}]
  %s13 = inlined_call_operand.hbm [shape: f32[16,16], index: 13, kind: input, shape index: {}]
  %s14 = inlined_call_operand.hbm [shape: f32[1,16], index: 14, kind: input, shape index: {}]
  %s15 = inlined_call_operand.hbm [shape: f32[1,16], index: 15, kind: input, shape index: {}]
  %s16 = inlined_call_operand.hbm [shape: f32[1,16], index: 16, kind: input, shape index: {}]
  %s17 = inlined_call_operand.vmem [shape: f32[16,8], index: 17, kind: input, shape index: {}]
  %s18 = inlined_call_operand.vmem [shape: f32[16,8], index: 18, kind: input, shape index: {}]
  %s19 = inlined_call_operand.vmem [shape: f32[1,8], index: 19, kind: input, shape index: {}]
  %s20 = inlined_call_operand.hbm [shape: f32[8,8,8], index: 20, kind: output, shape index: {}]
  %s21 = sld [smem:[#allocation0]]
  $region150: #{tpu_custom_call.1} parent=0
    _
  %s23 = ssub.s32 1, %s21
  %s24 = scalar_select 0, %s23, %s21
  $region1: #{tpu_custom_call.1} parent=0
    #allocation10 [shape = 'u8[32768]{0}', space=vmem, size = 0x8000, scoped, tag = 'input window, operand 0, single buffered']
    #allocation11 [shape = 's32[1]{0}', space=sflag, size = 0x4, scoped, tag = 'scoped memory for tpu_custom_call.1']
    #allocation12 [shape = 's32[1]{0}', space=sflag, size = 0x4, scoped, tag = 'scoped memory for tpu_custom_call.1']
    #allocation13 [shape = 'u8[512]{0}', space=vmem, size = 0x400, scoped, tag = 'input window, operand 2, single buffered']
    #allocation14 [shape = 's32[1]{0}', space=sflag, size = 0x4, scoped, tag = 'scoped memory for tpu_custom_call.1']
    #allocation15 [shape = 'u8[16384]{0}', space=vmem, size = 0x4000, scoped, tag = 'input window, operand 3, single buffered']
    #allocation16 [shape = 'u8[512]{0}', space=vmem, size = 0x400, scoped, tag = 'input window, operand 4, single buffered']
    #allocation17 [shape = 's32[1]{0}', space=sflag, size = 0x4, scoped, tag = 'scoped memory for tpu_custom_call.1']
    #allocation18 [shape = 'u8[8192]{0}', space=vmem, size = 0x2000, scoped, tag = 'input window, operand 6, single buffered']
    #allocation19 [shape = 'u8[8192]{0}', space=vmem, size = 0x2000, scoped, tag = 'input window, operand 7, single buffered']
    #allocation20 [shape = 's32[1]{0}', space=sflag, size = 0x4, scoped, tag = 'scoped memory for tpu_custom_call.1']
    #allocation21 [shape = 'u8[512]{0}', space=vmem, size = 0x400, scoped, tag = 'input window, operand 8, single buffered']
    #allocation22 [shape = 'u8[512]{0}', space=vmem, size = 0x400, scoped, tag = 'input window, operand 9, single buffered']
    #allocation23 [shape = 's32[1]{0}', space=sflag, size = 0x4, scoped, tag = 'scoped memory for tpu_custom_call.1']
    #allocation24 [shape = 'u8[512]{0}', space=vmem, size = 0x400, scoped, tag = 'input window, operand 10, single buffered']
    #allocation25 [shape = 'u8[8192]{0}', space=vmem, size = 0x2000, scoped, tag = 'input window, operand 11, single buffered']
    #allocation26 [shape = 's32[1]{0}', space=sflag, size = 0x4, scoped, tag = 'scoped memory for tpu_custom_call.1']
    #allocation27 [shape = 'u8[8192]{0}', space=vmem, size = 0x2000, scoped, tag = 'input window, operand 12, single buffered']
    #allocation28 [shape = 'u8[8192]{0}', space=vmem, size = 0x2000, scoped, tag = 'input window, operand 13, single buffered']
    #allocation29 [shape = 's32[1]{0}', space=sflag, size = 0x4, scoped, tag = 'scoped memory for tpu_custom_call.1']
    #allocation30 [shape = 'u8[512]{0}', space=vmem, size = 0x400, scoped, tag = 'input window, operand 14, single buffered']
    #allocation31 [shape = 'u8[512]{0}', space=vmem, size = 0x400, scoped, tag = 'input window, operand 15, single buffered']
    #allocation32 [shape = 's32[1]{0}', space=sflag, size = 0x4, scoped, tag = 'scoped memory for tpu_custom_call.1']
    #allocation33 [shape = 'u8[512]{0}', space=vmem, size = 0x400, scoped, tag = 'input window, operand 16, single buffered']
    #allocation34 [shape = 'u8[32768]{0}', space=vmem, size = 0x8000, scoped, tag = 'output window, operand 0, single buffered']
    %25 = vsyncpa [#allocation11], 0
    %26 = vsyncpa [#allocation14], 0
    %27 = vsyncpa [#allocation17], 0
    %28 = vsyncpa [#allocation20], 0
    %29 = vsyncpa [#allocation23], 0
    %30 = vsyncpa [#allocation26], 0
    %31 = vsyncpa [#allocation29], 0
    %32 = vsyncpa [#allocation32], 0
    %33 = vsyncpa [#allocation12], 0
    // Predicated region
    $region2: #{tpu_custom_call.1} parent=1 // pred_check
      _
    $region3: #{tpu_custom_call.1} parent=1 // pred_check_branch
      %35 = sbr.rel (0) target = $region5
    $region4: #{tpu_custom_call.1} parent=1 // pred_region
      %37 = vsyncadd [#allocation11], 0
      %s38 = sshll.u32 %s0, 4
      %s39 = int_to_ptr.hbm [resolvable:$true] %s38
      %s40 = sshll.u32 [#allocation10], 4
      %s41 = int_to_ptr.vmem [resolvable:$true] %s40
      %46 = dma.hbm_to_vmem [thread:$0]  %s39, 1024, %s41, [#allocation11], 128, 128, 8
    $region5: #{tpu_custom_call.1} parent=1 // pred_fallthru
      _
    // Predicated region
    $region6: #{tpu_custom_call.1} parent=1 // pred_check
      _
    $region7: #{tpu_custom_call.1} parent=1 // pred_check_branch
      %48 = sbr.rel (0) target = $region9
    $region8: #{tpu_custom_call.1} parent=1 // pred_region
      _
    $region9: #{tpu_custom_call.1} parent=1 // pred_fallthru
      _
    // Predicated region
    $region10: #{tpu_custom_call.1} parent=1 // pred_check
      _
    $region11: #{tpu_custom_call.1} parent=1 // pred_check_branch
      %50 = sbr.rel (0) target = $region13
    $region12: #{tpu_custom_call.1} parent=1 // pred_region
      %52 = vsyncadd [#allocation14], 0
      %s54 = sshll.u32 %s2, 4
      %s55 = int_to_ptr.hbm [resolvable:$true] %s54
      %s56 = sshll.u32 [#allocation13], 4
      %s57 = int_to_ptr.vmem [resolvable:$true] %s56
      %59 = dma.hbm_to_vmem [thread:$0]  %s55, 16, %s57, [#allocation14]
    $region13: #{tpu_custom_call.1} parent=1 // pred_fallthru
      _
    // Predicated region
    $region14: #{tpu_custom_call.1} parent=1 // pred_check
      _
    $region15: #{tpu_custom_call.1} parent=1 // pred_check_branch
      %61 = sbr.rel (0) target = $region17
    $region16: #{tpu_custom_call.1} parent=1 // pred_region
      %63 = vsyncadd [#allocation14], 0
      %s64 = sshll.u32 %s3, 4
      %s65 = int_to_ptr.hbm [resolvable:$true] %s64
      %s66 = sshll.u32 [#allocation15], 4
      %s67 = int_to_ptr.vmem [resolvable:$true] %s66
      %72 = dma.hbm_to_vmem [thread:$0]  %s65, 512, %s67, [#allocation14], 128, 128, 8
    $region17: #{tpu_custom_call.1} parent=1 // pred_fallthru
      _
    // Predicated region
    $region18: #{tpu_custom_call.1} parent=1 // pred_check
      _
    $region19: #{tpu_custom_call.1} parent=1 // pred_check_branch
      %74 = sbr.rel (0) target = $region21
    $region20: #{tpu_custom_call.1} parent=1 // pred_region
      %76 = vsyncadd [#allocation17], 0
      %s78 = sshll.u32 %s4, 4
      %s79 = int_to_ptr.hbm [resolvable:$true] %s78
      %s80 = sshll.u32 [#allocation16], 4
      %s81 = int_to_ptr.vmem [resolvable:$true] %s80
      %83 = dma.hbm_to_vmem [thread:$0]  %s79, 16, %s81, [#allocation17]
    $region21: #{tpu_custom_call.1} parent=1 // pred_fallthru
      _
    // Predicated region
    $region22: #{tpu_custom_call.1} parent=1 // pred_check
      _
    $region23: #{tpu_custom_call.1} parent=1 // pred_check_branch
      %85 = sbr.rel (0) target = $region25
    $region24: #{tpu_custom_call.1} parent=1 // pred_region
      _
    $region25: #{tpu_custom_call.1} parent=1 // pred_fallthru
      _
    // Predicated region
    $region26: #{tpu_custom_call.1} parent=1 // pred_check
      _
    $region27: #{tpu_custom_call.1} parent=1 // pred_check_branch
      %87 = sbr.rel (0) target = $region29
    $region28: #{tpu_custom_call.1} parent=1 // pred_region
      %89 = vsyncadd [#allocation17], 0
      %s90 = sshll.u32 %s6, 4
      %s91 = int_to_ptr.hbm [resolvable:$true] %s90
      %s92 = sshll.u32 [#allocation18], 4
      %s93 = int_to_ptr.vmem [resolvable:$true] %s92
      %98 = dma.hbm_to_vmem [thread:$0]  %s91, 256, %s93, [#allocation17], 128, 128, 8
    $region29: #{tpu_custom_call.1} parent=1 // pred_fallthru
      _
    // Predicated region
    $region30: #{tpu_custom_call.1} parent=1 // pred_check
      _
    $region31: #{tpu_custom_call.1} parent=1 // pred_check_branch
      %100 = sbr.rel (0) target = $region33
    $region32: #{tpu_custom_call.1} parent=1 // pred_region
      %102 = vsyncadd [#allocation20], 0
      %s103 = sshll.u32 %s7, 4
      %s104 = int_to_ptr.hbm [resolvable:$true] %s103
      %s105 = sshll.u32 [#allocation19], 4
      %s106 = int_to_ptr.vmem [resolvable:$true] %s105
      %111 = dma.hbm_to_vmem [thread:$0]  %s104, 256, %s106, [#allocation20], 128, 128, 8
    $region33: #{tpu_custom_call.1} parent=1 // pred_fallthru
      _
    // Predicated region
    $region34: #{tpu_custom_call.1} parent=1 // pred_check
      _
    $region35: #{tpu_custom_call.1} parent=1 // pred_check_branch
      %113 = sbr.rel (0) target = $region37
    $region36: #{tpu_custom_call.1} parent=1 // pred_region
      %115 = vsyncadd [#allocation20], 0
      %s117 = sshll.u32 %s8, 4
      %s118 = int_to_ptr.hbm [resolvable:$true] %s117
      %s119 = sshll.u32 [#allocation21], 4
      %s120 = int_to_ptr.vmem [resolvable:$true] %s119
      %122 = dma.hbm_to_vmem [thread:$0]  %s118, 16, %s120, [#allocation20]
    $region37: #{tpu_custom_call.1} parent=1 // pred_fallthru
      _
    // Predicated region
    $region38: #{tpu_custom_call.1} parent=1 // pred_check
      _
    $region39: #{tpu_custom_call.1} parent=1 // pred_check_branch
      %124 = sbr.rel (0) target = $region41
    $region40: #{tpu_custom_call.1} parent=1 // pred_region
      %126 = vsyncadd [#allocation23], 0
      %s128 = sshll.u32 %s9, 4
      %s129 = int_to_ptr.hbm [resolvable:$true] %s128
      %s130 = sshll.u32 [#allocation22], 4
      %s131 = int_to_ptr.vmem [resolvable:$true] %s130
      %133 = dma.hbm_to_vmem [thread:$0]  %s129, 16, %s131, [#allocation23]
    $region41: #{tpu_custom_call.1} parent=1 // pred_fallthru
      _
    // Predicated region
    $region42: #{tpu_custom_call.1} parent=1 // pred_check
      _
    $region43: #{tpu_custom_call.1} parent=1 // pred_check_branch
      %135 = sbr.rel (0) target = $region45
    $region44: #{tpu_custom_call.1} parent=1 // pred_region
      %137 = vsyncadd [#allocation23], 0
      %s139 = sshll.u32 %s10, 4
      %s140 = int_to_ptr.hbm [resolvable:$true] %s139
      %s141 = sshll.u32 [#allocation24], 4
      %s142 = int_to_ptr.vmem [resolvable:$true] %s141
      %144 = dma.hbm_to_vmem [thread:$0]  %s140, 16, %s142, [#allocation23]
    $region45: #{tpu_custom_call.1} parent=1 // pred_fallthru
      _
    // Predicated region
    $region46: #{tpu_custom_call.1} parent=1 // pred_check
      _
    $region47: #{tpu_custom_call.1} parent=1 // pred_check_branch
      %146 = sbr.rel (0) target = $region49
    $region48: #{tpu_custom_call.1} parent=1 // pred_region
      %148 = vsyncadd [#allocation26], 0
      %s149 = sshll.u32 %s11, 4
      %s150 = int_to_ptr.hbm [resolvable:$true] %s149
      %s151 = sshll.u32 [#allocation25], 4
      %s152 = int_to_ptr.vmem [resolvable:$true] %s151
      %157 = dma.hbm_to_vmem [thread:$0]  %s150, 256, %s152, [#allocation26], 128, 128, 8
    $region49: #{tpu_custom_call.1} parent=1 // pred_fallthru
      _
    // Predicated region
    $region50: #{tpu_custom_call.1} parent=1 // pred_check
      _
    $region51: #{tpu_custom_call.1} parent=1 // pred_check_branch
      %159 = sbr.rel (0) target = $region53
    $region52: #{tpu_custom_call.1} parent=1 // pred_region
      %161 = vsyncadd [#allocation26], 0
      %s162 = sshll.u32 %s12, 4
      %s163 = int_to_ptr.hbm [resolvable:$true] %s162
      %s164 = sshll.u32 [#allocation27], 4
      %s165 = int_to_ptr.vmem [resolvable:$true] %s164
      %170 = dma.hbm_to_vmem [thread:$0]  %s163, 256, %s165, [#allocation26], 128, 128, 8
    $region53: #{tpu_custom_call.1} parent=1 // pred_fallthru
      _
    // Predicated region
    $region54: #{tpu_custom_call.1} parent=1 // pred_check
      _
    $region55: #{tpu_custom_call.1} parent=1 // pred_check_branch
      %172 = sbr.rel (0) target = $region57
    $region56: #{tpu_custom_call.1} parent=1 // pred_region
      %174 = vsyncadd [#allocation29], 0
      %s175 = sshll.u32 %s13, 4
      %s176 = int_to_ptr.hbm [resolvable:$true] %s175
      %s177 = sshll.u32 [#allocation28], 4
      %s178 = int_to_ptr.vmem [resolvable:$true] %s177
      %183 = dma.hbm_to_vmem [thread:$0]  %s176, 256, %s178, [#allocation29], 128, 128, 8
    $region57: #{tpu_custom_call.1} parent=1 // pred_fallthru
      _
    // Predicated region
    $region58: #{tpu_custom_call.1} parent=1 // pred_check
      _
    $region59: #{tpu_custom_call.1} parent=1 // pred_check_branch
      %185 = sbr.rel (0) target = $region61
    $region60: #{tpu_custom_call.1} parent=1 // pred_region
      %187 = vsyncadd [#allocation29], 0
      %s189 = sshll.u32 %s14, 4
      %s190 = int_to_ptr.hbm [resolvable:$true] %s189
      %s191 = sshll.u32 [#allocation30], 4
      %s192 = int_to_ptr.vmem [resolvable:$true] %s191
      %194 = dma.hbm_to_vmem [thread:$0]  %s190, 16, %s192, [#allocation29]
    $region61: #{tpu_custom_call.1} parent=1 // pred_fallthru
      _
    // Predicated region
    $region62: #{tpu_custom_call.1} parent=1 // pred_check
      _
    $region63: #{tpu_custom_call.1} parent=1 // pred_check_branch
      %196 = sbr.rel (0) target = $region65
    $region64: #{tpu_custom_call.1} parent=1 // pred_region
      %198 = vsyncadd [#allocation32], 0
      %s200 = sshll.u32 %s15, 4
      %s201 = int_to_ptr.hbm [resolvable:$true] %s200
      %s202 = sshll.u32 [#allocation31], 4
      %s203 = int_to_ptr.vmem [resolvable:$true] %s202
      %205 = dma.hbm_to_vmem [thread:$0]  %s201, 16, %s203, [#allocation32]
    $region65: #{tpu_custom_call.1} parent=1 // pred_fallthru
      _
    // Predicated region
    $region66: #{tpu_custom_call.1} parent=1 // pred_check
      _
    $region67: #{tpu_custom_call.1} parent=1 // pred_check_branch
      %207 = sbr.rel (0) target = $region69
    $region68: #{tpu_custom_call.1} parent=1 // pred_region
      %209 = vsyncadd [#allocation32], 0
      %s211 = sshll.u32 %s16, 4
      %s212 = int_to_ptr.hbm [resolvable:$true] %s211
      %s213 = sshll.u32 [#allocation33], 4
      %s214 = int_to_ptr.vmem [resolvable:$true] %s213
      %216 = dma.hbm_to_vmem [thread:$0]  %s212, 16, %s214, [#allocation32]
    $region69: #{tpu_custom_call.1} parent=1 // pred_fallthru
      _
    // Predicated region
    $region70: #{tpu_custom_call.1} parent=1 // pred_check
      _
    $region71: #{tpu_custom_call.1} parent=1 // pred_check_branch
      %218 = sbr.rel (0) target = $region73
    $region72: #{tpu_custom_call.1} parent=1 // pred_region
      _
    $region73: #{tpu_custom_call.1} parent=1 // pred_fallthru
      _
    // Predicated region
    $region74: #{tpu_custom_call.1} parent=1 // pred_check
      _
    $region75: #{tpu_custom_call.1} parent=1 // pred_check_branch
      %220 = sbr.rel (0) target = $region77
    $region76: #{tpu_custom_call.1} parent=1 // pred_region
      _
    $region77: #{tpu_custom_call.1} parent=1 // pred_fallthru
      _
    // Predicated region
    $region78: #{tpu_custom_call.1} parent=1 // pred_check
      _
    $region79: #{tpu_custom_call.1} parent=1 // pred_check_branch
      %222 = sbr.rel (0) target = $region81
    $region80: #{tpu_custom_call.1} parent=1 // pred_region
      _
    $region81: #{tpu_custom_call.1} parent=1 // pred_fallthru
      _
    // Predicated region
    $region82: #{tpu_custom_call.1} parent=1 // pred_check
      _
    $region83: #{tpu_custom_call.1} parent=1 // pred_check_branch
      %224 = sbr.rel (0) target = $region85
    $region84: #{tpu_custom_call.1} parent=1 // pred_region
      %226 = dma.done [#allocation11], 1024
    $region85: #{tpu_custom_call.1} parent=1 // pred_fallthru
      _
    // Predicated region
    $region86: #{tpu_custom_call.1} parent=1 // pred_check
      _
    $region87: #{tpu_custom_call.1} parent=1 // pred_check_branch
      %228 = sbr.rel (0) target = $region89
    $region88: #{tpu_custom_call.1} parent=1 // pred_region
      %230 = dma.done [#allocation14], 16
    $region89: #{tpu_custom_call.1} parent=1 // pred_fallthru
      _
    // Predicated region
    $region90: #{tpu_custom_call.1} parent=1 // pred_check
      _
    $region91: #{tpu_custom_call.1} parent=1 // pred_check_branch
      %232 = sbr.rel (0) target = $region93
    $region92: #{tpu_custom_call.1} parent=1 // pred_region
      %234 = dma.done [#allocation14], 512
    $region93: #{tpu_custom_call.1} parent=1 // pred_fallthru
      _
    // Predicated region
    $region94: #{tpu_custom_call.1} parent=1 // pred_check
      _
    $region95: #{tpu_custom_call.1} parent=1 // pred_check_branch
      %236 = sbr.rel (0) target = $region97
    $region96: #{tpu_custom_call.1} parent=1 // pred_region
      %238 = dma.done [#allocation17], 16
    $region97: #{tpu_custom_call.1} parent=1 // pred_fallthru
      _
    // Predicated region
    $region98: #{tpu_custom_call.1} parent=1 // pred_check
      _
    $region99: #{tpu_custom_call.1} parent=1 // pred_check_branch
      %240 = sbr.rel (0) target = $region101
    $region100: #{tpu_custom_call.1} parent=1 // pred_region
      %242 = dma.done [#allocation17], 256
    $region101: #{tpu_custom_call.1} parent=1 // pred_fallthru
      _
    // Predicated region
    $region102: #{tpu_custom_call.1} parent=1 // pred_check
      _
    $region103: #{tpu_custom_call.1} parent=1 // pred_check_branch
      %244 = sbr.rel (0) target = $region105
    $region104: #{tpu_custom_call.1} parent=1 // pred_region
      %246 = dma.done [#allocation20], 256
    $region105: #{tpu_custom_call.1} parent=1 // pred_fallthru
      _
    // Predicated region
    $region106: #{tpu_custom_call.1} parent=1 // pred_check
      _
    $region107: #{tpu_custom_call.1} parent=1 // pred_check_branch
      %248 = sbr.rel (0) target = $region109
    $region108: #{tpu_custom_call.1} parent=1 // pred_region
      %250 = dma.done [#allocation20], 16
    $region109: #{tpu_custom_call.1} parent=1 // pred_fallthru
      _
    // Predicated region
    $region110: #{tpu_custom_call.1} parent=1 // pred_check
      _
    $region111: #{tpu_custom_call.1} parent=1 // pred_check_branch
      %252 = sbr.rel (0) target = $region113
    $region112: #{tpu_custom_call.1} parent=1 // pred_region
      %254 = dma.done [#allocation23], 16
    $region113: #{tpu_custom_call.1} parent=1 // pred_fallthru
      _
    // Predicated region
    $region114: #{tpu_custom_call.1} parent=1 // pred_check
      _
    $region115: #{tpu_custom_call.1} parent=1 // pred_check_branch
      %256 = sbr.rel (0) target = $region117
    $region116: #{tpu_custom_call.1} parent=1 // pred_region
      %258 = dma.done [#allocation23], 16
    $region117: #{tpu_custom_call.1} parent=1 // pred_fallthru
      _
    // Predicated region
    $region118: #{tpu_custom_call.1} parent=1 // pred_check
      _
    $region119: #{tpu_custom_call.1} parent=1 // pred_check_branch
      %260 = sbr.rel (0) target = $region121
    $region120: #{tpu_custom_call.1} parent=1 // pred_region
      %262 = dma.done [#allocation26], 256
    $region121: #{tpu_custom_call.1} parent=1 // pred_fallthru
      _
    // Predicated region
    $region122: #{tpu_custom_call.1} parent=1 // pred_check
      _
    $region123: #{tpu_custom_call.1} parent=1 // pred_check_branch
      %264 = sbr.rel (0) target = $region125
    $region124: #{tpu_custom_call.1} parent=1 // pred_region
      %266 = dma.done [#allocation26], 256
    $region125: #{tpu_custom_call.1} parent=1 // pred_fallthru
      _
    // Predicated region
    $region126: #{tpu_custom_call.1} parent=1 // pred_check
      _
    $region127: #{tpu_custom_call.1} parent=1 // pred_check_branch
      %268 = sbr.rel (0) target = $region129
    $region128: #{tpu_custom_call.1} parent=1 // pred_region
      %270 = dma.done [#allocation29], 256
    $region129: #{tpu_custom_call.1} parent=1 // pred_fallthru
      _
    // Predicated region
    $region130: #{tpu_custom_call.1} parent=1 // pred_check
      _
    $region131: #{tpu_custom_call.1} parent=1 // pred_check_branch
      %272 = sbr.rel (0) target = $region133
    $region132: #{tpu_custom_call.1} parent=1 // pred_region
      %274 = dma.done [#allocation29], 16
    $region133: #{tpu_custom_call.1} parent=1 // pred_fallthru
      _
    // Predicated region
    $region134: #{tpu_custom_call.1} parent=1 // pred_check
      _
    $region135: #{tpu_custom_call.1} parent=1 // pred_check_branch
      %276 = sbr.rel (0) target = $region137
    $region136: #{tpu_custom_call.1} parent=1 // pred_region
      %278 = dma.done [#allocation32], 16
    $region137: #{tpu_custom_call.1} parent=1 // pred_fallthru
      _
    // Predicated region
    $region138: #{tpu_custom_call.1} parent=1 // pred_check
      _
    $region139: #{tpu_custom_call.1} parent=1 // pred_check_branch
      %280 = sbr.rel (0) target = $region141
    $region140: #{tpu_custom_call.1} parent=1 // pred_region
      %282 = dma.done [#allocation32], 16
    $region141: #{tpu_custom_call.1} parent=1 // pred_fallthru
      _
    %v283 = vld [vmem:[#allocation10] sm:$0xff]
    %v284 = vld [vmem:[#allocation10 + $0x8] sm:$0xff]
    %v285 = vld [vmem:[#allocation10 + $0x10] sm:$0xff]
    %v286 = vld [vmem:[#allocation10 + $0x18] sm:$0xff]
    %v287 = vld [vmem:[#allocation10 + $0x20] sm:$0xff]
    %v288 = vld [vmem:[#allocation10 + $0x28] sm:$0xff]
    %v289 = vld [vmem:[#allocation10 + $0x30] sm:$0xff]
    %v290 = vld [vmem:[#allocation10 + $0x38] sm:$0xff]
    %v291 = vld [vmem:[%s1] sm:$0xff]
    %v292 = vld [vmem:[%s1 + $0x8] sm:$0xff]
    %v293 = vld [vmem:[%s1 + $0x10] sm:$0xff]
    %v294 = vld [vmem:[%s1 + $0x18] sm:$0xff]
    %v295 = vld [vmem:[#allocation13] sm:$0x1]
    %v297 = vperm.slane %v295, 0
    %vm299 = vcmask 261120
    %v301 = vsel %vm299, %v283, 0
    %v304 = vsel %vm299, %v284, 0
    %v307 = vsel %vm299, %v285, 0
    %v310 = vsel %vm299, %v286, 0
    %v313 = vsel %vm299, %v287, 0
    %v316 = vsel %vm299, %v288, 0
    %v319 = vsel %vm299, %v289, 0
    %v322 = vsel %vm299, %v290, 0
    %324 = vmatpush.msra.mxu0 0.0
    %325 = vmatpush.msra.mxu0 0.0
    %326 = vmatpush.msra.mxu0 0.0
    %327 = vmatpush.msra.mxu0 0.0
    %328 = vmatpush.msra.mxu0 0.0
    %329 = vmatpush.msra.mxu0 0.0
    %330 = vmatpush.msra.mxu0 0.0
    %331 = vmatpush.msra.mxu0 0.0
    %332 = vmatpush.msra.mxu0 0.0
    %333 = vmatpush.msra.mxu0 0.0
    %334 = vmatpush.msra.mxu0 0.0
    %335 = vmatpush.msra.mxu0 0.0
    %336 = vmatpush.msra.mxu0 %v294
    %337 = vmatpush.msra.mxu0 %v293
    %338 = vmatpush.msra.mxu0 %v292
    %339 = vmatpush.msra.mxu0 %v291
    %340 = vmatmul.f32.gmra.mxu0 %v301
    %v341 = vpop.f32.mrf.mxu0
    %v342 = vadd.f32 %v297, %v341
    %343 = vmatmul.f32.gmra.mxu0 %v304
    %v344 = vpop.f32.mrf.mxu0
    %v345 = vadd.f32 %v297, %v344
    %346 = vmatmul.f32.gmra.mxu0 %v307
    %v347 = vpop.f32.mrf.mxu0
    %v348 = vadd.f32 %v297, %v347
    %349 = vmatmul.f32.gmra.mxu0 %v310
    %v350 = vpop.f32.mrf.mxu0
    %v351 = vadd.f32 %v297, %v350
    %352 = vmatmul.f32.gmra.mxu0 %v313
    %v353 = vpop.f32.mrf.mxu0
    %v354 = vadd.f32 %v297, %v353
    %355 = vmatmul.f32.gmra.mxu0 %v316
    %v356 = vpop.f32.mrf.mxu0
    %v357 = vadd.f32 %v297, %v356
    %358 = vmatmul.f32.gmra.mxu0 %v319
    %v359 = vpop.f32.mrf.mxu0
    %v360 = vadd.f32 %v297, %v359
    %361 = vmatmul.f32.gmra.mxu0 %v322
    %v362 = vpop.f32.mrf.mxu0
    %v363 = vadd.f32 %v297, %v362
    %364 = vdwg.mxu0
    %v365 = vld [vmem:[#allocation15] sm:$0xff]
    %v366 = vld [vmem:[#allocation15 + $0x8] sm:$0xff]
    %v367 = vld [vmem:[#allocation15 + $0x10] sm:$0xff]
    %v368 = vld [vmem:[#allocation15 + $0x18] sm:$0xff]
    %v369 = vld [vmem:[#allocation16] sm:$0x1]
    %v371 = vperm.slane %v369, 0
    %373 = vmatpush.msra.mxu0 0.0
    %374 = vmatpush.msra.mxu0 0.0
    %375 = vmatpush.msra.mxu0 0.0
    %376 = vmatpush.msra.mxu0 0.0
    %377 = vmatpush.msra.mxu0 0.0
    %378 = vmatpush.msra.mxu0 0.0
    %379 = vmatpush.msra.mxu0 0.0
    %380 = vmatpush.msra.mxu0 0.0
    %381 = vmatpush.msra.mxu0 0.0
    %382 = vmatpush.msra.mxu0 0.0
    %383 = vmatpush.msra.mxu0 0.0
    %384 = vmatpush.msra.mxu0 0.0
    %385 = vmatpush.msra.mxu0 %v368
    %386 = vmatpush.msra.mxu0 %v367
    %387 = vmatpush.msra.mxu0 %v366
    %388 = vmatpush.msra.mxu0 %v365
    %389 = vmatmul.f32.gmra.mxu0 %v301
    %v390 = vpop.f32.mrf.mxu0
    %v391 = vadd.f32 %v371, %v390
    %392 = vmatmul.f32.gmra.mxu0 %v304
    %v393 = vpop.f32.mrf.mxu0
    %v394 = vadd.f32 %v371, %v393
    %395 = vmatmul.f32.gmra.mxu0 %v307
    %v396 = vpop.f32.mrf.mxu0
    %v397 = vadd.f32 %v371, %v396
    %398 = vmatmul.f32.gmra.mxu0 %v310
    %v399 = vpop.f32.mrf.mxu0
    %v400 = vadd.f32 %v371, %v399
    %401 = vmatmul.f32.gmra.mxu0 %v313
    %v402 = vpop.f32.mrf.mxu0
    %v403 = vadd.f32 %v371, %v402
    %404 = vmatmul.f32.gmra.mxu0 %v316
    %v405 = vpop.f32.mrf.mxu0
    %v406 = vadd.f32 %v371, %v405
    %407 = vmatmul.f32.gmra.mxu0 %v319
    %v408 = vpop.f32.mrf.mxu0
    %v409 = vadd.f32 %v371, %v408
    %410 = vmatmul.f32.gmra.mxu0 %v322
    %v411 = vpop.f32.mrf.mxu0
    %v412 = vadd.f32 %v371, %v411
    %413 = vdwg.mxu0
    %vm414 = vcmask 130048
    %415 = vst.msk [vmem:[#allocation2] sm:$0xff] %vm414, %v342
    %416 = vst.msk [vmem:[#allocation2 + $0x8] sm:$0xff] %vm414, %v345
    %417 = vst.msk [vmem:[#allocation2 + $0x10] sm:$0xff] %vm414, %v348
    %418 = vst.msk [vmem:[#allocation2 + $0x18] sm:$0xff] %vm414, %v351
    %419 = vst.msk [vmem:[#allocation2 + $0x20] sm:$0xff] %vm414, %v354
    %420 = vst.msk [vmem:[#allocation2 + $0x28] sm:$0xff] %vm414, %v357
    %421 = vst.msk [vmem:[#allocation2 + $0x30] sm:$0xff] %vm414, %v360
    %422 = vst.msk [vmem:[#allocation2 + $0x38] sm:$0xff] %vm414, %v363
    %431 = vrot.lane.b32.xlu0 %v342, 112
    %v432 = vpop.permute.xlu0 %431
    %433 = vrot.lane.b32.xlu0 %v345, 112
    %v434 = vpop.permute.xlu0 %433
    %435 = vrot.lane.b32.xlu0 %v348, 112
    %v436 = vpop.permute.xlu0 %435
    %437 = vrot.lane.b32.xlu0 %v351, 112
    %v438 = vpop.permute.xlu0 %437
    %439 = vrot.lane.b32.xlu0 %v354, 112
    %v440 = vpop.permute.xlu0 %439
    %441 = vrot.lane.b32.xlu0 %v357, 112
    %v442 = vpop.permute.xlu0 %441
    %443 = vrot.lane.b32.xlu0 %v360, 112
    %v444 = vpop.permute.xlu0 %443
    %445 = vrot.lane.b32.xlu0 %v363, 112
    %v446 = vpop.permute.xlu0 %445
    %455 = vst.msk [vmem:[#allocation3] sm:$0xff] %vm414, %v432
    %456 = vst.msk [vmem:[#allocation3 + $0x8] sm:$0xff] %vm414, %v434
    %457 = vst.msk [vmem:[#allocation3 + $0x10] sm:$0xff] %vm414, %v436
    %458 = vst.msk [vmem:[#allocation3 + $0x18] sm:$0xff] %vm414, %v438
    %459 = vst.msk [vmem:[#allocation3 + $0x20] sm:$0xff] %vm414, %v440
    %460 = vst.msk [vmem:[#allocation3 + $0x28] sm:$0xff] %vm414, %v442
    %461 = vst.msk [vmem:[#allocation3 + $0x30] sm:$0xff] %vm414, %v444
    %462 = vst.msk [vmem:[#allocation3 + $0x38] sm:$0xff] %vm414, %v446
    %463 = vrot.lane.b32.xlu0 %v342, 96
    %v464 = vpop.permute.xlu0 %463
    %465 = vrot.lane.b32.xlu0 %v345, 96
    %v466 = vpop.permute.xlu0 %465
    %467 = vrot.lane.b32.xlu0 %v348, 96
    %v468 = vpop.permute.xlu0 %467
    %469 = vrot.lane.b32.xlu0 %v351, 96
    %v470 = vpop.permute.xlu0 %469
    %471 = vrot.lane.b32.xlu0 %v354, 96
    %v472 = vpop.permute.xlu0 %471
    %473 = vrot.lane.b32.xlu0 %v357, 96
    %v474 = vpop.permute.xlu0 %473
    %475 = vrot.lane.b32.xlu0 %v360, 96
    %v476 = vpop.permute.xlu0 %475
    %477 = vrot.lane.b32.xlu0 %v363, 96
    %v478 = vpop.permute.xlu0 %477
    %487 = vst.msk [vmem:[#allocation4] sm:$0xff] %vm414, %v464
    %488 = vst.msk [vmem:[#allocation4 + $0x8] sm:$0xff] %vm414, %v466
    %489 = vst.msk [vmem:[#allocation4 + $0x10] sm:$0xff] %vm414, %v468
    %490 = vst.msk [vmem:[#allocation4 + $0x18] sm:$0xff] %vm414, %v470
    %491 = vst.msk [vmem:[#allocation4 + $0x20] sm:$0xff] %vm414, %v472
    %492 = vst.msk [vmem:[#allocation4 + $0x28] sm:$0xff] %vm414, %v474
    %493 = vst.msk [vmem:[#allocation4 + $0x30] sm:$0xff] %vm414, %v476
    %494 = vst.msk [vmem:[#allocation4 + $0x38] sm:$0xff] %vm414, %v478
    %495 = vst.msk [vmem:[#allocation5] sm:$0xff] %vm414, %v391
    %496 = vst.msk [vmem:[#allocation5 + $0x8] sm:$0xff] %vm414, %v394
    %497 = vst.msk [vmem:[#allocation5 + $0x10] sm:$0xff] %vm414, %v397
    %498 = vst.msk [vmem:[#allocation5 + $0x18] sm:$0xff] %vm414, %v400
    %499 = vst.msk [vmem:[#allocation5 + $0x20] sm:$0xff] %vm414, %v403
    %500 = vst.msk [vmem:[#allocation5 + $0x28] sm:$0xff] %vm414, %v406
    %501 = vst.msk [vmem:[#allocation5 + $0x30] sm:$0xff] %vm414, %v409
    %502 = vst.msk [vmem:[#allocation5 + $0x38] sm:$0xff] %vm414, %v412
    %511 = vrot.lane.b32.xlu0 %v391, 112
    %v512 = vpop.permute.xlu0 %511
    %513 = vrot.lane.b32.xlu0 %v394, 112
    %v514 = vpop.permute.xlu0 %513
    %515 = vrot.lane.b32.xlu0 %v397, 112
    %v516 = vpop.permute.xlu0 %515
    %517 = vrot.lane.b32.xlu0 %v400, 112
    %v518 = vpop.permute.xlu0 %517
    %519 = vrot.lane.b32.xlu0 %v403, 112
    %v520 = vpop.permute.xlu0 %519
    %521 = vrot.lane.b32.xlu0 %v406, 112
    %v522 = vpop.permute.xlu0 %521
    %523 = vrot.lane.b32.xlu0 %v409, 112
    %v524 = vpop.permute.xlu0 %523
    %525 = vrot.lane.b32.xlu0 %v412, 112
    %v526 = vpop.permute.xlu0 %525
    %535 = vst.msk [vmem:[#allocation6] sm:$0xff] %vm414, %v512
    %536 = vst.msk [vmem:[#allocation6 + $0x8] sm:$0xff] %vm414, %v514
    %537 = vst.msk [vmem:[#allocation6 + $0x10] sm:$0xff] %vm414, %v516
    %538 = vst.msk [vmem:[#allocation6 + $0x18] sm:$0xff] %vm414, %v518
    %539 = vst.msk [vmem:[#allocation6 + $0x20] sm:$0xff] %vm414, %v520
    %540 = vst.msk [vmem:[#allocation6 + $0x28] sm:$0xff] %vm414, %v522
    %541 = vst.msk [vmem:[#allocation6 + $0x30] sm:$0xff] %vm414, %v524
    %542 = vst.msk [vmem:[#allocation6 + $0x38] sm:$0xff] %vm414, %v526
    %543 = vrot.lane.b32.xlu0 %v391, 96
    %v544 = vpop.permute.xlu0 %543
    %545 = vrot.lane.b32.xlu0 %v394, 96
    %v546 = vpop.permute.xlu0 %545
    %547 = vrot.lane.b32.xlu0 %v397, 96
    %v548 = vpop.permute.xlu0 %547
    %549 = vrot.lane.b32.xlu0 %v400, 96
    %v550 = vpop.permute.xlu0 %549
    %551 = vrot.lane.b32.xlu0 %v403, 96
    %v552 = vpop.permute.xlu0 %551
    %553 = vrot.lane.b32.xlu0 %v406, 96
    %v554 = vpop.permute.xlu0 %553
    %555 = vrot.lane.b32.xlu0 %v409, 96
    %v556 = vpop.permute.xlu0 %555
    %557 = vrot.lane.b32.xlu0 %v412, 96
    %v558 = vpop.permute.xlu0 %557
    %567 = vst.msk [vmem:[#allocation7] sm:$0xff] %vm414, %v544
    %568 = vst.msk [vmem:[#allocation7 + $0x8] sm:$0xff] %vm414, %v546
    %569 = vst.msk [vmem:[#allocation7 + $0x10] sm:$0xff] %vm414, %v548
    %570 = vst.msk [vmem:[#allocation7 + $0x18] sm:$0xff] %vm414, %v550
    %571 = vst.msk [vmem:[#allocation7 + $0x20] sm:$0xff] %vm414, %v552
    %572 = vst.msk [vmem:[#allocation7 + $0x28] sm:$0xff] %vm414, %v554
    %573 = vst.msk [vmem:[#allocation7 + $0x30] sm:$0xff] %vm414, %v556
    %574 = vst.msk [vmem:[#allocation7 + $0x38] sm:$0xff] %vm414, %v558
    %v575 = vld [vmem:[%s5] sm:$0xff]
    %v576 = vld [vmem:[%s5 + $0x8] sm:$0xff]
    %v577 = vld [vmem:[#allocation18] sm:$0xff]
    %v578 = vld [vmem:[#allocation18 + $0x8] sm:$0xff]
    %v579 = vld [vmem:[#allocation19] sm:$0xff]
    %v580 = vld [vmem:[#allocation19 + $0x8] sm:$0xff]
    %v581 = vld [vmem:[#allocation21] sm:$0x1]
    %v582 = vld [vmem:[#allocation22] sm:$0x1]
    %v583 = vld [vmem:[#allocation24] sm:$0x1]
    %v584 = vld [vmem:[#allocation25] sm:$0xff]
    %v585 = vld [vmem:[#allocation25 + $0x8] sm:$0xff]
    %v586 = vld [vmem:[#allocation27] sm:$0xff]
    %v587 = vld [vmem:[#allocation27 + $0x8] sm:$0xff]
    %v588 = vld [vmem:[#allocation28] sm:$0xff]
    %v589 = vld [vmem:[#allocation28 + $0x8] sm:$0xff]
    %v590 = vld [vmem:[#allocation30] sm:$0x1]
    %v591 = vld [vmem:[#allocation31] sm:$0x1]
    %v592 = vld [vmem:[#allocation33] sm:$0x1]
    %v593 = vld [vmem:[#allocation2] sm:$0xff]
    %v594 = vld [vmem:[#allocation3] sm:$0xff]
    %v595 = vld [vmem:[#allocation4] sm:$0xff]
    %v597 = vsel %vm414, 0.0, 0
    %599 = vmatpush.msra.mxu0 0.0
    %600 = vmatpush.msra.mxu0 0.0
    %601 = vmatpush.msra.mxu0 0.0
    %602 = vmatpush.msra.mxu0 0.0
    %603 = vmatpush.msra.mxu0 0.0
    %604 = vmatpush.msra.mxu0 0.0
    %605 = vmatpush.msra.mxu0 0.0
    %606 = vmatpush.msra.mxu0 0.0
    %607 = vmatpush.msra.mxu0 0.0
    %608 = vmatpush.msra.mxu0 0.0
    %609 = vmatpush.msra.mxu0 0.0
    %610 = vmatpush.msra.mxu0 0.0
    %611 = vmatpush.msra.mxu0 0.0
    %612 = vmatpush.msra.mxu0 0.0
    %613 = vmatpush.msra.mxu0 %v576
    %614 = vmatpush.msra.mxu0 %v575
    %615 = vmatmul.f32.gmra.mxu0 %v597
    %v616 = vpop.f32.mrf.mxu0
    %v617 = vadd.f32 0.0, %v616
    %618 = vdwg.mxu0
    %v619 = vadd.f32 %v593, %v617
    %v621 = vperm.slane %v581, 0
    %v623 = vadd.f32 %v619, %v621
    %v624 = vxor.u32 %v623, 2147483648
    %v625 = vmul.f32 %v624, 1.442695
    %v626 = vpow.pop %v625
    %v627 = vadd.f32 %v626, 1.0
    %v628 = vrcp.pop %v627
    %v629 = vmul.f32 %v627, %v628
    %v630 = vsub.f32 1.0, %v629
    %v631 = vmul.f32 %v628, %v630
    %v632 = vadd.f32 %v628, %v631
    %vm633 = vweird.f32 %v627
    %vm634 = vweird.f32 %v628
    %vm635 = vmor %vm633, %vm634
    %v636 = vsel %vm635, %v628, %v632
    %v637 = vand.u32 2147483647, %v627
    %vm638 = vcmp.eq.f32.partialorder %v637, 8.507059e+37
    %v639 = vand.u32 %v627, 2147483648
    %v640 = vor.u32 1.1754944e-38, %v639
    %v641 = vsel %vm638, %v640, %v636
    %v642 = vmul.f32 1.0, %v641
    %643 = vmatpush.msra.mxu0 0.0
    %644 = vmatpush.msra.mxu0 0.0
    %645 = vmatpush.msra.mxu0 0.0
    %646 = vmatpush.msra.mxu0 0.0
    %647 = vmatpush.msra.mxu0 0.0
    %648 = vmatpush.msra.mxu0 0.0
    %649 = vmatpush.msra.mxu0 0.0
    %650 = vmatpush.msra.mxu0 0.0
    %651 = vmatpush.msra.mxu0 0.0
    %652 = vmatpush.msra.mxu0 0.0
    %653 = vmatpush.msra.mxu0 0.0
    %654 = vmatpush.msra.mxu0 0.0
    %655 = vmatpush.msra.mxu0 0.0
    %656 = vmatpush.msra.mxu0 0.0
    %657 = vmatpush.msra.mxu0 %v578
    %658 = vmatpush.msra.mxu0 %v577
    %659 = vmatmul.f32.gmra.mxu0 %v597
    %v660 = vpop.f32.mrf.mxu0
    %v661 = vadd.f32 0.0, %v660
    %662 = vdwg.mxu0
    %v663 = vadd.f32 %v594, %v661
    %v665 = vperm.slane %v582, 0
    %v667 = vadd.f32 %v663, %v665
    %v668 = vxor.u32 %v667, 2147483648
    %v669 = vmul.f32 %v668, 1.442695
    %v670 = vpow.pop %v669
    %v671 = vadd.f32 %v670, 1.0
    %v672 = vrcp.pop %v671
    %v673 = vmul.f32 %v671, %v672
    %v674 = vsub.f32 1.0, %v673
    %v675 = vmul.f32 %v672, %v674
    %v676 = vadd.f32 %v672, %v675
    %vm677 = vweird.f32 %v671
    %vm678 = vweird.f32 %v672
    %vm679 = vmor %vm677, %vm678
    %v680 = vsel %vm679, %v672, %v676
    %v681 = vand.u32 2147483647, %v671
    %vm682 = vcmp.eq.f32.partialorder %v681, 8.507059e+37
    %v683 = vand.u32 %v671, 2147483648
    %v684 = vor.u32 1.1754944e-38, %v683
    %v685 = vsel %vm682, %v684, %v680
    %v686 = vmul.f32 1.0, %v685
    %v688 = vperm.slane %v583, 0
    %690 = vmatpush.msra.mxu0 0.0
    %691 = vmatpush.msra.mxu0 0.0
    %692 = vmatpush.msra.mxu0 0.0
    %693 = vmatpush.msra.mxu0 0.0
    %694 = vmatpush.msra.mxu0 0.0
    %695 = vmatpush.msra.mxu0 0.0
    %696 = vmatpush.msra.mxu0 0.0
    %697 = vmatpush.msra.mxu0 0.0
    %698 = vmatpush.msra.mxu0 0.0
    %699 = vmatpush.msra.mxu0 0.0
    %700 = vmatpush.msra.mxu0 0.0
    %701 = vmatpush.msra.mxu0 0.0
    %702 = vmatpush.msra.mxu0 0.0
    %703 = vmatpush.msra.mxu0 0.0
    %704 = vmatpush.msra.mxu0 %v580
    %705 = vmatpush.msra.mxu0 %v579
    %706 = vmatmul.f32.gmra.mxu0 %v597
    %v707 = vpop.f32.mrf.mxu0
    %v708 = vadd.f32 %v688, %v707
    %709 = vdwg.mxu0
    %v710 = vmul.f32 %v642, %v708
    %v711 = vadd.f32 %v595, %v710
    %v712 = vtanh.pop %v711
    %v713 = vsub.f32 1.0, %v686
    %v714 = vmul.f32 %v713, %v712
    %v715 = vmul.f32 %v686, 0.0
    %v716 = vadd.f32 %v714, %v715
    %s717 = scalar_lea.vmem [#allocation5], 56
    %v718 = vld [vmem:[%s717] sm:$0xff]
    %s719 = scalar_lea.vmem [#allocation6], 56
    %v720 = vld [vmem:[%s719] sm:$0xff]
    %s721 = scalar_lea.vmem [#allocation7], 56
    %v722 = vld [vmem:[%s721] sm:$0xff]
    %723 = vmatpush.msra.mxu0 0.0
    %724 = vmatpush.msra.mxu0 0.0
    %725 = vmatpush.msra.mxu0 0.0
    %726 = vmatpush.msra.mxu0 0.0
    %727 = vmatpush.msra.mxu0 0.0
    %728 = vmatpush.msra.mxu0 0.0
    %729 = vmatpush.msra.mxu0 0.0
    %730 = vmatpush.msra.mxu0 0.0
    %731 = vmatpush.msra.mxu0 0.0
    %732 = vmatpush.msra.mxu0 0.0
    %733 = vmatpush.msra.mxu0 0.0
    %734 = vmatpush.msra.mxu0 0.0
    %735 = vmatpush.msra.mxu0 0.0
    %736 = vmatpush.msra.mxu0 0.0
    %737 = vmatpush.msra.mxu0 %v585
    %738 = vmatpush.msra.mxu0 %v584
    %739 = vmatmul.f32.gmra.mxu0 %v597
    %v740 = vpop.f32.mrf.mxu0
    %v741 = vadd.f32 0.0, %v740
    %742 = vdwg.mxu0
    %v743 = vadd.f32 %v718, %v741
    %v745 = vperm.slane %v590, 0
    %v747 = vadd.f32 %v743, %v745
    %v748 = vxor.u32 %v747, 2147483648
    %v749 = vmul.f32 %v748, 1.442695
    %v750 = vpow.pop %v749
    %v751 = vadd.f32 %v750, 1.0
    %v752 = vrcp.pop %v751
    %v753 = vmul.f32 %v751, %v752
    %v754 = vsub.f32 1.0, %v753
    %v755 = vmul.f32 %v752, %v754
    %v756 = vadd.f32 %v752, %v755
    %vm757 = vweird.f32 %v751
    %vm758 = vweird.f32 %v752
    %vm759 = vmor %vm757, %vm758
    %v760 = vsel %vm759, %v752, %v756
    %v761 = vand.u32 2147483647, %v751
    %vm762 = vcmp.eq.f32.partialorder %v761, 8.507059e+37
    %v763 = vand.u32 %v751, 2147483648
    %v764 = vor.u32 1.1754944e-38, %v763
    %v765 = vsel %vm762, %v764, %v760
    %v766 = vmul.f32 1.0, %v765
    %767 = vmatpush.msra.mxu0 0.0
    %768 = vmatpush.msra.mxu0 0.0
    %769 = vmatpush.msra.mxu0 0.0
    %770 = vmatpush.msra.mxu0 0.0
    %771 = vmatpush.msra.mxu0 0.0
    %772 = vmatpush.msra.mxu0 0.0
    %773 = vmatpush.msra.mxu0 0.0
    %774 = vmatpush.msra.mxu0 0.0
    %775 = vmatpush.msra.mxu0 0.0
    %776 = vmatpush.msra.mxu0 0.0
    %777 = vmatpush.msra.mxu0 0.0
    %778 = vmatpush.msra.mxu0 0.0
    %779 = vmatpush.msra.mxu0 0.0
    %780 = vmatpush.msra.mxu0 0.0
    %781 = vmatpush.msra.mxu0 %v587
    %782 = vmatpush.msra.mxu0 %v586
    %783 = vmatmul.f32.gmra.mxu0 %v597
    %v784 = vpop.f32.mrf.mxu0
    %v785 = vadd.f32 0.0, %v784
    %786 = vdwg.mxu0
    %v787 = vadd.f32 %v720, %v785
    %v789 = vperm.slane %v591, 0
    %v791 = vadd.f32 %v787, %v789
    %v792 = vxor.u32 %v791, 2147483648
    %v793 = vmul.f32 %v792, 1.442695
    %v794 = vpow.pop %v793
    %v795 = vadd.f32 %v794, 1.0
    %v796 = vrcp.pop %v795
    %v797 = vmul.f32 %v795, %v796
    %v798 = vsub.f32 1.0, %v797
    %v799 = vmul.f32 %v796, %v798
    %v800 = vadd.f32 %v796, %v799
    %vm801 = vweird.f32 %v795
    %vm802 = vweird.f32 %v796
    %vm803 = vmor %vm801, %vm802
    %v804 = vsel %vm803, %v796, %v800
    %v805 = vand.u32 2147483647, %v795
    %vm806 = vcmp.eq.f32.partialorder %v805, 8.507059e+37
    %v807 = vand.u32 %v795, 2147483648
    %v808 = vor.u32 1.1754944e-38, %v807
    %v809 = vsel %vm806, %v808, %v804
    %v810 = vmul.f32 1.0, %v809
    %v812 = vperm.slane %v592, 0
    %814 = vmatpush.msra.mxu0 0.0
    %815 = vmatpush.msra.mxu0 0.0
    %816 = vmatpush.msra.mxu0 0.0
    %817 = vmatpush.msra.mxu0 0.0
    %818 = vmatpush.msra.mxu0 0.0
    %819 = vmatpush.msra.mxu0 0.0
    %820 = vmatpush.msra.mxu0 0.0
    %821 = vmatpush.msra.mxu0 0.0
    %822 = vmatpush.msra.mxu0 0.0
    %823 = vmatpush.msra.mxu0 0.0
    %824 = vmatpush.msra.mxu0 0.0
    %825 = vmatpush.msra.mxu0 0.0
    %826 = vmatpush.msra.mxu0 0.0
    %827 = vmatpush.msra.mxu0 0.0
    %828 = vmatpush.msra.mxu0 %v589
    %829 = vmatpush.msra.mxu0 %v588
    %830 = vmatmul.f32.gmra.mxu0 %v597
    %v831 = vpop.f32.mrf.mxu0
    %v832 = vadd.f32 %v812, %v831
    %833 = vdwg.mxu0
    %v834 = vmul.f32 %v766, %v832
    %v835 = vadd.f32 %v722, %v834
    %v836 = vtanh.pop %v835
    %v837 = vsub.f32 1.0, %v810
    %v838 = vmul.f32 %v837, %v836
    %v839 = vmul.f32 %v810, 0.0
    %v840 = vadd.f32 %v838, %v839
    %841 = vst.msk [vmem:[#allocation8] sm:$0xff] %vm414, %v716
    %s842 = scalar_lea.vmem [#allocation9], 56
    %843 = vst.msk [vmem:[%s842] sm:$0xff] %vm414, %v840
    %s844 = scalar_lea.vmem [#allocation2], 8
    %v845 = vld [vmem:[%s844] sm:$0xff]
    %s846 = scalar_lea.vmem [#allocation3], 8
    %v847 = vld [vmem:[%s846] sm:$0xff]
    %s848 = scalar_lea.vmem [#allocation4], 8
    %v849 = vld [vmem:[%s848] sm:$0xff]
    %v851 = vsel %vm414, %v716, 0
    %853 = vmatpush.msra.mxu0 0.0
    %854 = vmatpush.msra.mxu0 0.0
    %855 = vmatpush.msra.mxu0 0.0
    %856 = vmatpush.msra.mxu0 0.0
    %857 = vmatpush.msra.mxu0 0.0
    %858 = vmatpush.msra.mxu0 0.0
    %859 = vmatpush.msra.mxu0 0.0
    %860 = vmatpush.msra.mxu0 0.0
    %861 = vmatpush.msra.mxu0 0.0
    %862 = vmatpush.msra.mxu0 0.0
    %863 = vmatpush.msra.mxu0 0.0
    %864 = vmatpush.msra.mxu0 0.0
    %865 = vmatpush.msra.mxu0 0.0
    %866 = vmatpush.msra.mxu0 0.0
    %867 = vmatpush.msra.mxu0 %v576
    %868 = vmatpush.msra.mxu0 %v575
    %869 = vmatmul.f32.gmra.mxu0 %v851
    %v870 = vpop.f32.mrf.mxu0
    %v871 = vadd.f32 0.0, %v870
    %872 = vdwg.mxu0
    %v873 = vadd.f32 %v845, %v871
    %v874 = vadd.f32 %v873, %v621
    %v875 = vxor.u32 %v874, 2147483648
    %v876 = vmul.f32 %v875, 1.442695
    %v877 = vpow.pop %v876
    %v878 = vadd.f32 %v877, 1.0
    %v879 = vrcp.pop %v878
    %v880 = vmul.f32 %v878, %v879
    %v881 = vsub.f32 1.0, %v880
    %v882 = vmul.f32 %v879, %v881
    %v883 = vadd.f32 %v879, %v882
    %vm884 = vweird.f32 %v878
    %vm885 = vweird.f32 %v879
    %vm886 = vmor %vm884, %vm885
    %v887 = vsel %vm886, %v879, %v883
    %v888 = vand.u32 2147483647, %v878
    %vm889 = vcmp.eq.f32.partialorder %v888, 8.507059e+37
    %v890 = vand.u32 %v878, 2147483648
    %v891 = vor.u32 1.1754944e-38, %v890
    %v892 = vsel %vm889, %v891, %v887
    %v893 = vmul.f32 1.0, %v892
    %894 = vmatpush.msra.mxu0 0.0
    %895 = vmatpush.msra.mxu0 0.0
    %896 = vmatpush.msra.mxu0 0.0
    %897 = vmatpush.msra.mxu0 0.0
    %898 = vmatpush.msra.mxu0 0.0
    %899 = vmatpush.msra.mxu0 0.0
    %900 = vmatpush.msra.mxu0 0.0
    %901 = vmatpush.msra.mxu0 0.0
    %902 = vmatpush.msra.mxu0 0.0
    %903 = vmatpush.msra.mxu0 0.0
    %904 = vmatpush.msra.mxu0 0.0
    %905 = vmatpush.msra.mxu0 0.0
    %906 = vmatpush.msra.mxu0 0.0
    %907 = vmatpush.msra.mxu0 0.0
    %908 = vmatpush.msra.mxu0 %v578
    %909 = vmatpush.msra.mxu0 %v577
    %910 = vmatmul.f32.gmra.mxu0 %v851
    %v911 = vpop.f32.mrf.mxu0
    %v912 = vadd.f32 0.0, %v911
    %913 = vdwg.mxu0
    %v914 = vadd.f32 %v847, %v912
    %v915 = vadd.f32 %v914, %v665
    %v916 = vxor.u32 %v915, 2147483648
    %v917 = vmul.f32 %v916, 1.442695
    %v918 = vpow.pop %v917
    %v919 = vadd.f32 %v918, 1.0
    %v920 = vrcp.pop %v919
    %v921 = vmul.f32 %v919, %v920
    %v922 = vsub.f32 1.0, %v921
    %v923 = vmul.f32 %v920, %v922
    %v924 = vadd.f32 %v920, %v923
    %vm925 = vweird.f32 %v919
    %vm926 = vweird.f32 %v920
    %vm927 = vmor %vm925, %vm926
    %v928 = vsel %vm927, %v920, %v924
    %v929 = vand.u32 2147483647, %v919
    %vm930 = vcmp.eq.f32.partialorder %v929, 8.507059e+37
    %v931 = vand.u32 %v919, 2147483648
    %v932 = vor.u32 1.1754944e-38, %v931
    %v933 = vsel %vm930, %v932, %v928
    %v934 = vmul.f32 1.0, %v933
    %935 = vmatpush.msra.mxu0 0.0
    %936 = vmatpush.msra.mxu0 0.0
    %937 = vmatpush.msra.mxu0 0.0
    %938 = vmatpush.msra.mxu0 0.0
    %939 = vmatpush.msra.mxu0 0.0
    %940 = vmatpush.msra.mxu0 0.0
    %941 = vmatpush.msra.mxu0 0.0
    %942 = vmatpush.msra.mxu0 0.0
    %943 = vmatpush.msra.mxu0 0.0
    %944 = vmatpush.msra.mxu0 0.0
    %945 = vmatpush.msra.mxu0 0.0
    %946 = vmatpush.msra.mxu0 0.0
    %947 = vmatpush.msra.mxu0 0.0
    %948 = vmatpush.msra.mxu0 0.0
    %949 = vmatpush.msra.mxu0 %v580
    %950 = vmatpush.msra.mxu0 %v579
    %951 = vmatmul.f32.gmra.mxu0 %v851
    %v952 = vpop.f32.mrf.mxu0
    %v953 = vadd.f32 %v688, %v952
    %954 = vdwg.mxu0
    %v955 = vmul.f32 %v893, %v953
    %v956 = vadd.f32 %v849, %v955
    %v957 = vtanh.pop %v956
    %v958 = vsub.f32 1.0, %v934
    %v959 = vmul.f32 %v958, %v957
    %v960 = vmul.f32 %v934, %v716
    %v961 = vadd.f32 %v959, %v960
    %s962 = scalar_lea.vmem [#allocation5], 48
    %v963 = vld [vmem:[%s962] sm:$0xff]
    %s964 = scalar_lea.vmem [#allocation6], 48
    %v965 = vld [vmem:[%s964] sm:$0xff]
    %s966 = scalar_lea.vmem [#allocation7], 48
    %v967 = vld [vmem:[%s966] sm:$0xff]
    %v969 = vsel %vm414, %v840, 0
    %971 = vmatpush.msra.mxu0 0.0
    %972 = vmatpush.msra.mxu0 0.0
    %973 = vmatpush.msra.mxu0 0.0
    %974 = vmatpush.msra.mxu0 0.0
    %975 = vmatpush.msra.mxu0 0.0
    %976 = vmatpush.msra.mxu0 0.0
    %977 = vmatpush.msra.mxu0 0.0
    %978 = vmatpush.msra.mxu0 0.0
    %979 = vmatpush.msra.mxu0 0.0
    %980 = vmatpush.msra.mxu0 0.0
    %981 = vmatpush.msra.mxu0 0.0
    %982 = vmatpush.msra.mxu0 0.0
    %983 = vmatpush.msra.mxu0 0.0
    %984 = vmatpush.msra.mxu0 0.0
    %985 = vmatpush.msra.mxu0 %v585
    %986 = vmatpush.msra.mxu0 %v584
    %987 = vmatmul.f32.gmra.mxu0 %v969
    %v988 = vpop.f32.mrf.mxu0
    %v989 = vadd.f32 0.0, %v988
    %990 = vdwg.mxu0
    %v991 = vadd.f32 %v963, %v989
    %v992 = vadd.f32 %v991, %v745
    %v993 = vxor.u32 %v992, 2147483648
    %v994 = vmul.f32 %v993, 1.442695
    %v995 = vpow.pop %v994
    %v996 = vadd.f32 %v995, 1.0
    %v997 = vrcp.pop %v996
    %v998 = vmul.f32 %v996, %v997
    %v999 = vsub.f32 1.0, %v998
    %v1000 = vmul.f32 %v997, %v999
    %v1001 = vadd.f32 %v997, %v1000
    %vm1002 = vweird.f32 %v996
    %vm1003 = vweird.f32 %v997
    %vm1004 = vmor %vm1002, %vm1003
    %v1005 = vsel %vm1004, %v997, %v1001
    %v1006 = vand.u32 2147483647, %v996
    %vm1007 = vcmp.eq.f32.partialorder %v1006, 8.507059e+37
    %v1008 = vand.u32 %v996, 2147483648
    %v1009 = vor.u32 1.1754944e-38, %v1008
    %v1010 = vsel %vm1007, %v1009, %v1005
    %v1011 = vmul.f32 1.0, %v1010
    %1012 = vmatpush.msra.mxu0 0.0
    %1013 = vmatpush.msra.mxu0 0.0
    %1014 = vmatpush.msra.mxu0 0.0
    %1015 = vmatpush.msra.mxu0 0.0
    %1016 = vmatpush.msra.mxu0 0.0
    %1017 = vmatpush.msra.mxu0 0.0
    %1018 = vmatpush.msra.mxu0 0.0
    %1019 = vmatpush.msra.mxu0 0.0
    %1020 = vmatpush.msra.mxu0 0.0
    %1021 = vmatpush.msra.mxu0 0.0
    %1022 = vmatpush.msra.mxu0 0.0
    %1023 = vmatpush.msra.mxu0 0.0
    %1024 = vmatpush.msra.mxu0 0.0
    %1025 = vmatpush.msra.mxu0 0.0
    %1026 = vmatpush.msra.mxu0 %v587
    %1027 = vmatpush.msra.mxu0 %v586
    %1028 = vmatmul.f32.gmra.mxu0 %v969
    %v1029 = vpop.f32.mrf.mxu0
    %v1030 = vadd.f32 0.0, %v1029
    %1031 = vdwg.mxu0
    %v1032 = vadd.f32 %v965, %v1030
    %v1033 = vadd.f32 %v1032, %v789
    %v1034 = vxor.u32 %v1033, 2147483648
    %v1035 = vmul.f32 %v1034, 1.442695
    %v1036 = vpow.pop %v1035
    %v1037 = vadd.f32 %v1036, 1.0
    %v1038 = vrcp.pop %v1037
    %v1039 = vmul.f32 %v1037, %v1038
    %v1040 = vsub.f32 1.0, %v1039
    %v1041 = vmul.f32 %v1038, %v1040
    %v1042 = vadd.f32 %v1038, %v1041
    %vm1043 = vweird.f32 %v1037
    %vm1044 = vweird.f32 %v1038
    %vm1045 = vmor %vm1043, %vm1044
    %v1046 = vsel %vm1045, %v1038, %v1042
    %v1047 = vand.u32 2147483647, %v1037
    %vm1048 = vcmp.eq.f32.partialorder %v1047, 8.507059e+37
    %v1049 = vand.u32 %v1037, 2147483648
    %v1050 = vor.u32 1.1754944e-38, %v1049
    %v1051 = vsel %vm1048, %v1050, %v1046
    %v1052 = vmul.f32 1.0, %v1051
    %1053 = vmatpush.msra.mxu0 0.0
    %1054 = vmatpush.msra.mxu0 0.0
    %1055 = vmatpush.msra.mxu0 0.0
    %1056 = vmatpush.msra.mxu0 0.0
    %1057 = vmatpush.msra.mxu0 0.0
    %1058 = vmatpush.msra.mxu0 0.0
    %1059 = vmatpush.msra.mxu0 0.0
    %1060 = vmatpush.msra.mxu0 0.0
    %1061 = vmatpush.msra.mxu0 0.0
    %1062 = vmatpush.msra.mxu0 0.0
    %1063 = vmatpush.msra.mxu0 0.0
    %1064 = vmatpush.msra.mxu0 0.0
    %1065 = vmatpush.msra.mxu0 0.0
    %1066 = vmatpush.msra.mxu0 0.0
    %1067 = vmatpush.msra.mxu0 %v589
    %1068 = vmatpush.msra.mxu0 %v588
    %1069 = vmatmul.f32.gmra.mxu0 %v969
    %v1070 = vpop.f32.mrf.mxu0
    %v1071 = vadd.f32 %v812, %v1070
    %1072 = vdwg.mxu0
    %v1073 = vmul.f32 %v1011, %v1071
    %v1074 = vadd.f32 %v967, %v1073
    %v1075 = vtanh.pop %v1074
    %v1076 = vsub.f32 1.0, %v1052
    %v1077 = vmul.f32 %v1076, %v1075
    %v1078 = vmul.f32 %v1052, %v840
    %v1079 = vadd.f32 %v1077, %v1078
    %s1080 = scalar_lea.vmem [#allocation8], 8
    %1081 = vst.msk [vmem:[%s1080] sm:$0xff] %vm414, %v961
    %s1082 = scalar_lea.vmem [#allocation9], 48
    %1083 = vst.msk [vmem:[%s1082] sm:$0xff] %vm414, %v1079
    %s1084 = scalar_lea.vmem [#allocation2], 16
    %v1085 = vld [vmem:[%s1084] sm:$0xff]
    %s1086 = scalar_lea.vmem [#allocation3], 16
    %v1087 = vld [vmem:[%s1086] sm:$0xff]
    %s1088 = scalar_lea.vmem [#allocation4], 16
    %v1089 = vld [vmem:[%s1088] sm:$0xff]
    %v1091 = vsel %vm414, %v961, 0
    %1093 = vmatpush.msra.mxu0 0.0
    %1094 = vmatpush.msra.mxu0 0.0
    %1095 = vmatpush.msra.mxu0 0.0
    %1096 = vmatpush.msra.mxu0 0.0
    %1097 = vmatpush.msra.mxu0 0.0
    %1098 = vmatpush.msra.mxu0 0.0
    %1099 = vmatpush.msra.mxu0 0.0
    %1100 = vmatpush.msra.mxu0 0.0
    %1101 = vmatpush.msra.mxu0 0.0
    %1102 = vmatpush.msra.mxu0 0.0
    %1103 = vmatpush.msra.mxu0 0.0
    %1104 = vmatpush.msra.mxu0 0.0
    %1105 = vmatpush.msra.mxu0 0.0
    %1106 = vmatpush.msra.mxu0 0.0
    %1107 = vmatpush.msra.mxu0 %v576
    %1108 = vmatpush.msra.mxu0 %v575
    %1109 = vmatmul.f32.gmra.mxu0 %v1091
    %v1110 = vpop.f32.mrf.mxu0
    %v1111 = vadd.f32 0.0, %v1110
    %1112 = vdwg.mxu0
    %v1113 = vadd.f32 %v1085, %v1111
    %v1114 = vadd.f32 %v1113, %v621
    %v1115 = vxor.u32 %v1114, 2147483648
    %v1116 = vmul.f32 %v1115, 1.442695
    %v1117 = vpow.pop %v1116
    %v1118 = vadd.f32 %v1117, 1.0
    %v1119 = vrcp.pop %v1118
    %v1120 = vmul.f32 %v1118, %v1119
    %v1121 = vsub.f32 1.0, %v1120
    %v1122 = vmul.f32 %v1119, %v1121
    %v1123 = vadd.f32 %v1119, %v1122
    %vm1124 = vweird.f32 %v1118
    %vm1125 = vweird.f32 %v1119
    %vm1126 = vmor %vm1124, %vm1125
    %v1127 = vsel %vm1126, %v1119, %v1123
    %v1128 = vand.u32 2147483647, %v1118
    %vm1129 = vcmp.eq.f32.partialorder %v1128, 8.507059e+37
    %v1130 = vand.u32 %v1118, 2147483648
    %v1131 = vor.u32 1.1754944e-38, %v1130
    %v1132 = vsel %vm1129, %v1131, %v1127
    %v1133 = vmul.f32 1.0, %v1132
    %1134 = vmatpush.msra.mxu0 0.0
    %1135 = vmatpush.msra.mxu0 0.0
    %1136 = vmatpush.msra.mxu0 0.0
    %1137 = vmatpush.msra.mxu0 0.0
    %1138 = vmatpush.msra.mxu0 0.0
    %1139 = vmatpush.msra.mxu0 0.0
    %1140 = vmatpush.msra.mxu0 0.0
    %1141 = vmatpush.msra.mxu0 0.0
    %1142 = vmatpush.msra.mxu0 0.0
    %1143 = vmatpush.msra.mxu0 0.0
    %1144 = vmatpush.msra.mxu0 0.0
    %1145 = vmatpush.msra.mxu0 0.0
    %1146 = vmatpush.msra.mxu0 0.0
    %1147 = vmatpush.msra.mxu0 0.0
    %1148 = vmatpush.msra.mxu0 %v578
    %1149 = vmatpush.msra.mxu0 %v577
    %1150 = vmatmul.f32.gmra.mxu0 %v1091
    %v1151 = vpop.f32.mrf.mxu0
    %v1152 = vadd.f32 0.0, %v1151
    %1153 = vdwg.mxu0
    %v1154 = vadd.f32 %v1087, %v1152
    %v1155 = vadd.f32 %v1154, %v665
    %v1156 = vxor.u32 %v1155, 2147483648
    %v1157 = vmul.f32 %v1156, 1.442695
    %v1158 = vpow.pop %v1157
    %v1159 = vadd.f32 %v1158, 1.0
    %v1160 = vrcp.pop %v1159
    %v1161 = vmul.f32 %v1159, %v1160
    %v1162 = vsub.f32 1.0, %v1161
    %v1163 = vmul.f32 %v1160, %v1162
    %v1164 = vadd.f32 %v1160, %v1163
    %vm1165 = vweird.f32 %v1159
    %vm1166 = vweird.f32 %v1160
    %vm1167 = vmor %vm1165, %vm1166
    %v1168 = vsel %vm1167, %v1160, %v1164
    %v1169 = vand.u32 2147483647, %v1159
    %vm1170 = vcmp.eq.f32.partialorder %v1169, 8.507059e+37
    %v1171 = vand.u32 %v1159, 2147483648
    %v1172 = vor.u32 1.1754944e-38, %v1171
    %v1173 = vsel %vm1170, %v1172, %v1168
    %v1174 = vmul.f32 1.0, %v1173
    %1175 = vmatpush.msra.mxu0 0.0
    %1176 = vmatpush.msra.mxu0 0.0
    %1177 = vmatpush.msra.mxu0 0.0
    %1178 = vmatpush.msra.mxu0 0.0
    %1179 = vmatpush.msra.mxu0 0.0
    %1180 = vmatpush.msra.mxu0 0.0
    %1181 = vmatpush.msra.mxu0 0.0
    %1182 = vmatpush.msra.mxu0 0.0
    %1183 = vmatpush.msra.mxu0 0.0
    %1184 = vmatpush.msra.mxu0 0.0
    %1185 = vmatpush.msra.mxu0 0.0
    %1186 = vmatpush.msra.mxu0 0.0
    %1187 = vmatpush.msra.mxu0 0.0
    %1188 = vmatpush.msra.mxu0 0.0
    %1189 = vmatpush.msra.mxu0 %v580
    %1190 = vmatpush.msra.mxu0 %v579
    %1191 = vmatmul.f32.gmra.mxu0 %v1091
    %v1192 = vpop.f32.mrf.mxu0
    %v1193 = vadd.f32 %v688, %v1192
    %1194 = vdwg.mxu0
    %v1195 = vmul.f32 %v1133, %v1193
    %v1196 = vadd.f32 %v1089, %v1195
    %v1197 = vtanh.pop %v1196
    %v1198 = vsub.f32 1.0, %v1174
    %v1199 = vmul.f32 %v1198, %v1197
    %v1200 = vmul.f32 %v1174, %v961
    %v1201 = vadd.f32 %v1199, %v1200
    %s1202 = scalar_lea.vmem [#allocation5], 40
    %v1203 = vld [vmem:[%s1202] sm:$0xff]
    %s1204 = scalar_lea.vmem [#allocation6], 40
    %v1205 = vld [vmem:[%s1204] sm:$0xff]
    %s1206 = scalar_lea.vmem [#allocation7], 40
    %v1207 = vld [vmem:[%s1206] sm:$0xff]
    %v1209 = vsel %vm414, %v1079, 0
    %1211 = vmatpush.msra.mxu0 0.0
    %1212 = vmatpush.msra.mxu0 0.0
    %1213 = vmatpush.msra.mxu0 0.0
    %1214 = vmatpush.msra.mxu0 0.0
    %1215 = vmatpush.msra.mxu0 0.0
    %1216 = vmatpush.msra.mxu0 0.0
    %1217 = vmatpush.msra.mxu0 0.0
    %1218 = vmatpush.msra.mxu0 0.0
    %1219 = vmatpush.msra.mxu0 0.0
    %1220 = vmatpush.msra.mxu0 0.0
    %1221 = vmatpush.msra.mxu0 0.0
    %1222 = vmatpush.msra.mxu0 0.0
    %1223 = vmatpush.msra.mxu0 0.0
    %1224 = vmatpush.msra.mxu0 0.0
    %1225 = vmatpush.msra.mxu0 %v585
    %1226 = vmatpush.msra.mxu0 %v584
    %1227 = vmatmul.f32.gmra.mxu0 %v1209
    %v1228 = vpop.f32.mrf.mxu0
    %v1229 = vadd.f32 0.0, %v1228
    %1230 = vdwg.mxu0
    %v1231 = vadd.f32 %v1203, %v1229
    %v1232 = vadd.f32 %v1231, %v745
    %v1233 = vxor.u32 %v1232, 2147483648
    %v1234 = vmul.f32 %v1233, 1.442695
    %v1235 = vpow.pop %v1234
    %v1236 = vadd.f32 %v1235, 1.0
    %v1237 = vrcp.pop %v1236
    %v1238 = vmul.f32 %v1236, %v1237
    %v1239 = vsub.f32 1.0, %v1238
    %v1240 = vmul.f32 %v1237, %v1239
    %v1241 = vadd.f32 %v1237, %v1240
    %vm1242 = vweird.f32 %v1236
    %vm1243 = vweird.f32 %v1237
    %vm1244 = vmor %vm1242, %vm1243
    %v1245 = vsel %vm1244, %v1237, %v1241
    %v1246 = vand.u32 2147483647, %v1236
    %vm1247 = vcmp.eq.f32.partialorder %v1246, 8.507059e+37
    %v1248 = vand.u32 %v1236, 2147483648
    %v1249 = vor.u32 1.1754944e-38, %v1248
    %v1250 = vsel %vm1247, %v1249, %v1245
    %v1251 = vmul.f32 1.0, %v1250
    %1252 = vmatpush.msra.mxu0 0.0
    %1253 = vmatpush.msra.mxu0 0.0
    %1254 = vmatpush.msra.mxu0 0.0
    %1255 = vmatpush.msra.mxu0 0.0
    %1256 = vmatpush.msra.mxu0 0.0
    %1257 = vmatpush.msra.mxu0 0.0
    %1258 = vmatpush.msra.mxu0 0.0
    %1259 = vmatpush.msra.mxu0 0.0
    %1260 = vmatpush.msra.mxu0 0.0
    %1261 = vmatpush.msra.mxu0 0.0
    %1262 = vmatpush.msra.mxu0 0.0
    %1263 = vmatpush.msra.mxu0 0.0
    %1264 = vmatpush.msra.mxu0 0.0
    %1265 = vmatpush.msra.mxu0 0.0
    %1266 = vmatpush.msra.mxu0 %v587
    %1267 = vmatpush.msra.mxu0 %v586
    %1268 = vmatmul.f32.gmra.mxu0 %v1209
    %v1269 = vpop.f32.mrf.mxu0
    %v1270 = vadd.f32 0.0, %v1269
    %1271 = vdwg.mxu0
    %v1272 = vadd.f32 %v1205, %v1270
    %v1273 = vadd.f32 %v1272, %v789
    %v1274 = vxor.u32 %v1273, 2147483648
    %v1275 = vmul.f32 %v1274, 1.442695
    %v1276 = vpow.pop %v1275
    %v1277 = vadd.f32 %v1276, 1.0
    %v1278 = vrcp.pop %v1277
    %v1279 = vmul.f32 %v1277, %v1278
    %v1280 = vsub.f32 1.0, %v1279
    %v1281 = vmul.f32 %v1278, %v1280
    %v1282 = vadd.f32 %v1278, %v1281
    %vm1283 = vweird.f32 %v1277
    %vm1284 = vweird.f32 %v1278
    %vm1285 = vmor %vm1283, %vm1284
    %v1286 = vsel %vm1285, %v1278, %v1282
    %v1287 = vand.u32 2147483647, %v1277
    %vm1288 = vcmp.eq.f32.partialorder %v1287, 8.507059e+37
    %v1289 = vand.u32 %v1277, 2147483648
    %v1290 = vor.u32 1.1754944e-38, %v1289
    %v1291 = vsel %vm1288, %v1290, %v1286
    %v1292 = vmul.f32 1.0, %v1291
    %1293 = vmatpush.msra.mxu0 0.0
    %1294 = vmatpush.msra.mxu0 0.0
    %1295 = vmatpush.msra.mxu0 0.0
    %1296 = vmatpush.msra.mxu0 0.0
    %1297 = vmatpush.msra.mxu0 0.0
    %1298 = vmatpush.msra.mxu0 0.0
    %1299 = vmatpush.msra.mxu0 0.0
    %1300 = vmatpush.msra.mxu0 0.0
    %1301 = vmatpush.msra.mxu0 0.0
    %1302 = vmatpush.msra.mxu0 0.0
    %1303 = vmatpush.msra.mxu0 0.0
    %1304 = vmatpush.msra.mxu0 0.0
    %1305 = vmatpush.msra.mxu0 0.0
    %1306 = vmatpush.msra.mxu0 0.0
    %1307 = vmatpush.msra.mxu0 %v589
    %1308 = vmatpush.msra.mxu0 %v588
    %1309 = vmatmul.f32.gmra.mxu0 %v1209
    %v1310 = vpop.f32.mrf.mxu0
    %v1311 = vadd.f32 %v812, %v1310
    %1312 = vdwg.mxu0
    %v1313 = vmul.f32 %v1251, %v1311
    %v1314 = vadd.f32 %v1207, %v1313
    %v1315 = vtanh.pop %v1314
    %v1316 = vsub.f32 1.0, %v1292
    %v1317 = vmul.f32 %v1316, %v1315
    %v1318 = vmul.f32 %v1292, %v1079
    %v1319 = vadd.f32 %v1317, %v1318
    %s1320 = scalar_lea.vmem [#allocation8], 16
    %1321 = vst.msk [vmem:[%s1320] sm:$0xff] %vm414, %v1201
    %s1322 = scalar_lea.vmem [#allocation9], 40
    %1323 = vst.msk [vmem:[%s1322] sm:$0xff] %vm414, %v1319
    %s1324 = scalar_lea.vmem [#allocation2], 24
    %v1325 = vld [vmem:[%s1324] sm:$0xff]
    %s1326 = scalar_lea.vmem [#allocation3], 24
    %v1327 = vld [vmem:[%s1326] sm:$0xff]
    %s1328 = scalar_lea.vmem [#allocation4], 24
    %v1329 = vld [vmem:[%s1328] sm:$0xff]
    %v1331 = vsel %vm414, %v1201, 0
    %1333 = vmatpush.msra.mxu0 0.0
    %1334 = vmatpush.msra.mxu0 0.0
    %1335 = vmatpush.msra.mxu0 0.0
    %1336 = vmatpush.msra.mxu0 0.0
    %1337 = vmatpush.msra.mxu0 0.0
    %1338 = vmatpush.msra.mxu0 0.0
    %1339 = vmatpush.msra.mxu0 0.0
    %1340 = vmatpush.msra.mxu0 0.0
    %1341 = vmatpush.msra.mxu0 0.0
    %1342 = vmatpush.msra.mxu0 0.0
    %1343 = vmatpush.msra.mxu0 0.0
    %1344 = vmatpush.msra.mxu0 0.0
    %1345 = vmatpush.msra.mxu0 0.0
    %1346 = vmatpush.msra.mxu0 0.0
    %1347 = vmatpush.msra.mxu0 %v576
    %1348 = vmatpush.msra.mxu0 %v575
    %1349 = vmatmul.f32.gmra.mxu0 %v1331
    %v1350 = vpop.f32.mrf.mxu0
    %v1351 = vadd.f32 0.0, %v1350
    %1352 = vdwg.mxu0
    %v1353 = vadd.f32 %v1325, %v1351
    %v1354 = vadd.f32 %v1353, %v621
    %v1355 = vxor.u32 %v1354, 2147483648
    %v1356 = vmul.f32 %v1355, 1.442695
    %v1357 = vpow.pop %v1356
    %v1358 = vadd.f32 %v1357, 1.0
    %v1359 = vrcp.pop %v1358
    %v1360 = vmul.f32 %v1358, %v1359
    %v1361 = vsub.f32 1.0, %v1360
    %v1362 = vmul.f32 %v1359, %v1361
    %v1363 = vadd.f32 %v1359, %v1362
    %vm1364 = vweird.f32 %v1358
    %vm1365 = vweird.f32 %v1359
    %vm1366 = vmor %vm1364, %vm1365
    %v1367 = vsel %vm1366, %v1359, %v1363
    %v1368 = vand.u32 2147483647, %v1358
    %vm1369 = vcmp.eq.f32.partialorder %v1368, 8.507059e+37
    %v1370 = vand.u32 %v1358, 2147483648
    %v1371 = vor.u32 1.1754944e-38, %v1370
    %v1372 = vsel %vm1369, %v1371, %v1367
    %v1373 = vmul.f32 1.0, %v1372
    %1374 = vmatpush.msra.mxu0 0.0
    %1375 = vmatpush.msra.mxu0 0.0
    %1376 = vmatpush.msra.mxu0 0.0
    %1377 = vmatpush.msra.mxu0 0.0
    %1378 = vmatpush.msra.mxu0 0.0
    %1379 = vmatpush.msra.mxu0 0.0
    %1380 = vmatpush.msra.mxu0 0.0
    %1381 = vmatpush.msra.mxu0 0.0
    %1382 = vmatpush.msra.mxu0 0.0
    %1383 = vmatpush.msra.mxu0 0.0
    %1384 = vmatpush.msra.mxu0 0.0
    %1385 = vmatpush.msra.mxu0 0.0
    %1386 = vmatpush.msra.mxu0 0.0
    %1387 = vmatpush.msra.mxu0 0.0
    %1388 = vmatpush.msra.mxu0 %v578
    %1389 = vmatpush.msra.mxu0 %v577
    %1390 = vmatmul.f32.gmra.mxu0 %v1331
    %v1391 = vpop.f32.mrf.mxu0
    %v1392 = vadd.f32 0.0, %v1391
    %1393 = vdwg.mxu0
    %v1394 = vadd.f32 %v1327, %v1392
    %v1395 = vadd.f32 %v1394, %v665
    %v1396 = vxor.u32 %v1395, 2147483648
    %v1397 = vmul.f32 %v1396, 1.442695
    %v1398 = vpow.pop %v1397
    %v1399 = vadd.f32 %v1398, 1.0
    %v1400 = vrcp.pop %v1399
    %v1401 = vmul.f32 %v1399, %v1400
    %v1402 = vsub.f32 1.0, %v1401
    %v1403 = vmul.f32 %v1400, %v1402
    %v1404 = vadd.f32 %v1400, %v1403
    %vm1405 = vweird.f32 %v1399
    %vm1406 = vweird.f32 %v1400
    %vm1407 = vmor %vm1405, %vm1406
    %v1408 = vsel %vm1407, %v1400, %v1404
    %v1409 = vand.u32 2147483647, %v1399
    %vm1410 = vcmp.eq.f32.partialorder %v1409, 8.507059e+37
    %v1411 = vand.u32 %v1399, 2147483648
    %v1412 = vor.u32 1.1754944e-38, %v1411
    %v1413 = vsel %vm1410, %v1412, %v1408
    %v1414 = vmul.f32 1.0, %v1413
    %1415 = vmatpush.msra.mxu0 0.0
    %1416 = vmatpush.msra.mxu0 0.0
    %1417 = vmatpush.msra.mxu0 0.0
    %1418 = vmatpush.msra.mxu0 0.0
    %1419 = vmatpush.msra.mxu0 0.0
    %1420 = vmatpush.msra.mxu0 0.0
    %1421 = vmatpush.msra.mxu0 0.0
    %1422 = vmatpush.msra.mxu0 0.0
    %1423 = vmatpush.msra.mxu0 0.0
    %1424 = vmatpush.msra.mxu0 0.0
    %1425 = vmatpush.msra.mxu0 0.0
    %1426 = vmatpush.msra.mxu0 0.0
    %1427 = vmatpush.msra.mxu0 0.0
    %1428 = vmatpush.msra.mxu0 0.0
    %1429 = vmatpush.msra.mxu0 %v580
    %1430 = vmatpush.msra.mxu0 %v579
    %1431 = vmatmul.f32.gmra.mxu0 %v1331
    %v1432 = vpop.f32.mrf.mxu0
    %v1433 = vadd.f32 %v688, %v1432
    %1434 = vdwg.mxu0
    %v1435 = vmul.f32 %v1373, %v1433
    %v1436 = vadd.f32 %v1329, %v1435
    %v1437 = vtanh.pop %v1436
    %v1438 = vsub.f32 1.0, %v1414
    %v1439 = vmul.f32 %v1438, %v1437
    %v1440 = vmul.f32 %v1414, %v1201
    %v1441 = vadd.f32 %v1439, %v1440
    %s1442 = scalar_lea.vmem [#allocation5], 32
    %v1443 = vld [vmem:[%s1442] sm:$0xff]
    %s1444 = scalar_lea.vmem [#allocation6], 32
    %v1445 = vld [vmem:[%s1444] sm:$0xff]
    %s1446 = scalar_lea.vmem [#allocation7], 32
    %v1447 = vld [vmem:[%s1446] sm:$0xff]
    %v1449 = vsel %vm414, %v1319, 0
    %1451 = vmatpush.msra.mxu0 0.0
    %1452 = vmatpush.msra.mxu0 0.0
    %1453 = vmatpush.msra.mxu0 0.0
    %1454 = vmatpush.msra.mxu0 0.0
    %1455 = vmatpush.msra.mxu0 0.0
    %1456 = vmatpush.msra.mxu0 0.0
    %1457 = vmatpush.msra.mxu0 0.0
    %1458 = vmatpush.msra.mxu0 0.0
    %1459 = vmatpush.msra.mxu0 0.0
    %1460 = vmatpush.msra.mxu0 0.0
    %1461 = vmatpush.msra.mxu0 0.0
    %1462 = vmatpush.msra.mxu0 0.0
    %1463 = vmatpush.msra.mxu0 0.0
    %1464 = vmatpush.msra.mxu0 0.0
    %1465 = vmatpush.msra.mxu0 %v585
    %1466 = vmatpush.msra.mxu0 %v584
    %1467 = vmatmul.f32.gmra.mxu0 %v1449
    %v1468 = vpop.f32.mrf.mxu0
    %v1469 = vadd.f32 0.0, %v1468
    %1470 = vdwg.mxu0
    %v1471 = vadd.f32 %v1443, %v1469
    %v1472 = vadd.f32 %v1471, %v745
    %v1473 = vxor.u32 %v1472, 2147483648
    %v1474 = vmul.f32 %v1473, 1.442695
    %v1475 = vpow.pop %v1474
    %v1476 = vadd.f32 %v1475, 1.0
    %v1477 = vrcp.pop %v1476
    %v1478 = vmul.f32 %v1476, %v1477
    %v1479 = vsub.f32 1.0, %v1478
    %v1480 = vmul.f32 %v1477, %v1479
    %v1481 = vadd.f32 %v1477, %v1480
    %vm1482 = vweird.f32 %v1476
    %vm1483 = vweird.f32 %v1477
    %vm1484 = vmor %vm1482, %vm1483
    %v1485 = vsel %vm1484, %v1477, %v1481
    %v1486 = vand.u32 2147483647, %v1476
    %vm1487 = vcmp.eq.f32.partialorder %v1486, 8.507059e+37
    %v1488 = vand.u32 %v1476, 2147483648
    %v1489 = vor.u32 1.1754944e-38, %v1488
    %v1490 = vsel %vm1487, %v1489, %v1485
    %v1491 = vmul.f32 1.0, %v1490
    %1492 = vmatpush.msra.mxu0 0.0
    %1493 = vmatpush.msra.mxu0 0.0
    %1494 = vmatpush.msra.mxu0 0.0
    %1495 = vmatpush.msra.mxu0 0.0
    %1496 = vmatpush.msra.mxu0 0.0
    %1497 = vmatpush.msra.mxu0 0.0
    %1498 = vmatpush.msra.mxu0 0.0
    %1499 = vmatpush.msra.mxu0 0.0
    %1500 = vmatpush.msra.mxu0 0.0
    %1501 = vmatpush.msra.mxu0 0.0
    %1502 = vmatpush.msra.mxu0 0.0
    %1503 = vmatpush.msra.mxu0 0.0
    %1504 = vmatpush.msra.mxu0 0.0
    %1505 = vmatpush.msra.mxu0 0.0
    %1506 = vmatpush.msra.mxu0 %v587
    %1507 = vmatpush.msra.mxu0 %v586
    %1508 = vmatmul.f32.gmra.mxu0 %v1449
    %v1509 = vpop.f32.mrf.mxu0
    %v1510 = vadd.f32 0.0, %v1509
    %1511 = vdwg.mxu0
    %v1512 = vadd.f32 %v1445, %v1510
    %v1513 = vadd.f32 %v1512, %v789
    %v1514 = vxor.u32 %v1513, 2147483648
    %v1515 = vmul.f32 %v1514, 1.442695
    %v1516 = vpow.pop %v1515
    %v1517 = vadd.f32 %v1516, 1.0
    %v1518 = vrcp.pop %v1517
    %v1519 = vmul.f32 %v1517, %v1518
    %v1520 = vsub.f32 1.0, %v1519
    %v1521 = vmul.f32 %v1518, %v1520
    %v1522 = vadd.f32 %v1518, %v1521
    %vm1523 = vweird.f32 %v1517
    %vm1524 = vweird.f32 %v1518
    %vm1525 = vmor %vm1523, %vm1524
    %v1526 = vsel %vm1525, %v1518, %v1522
    %v1527 = vand.u32 2147483647, %v1517
    %vm1528 = vcmp.eq.f32.partialorder %v1527, 8.507059e+37
    %v1529 = vand.u32 %v1517, 2147483648
    %v1530 = vor.u32 1.1754944e-38, %v1529
    %v1531 = vsel %vm1528, %v1530, %v1526
    %v1532 = vmul.f32 1.0, %v1531
    %1533 = vmatpush.msra.mxu0 0.0
    %1534 = vmatpush.msra.mxu0 0.0
    %1535 = vmatpush.msra.mxu0 0.0
    %1536 = vmatpush.msra.mxu0 0.0
    %1537 = vmatpush.msra.mxu0 0.0
    %1538 = vmatpush.msra.mxu0 0.0
    %1539 = vmatpush.msra.mxu0 0.0
    %1540 = vmatpush.msra.mxu0 0.0
    %1541 = vmatpush.msra.mxu0 0.0
    %1542 = vmatpush.msra.mxu0 0.0
    %1543 = vmatpush.msra.mxu0 0.0
    %1544 = vmatpush.msra.mxu0 0.0
    %1545 = vmatpush.msra.mxu0 0.0
    %1546 = vmatpush.msra.mxu0 0.0
    %1547 = vmatpush.msra.mxu0 %v589
    %1548 = vmatpush.msra.mxu0 %v588
    %1549 = vmatmul.f32.gmra.mxu0 %v1449
    %v1550 = vpop.f32.mrf.mxu0
    %v1551 = vadd.f32 %v812, %v1550
    %1552 = vdwg.mxu0
    %v1553 = vmul.f32 %v1491, %v1551
    %v1554 = vadd.f32 %v1447, %v1553
    %v1555 = vtanh.pop %v1554
    %v1556 = vsub.f32 1.0, %v1532
    %v1557 = vmul.f32 %v1556, %v1555
    %v1558 = vmul.f32 %v1532, %v1319
    %v1559 = vadd.f32 %v1557, %v1558
    %s1560 = scalar_lea.vmem [#allocation8], 24
    %1561 = vst.msk [vmem:[%s1560] sm:$0xff] %vm414, %v1441
    %s1562 = scalar_lea.vmem [#allocation9], 32
    %1563 = vst.msk [vmem:[%s1562] sm:$0xff] %vm414, %v1559
    %s1564 = scalar_lea.vmem [#allocation2], 32
    %v1565 = vld [vmem:[%s1564] sm:$0xff]
    %s1566 = scalar_lea.vmem [#allocation3], 32
    %v1567 = vld [vmem:[%s1566] sm:$0xff]
    %s1568 = scalar_lea.vmem [#allocation4], 32
    %v1569 = vld [vmem:[%s1568] sm:$0xff]
    %v1571 = vsel %vm414, %v1441, 0
    %1573 = vmatpush.msra.mxu0 0.0
    %1574 = vmatpush.msra.mxu0 0.0
    %1575 = vmatpush.msra.mxu0 0.0
    %1576 = vmatpush.msra.mxu0 0.0
    %1577 = vmatpush.msra.mxu0 0.0
    %1578 = vmatpush.msra.mxu0 0.0
    %1579 = vmatpush.msra.mxu0 0.0
    %1580 = vmatpush.msra.mxu0 0.0
    %1581 = vmatpush.msra.mxu0 0.0
    %1582 = vmatpush.msra.mxu0 0.0
    %1583 = vmatpush.msra.mxu0 0.0
    %1584 = vmatpush.msra.mxu0 0.0
    %1585 = vmatpush.msra.mxu0 0.0
    %1586 = vmatpush.msra.mxu0 0.0
    %1587 = vmatpush.msra.mxu0 %v576
    %1588 = vmatpush.msra.mxu0 %v575
    %1589 = vmatmul.f32.gmra.mxu0 %v1571
    %v1590 = vpop.f32.mrf.mxu0
    %v1591 = vadd.f32 0.0, %v1590
    %1592 = vdwg.mxu0
    %v1593 = vadd.f32 %v1565, %v1591
    %v1594 = vadd.f32 %v1593, %v621
    %v1595 = vxor.u32 %v1594, 2147483648
    %v1596 = vmul.f32 %v1595, 1.442695
    %v1597 = vpow.pop %v1596
    %v1598 = vadd.f32 %v1597, 1.0
    %v1599 = vrcp.pop %v1598
    %v1600 = vmul.f32 %v1598, %v1599
    %v1601 = vsub.f32 1.0, %v1600
    %v1602 = vmul.f32 %v1599, %v1601
    %v1603 = vadd.f32 %v1599, %v1602
    %vm1604 = vweird.f32 %v1598
    %vm1605 = vweird.f32 %v1599
    %vm1606 = vmor %vm1604, %vm1605
    %v1607 = vsel %vm1606, %v1599, %v1603
    %v1608 = vand.u32 2147483647, %v1598
    %vm1609 = vcmp.eq.f32.partialorder %v1608, 8.507059e+37
    %v1610 = vand.u32 %v1598, 2147483648
    %v1611 = vor.u32 1.1754944e-38, %v1610
    %v1612 = vsel %vm1609, %v1611, %v1607
    %v1613 = vmul.f32 1.0, %v1612
    %1614 = vmatpush.msra.mxu0 0.0
    %1615 = vmatpush.msra.mxu0 0.0
    %1616 = vmatpush.msra.mxu0 0.0
    %1617 = vmatpush.msra.mxu0 0.0
    %1618 = vmatpush.msra.mxu0 0.0
    %1619 = vmatpush.msra.mxu0 0.0
    %1620 = vmatpush.msra.mxu0 0.0
    %1621 = vmatpush.msra.mxu0 0.0
    %1622 = vmatpush.msra.mxu0 0.0
    %1623 = vmatpush.msra.mxu0 0.0
    %1624 = vmatpush.msra.mxu0 0.0
    %1625 = vmatpush.msra.mxu0 0.0
    %1626 = vmatpush.msra.mxu0 0.0
    %1627 = vmatpush.msra.mxu0 0.0
    %1628 = vmatpush.msra.mxu0 %v578
    %1629 = vmatpush.msra.mxu0 %v577
    %1630 = vmatmul.f32.gmra.mxu0 %v1571
    %v1631 = vpop.f32.mrf.mxu0
    %v1632 = vadd.f32 0.0, %v1631
    %1633 = vdwg.mxu0
    %v1634 = vadd.f32 %v1567, %v1632
    %v1635 = vadd.f32 %v1634, %v665
    %v1636 = vxor.u32 %v1635, 2147483648
    %v1637 = vmul.f32 %v1636, 1.442695
    %v1638 = vpow.pop %v1637
    %v1639 = vadd.f32 %v1638, 1.0
    %v1640 = vrcp.pop %v1639
    %v1641 = vmul.f32 %v1639, %v1640
    %v1642 = vsub.f32 1.0, %v1641
    %v1643 = vmul.f32 %v1640, %v1642
    %v1644 = vadd.f32 %v1640, %v1643
    %vm1645 = vweird.f32 %v1639
    %vm1646 = vweird.f32 %v1640
    %vm1647 = vmor %vm1645, %vm1646
    %v1648 = vsel %vm1647, %v1640, %v1644
    %v1649 = vand.u32 2147483647, %v1639
    %vm1650 = vcmp.eq.f32.partialorder %v1649, 8.507059e+37
    %v1651 = vand.u32 %v1639, 2147483648
    %v1652 = vor.u32 1.1754944e-38, %v1651
    %v1653 = vsel %vm1650, %v1652, %v1648
    %v1654 = vmul.f32 1.0, %v1653
    %1655 = vmatpush.msra.mxu0 0.0
    %1656 = vmatpush.msra.mxu0 0.0
    %1657 = vmatpush.msra.mxu0 0.0
    %1658 = vmatpush.msra.mxu0 0.0
    %1659 = vmatpush.msra.mxu0 0.0
    %1660 = vmatpush.msra.mxu0 0.0
    %1661 = vmatpush.msra.mxu0 0.0
    %1662 = vmatpush.msra.mxu0 0.0
    %1663 = vmatpush.msra.mxu0 0.0
    %1664 = vmatpush.msra.mxu0 0.0
    %1665 = vmatpush.msra.mxu0 0.0
    %1666 = vmatpush.msra.mxu0 0.0
    %1667 = vmatpush.msra.mxu0 0.0
    %1668 = vmatpush.msra.mxu0 0.0
    %1669 = vmatpush.msra.mxu0 %v580
    %1670 = vmatpush.msra.mxu0 %v579
    %1671 = vmatmul.f32.gmra.mxu0 %v1571
    %v1672 = vpop.f32.mrf.mxu0
    %v1673 = vadd.f32 %v688, %v1672
    %1674 = vdwg.mxu0
    %v1675 = vmul.f32 %v1613, %v1673
    %v1676 = vadd.f32 %v1569, %v1675
    %v1677 = vtanh.pop %v1676
    %v1678 = vsub.f32 1.0, %v1654
    %v1679 = vmul.f32 %v1678, %v1677
    %v1680 = vmul.f32 %v1654, %v1441
    %v1681 = vadd.f32 %v1679, %v1680
    %s1682 = scalar_lea.vmem [#allocation5], 24
    %v1683 = vld [vmem:[%s1682] sm:$0xff]
    %s1684 = scalar_lea.vmem [#allocation6], 24
    %v1685 = vld [vmem:[%s1684] sm:$0xff]
    %s1686 = scalar_lea.vmem [#allocation7], 24
    %v1687 = vld [vmem:[%s1686] sm:$0xff]
    %v1689 = vsel %vm414, %v1559, 0
    %1691 = vmatpush.msra.mxu0 0.0
    %1692 = vmatpush.msra.mxu0 0.0
    %1693 = vmatpush.msra.mxu0 0.0
    %1694 = vmatpush.msra.mxu0 0.0
    %1695 = vmatpush.msra.mxu0 0.0
    %1696 = vmatpush.msra.mxu0 0.0
    %1697 = vmatpush.msra.mxu0 0.0
    %1698 = vmatpush.msra.mxu0 0.0
    %1699 = vmatpush.msra.mxu0 0.0
    %1700 = vmatpush.msra.mxu0 0.0
    %1701 = vmatpush.msra.mxu0 0.0
    %1702 = vmatpush.msra.mxu0 0.0
    %1703 = vmatpush.msra.mxu0 0.0
    %1704 = vmatpush.msra.mxu0 0.0
    %1705 = vmatpush.msra.mxu0 %v585
    %1706 = vmatpush.msra.mxu0 %v584
    %1707 = vmatmul.f32.gmra.mxu0 %v1689
    %v1708 = vpop.f32.mrf.mxu0
    %v1709 = vadd.f32 0.0, %v1708
    %1710 = vdwg.mxu0
    %v1711 = vadd.f32 %v1683, %v1709
    %v1712 = vadd.f32 %v1711, %v745
    %v1713 = vxor.u32 %v1712, 2147483648
    %v1714 = vmul.f32 %v1713, 1.442695
    %v1715 = vpow.pop %v1714
    %v1716 = vadd.f32 %v1715, 1.0
    %v1717 = vrcp.pop %v1716
    %v1718 = vmul.f32 %v1716, %v1717
    %v1719 = vsub.f32 1.0, %v1718
    %v1720 = vmul.f32 %v1717, %v1719
    %v1721 = vadd.f32 %v1717, %v1720
    %vm1722 = vweird.f32 %v1716
    %vm1723 = vweird.f32 %v1717
    %vm1724 = vmor %vm1722, %vm1723
    %v1725 = vsel %vm1724, %v1717, %v1721
    %v1726 = vand.u32 2147483647, %v1716
    %vm1727 = vcmp.eq.f32.partialorder %v1726, 8.507059e+37
    %v1728 = vand.u32 %v1716, 2147483648
    %v1729 = vor.u32 1.1754944e-38, %v1728
    %v1730 = vsel %vm1727, %v1729, %v1725
    %v1731 = vmul.f32 1.0, %v1730
    %1732 = vmatpush.msra.mxu0 0.0
    %1733 = vmatpush.msra.mxu0 0.0
    %1734 = vmatpush.msra.mxu0 0.0
    %1735 = vmatpush.msra.mxu0 0.0
    %1736 = vmatpush.msra.mxu0 0.0
    %1737 = vmatpush.msra.mxu0 0.0
    %1738 = vmatpush.msra.mxu0 0.0
    %1739 = vmatpush.msra.mxu0 0.0
    %1740 = vmatpush.msra.mxu0 0.0
    %1741 = vmatpush.msra.mxu0 0.0
    %1742 = vmatpush.msra.mxu0 0.0
    %1743 = vmatpush.msra.mxu0 0.0
    %1744 = vmatpush.msra.mxu0 0.0
    %1745 = vmatpush.msra.mxu0 0.0
    %1746 = vmatpush.msra.mxu0 %v587
    %1747 = vmatpush.msra.mxu0 %v586
    %1748 = vmatmul.f32.gmra.mxu0 %v1689
    %v1749 = vpop.f32.mrf.mxu0
    %v1750 = vadd.f32 0.0, %v1749
    %1751 = vdwg.mxu0
    %v1752 = vadd.f32 %v1685, %v1750
    %v1753 = vadd.f32 %v1752, %v789
    %v1754 = vxor.u32 %v1753, 2147483648
    %v1755 = vmul.f32 %v1754, 1.442695
    %v1756 = vpow.pop %v1755
    %v1757 = vadd.f32 %v1756, 1.0
    %v1758 = vrcp.pop %v1757
    %v1759 = vmul.f32 %v1757, %v1758
    %v1760 = vsub.f32 1.0, %v1759
    %v1761 = vmul.f32 %v1758, %v1760
    %v1762 = vadd.f32 %v1758, %v1761
    %vm1763 = vweird.f32 %v1757
    %vm1764 = vweird.f32 %v1758
    %vm1765 = vmor %vm1763, %vm1764
    %v1766 = vsel %vm1765, %v1758, %v1762
    %v1767 = vand.u32 2147483647, %v1757
    %vm1768 = vcmp.eq.f32.partialorder %v1767, 8.507059e+37
    %v1769 = vand.u32 %v1757, 2147483648
    %v1770 = vor.u32 1.1754944e-38, %v1769
    %v1771 = vsel %vm1768, %v1770, %v1766
    %v1772 = vmul.f32 1.0, %v1771
    %1773 = vmatpush.msra.mxu0 0.0
    %1774 = vmatpush.msra.mxu0 0.0
    %1775 = vmatpush.msra.mxu0 0.0
    %1776 = vmatpush.msra.mxu0 0.0
    %1777 = vmatpush.msra.mxu0 0.0
    %1778 = vmatpush.msra.mxu0 0.0
    %1779 = vmatpush.msra.mxu0 0.0
    %1780 = vmatpush.msra.mxu0 0.0
    %1781 = vmatpush.msra.mxu0 0.0
    %1782 = vmatpush.msra.mxu0 0.0
    %1783 = vmatpush.msra.mxu0 0.0
    %1784 = vmatpush.msra.mxu0 0.0
    %1785 = vmatpush.msra.mxu0 0.0
    %1786 = vmatpush.msra.mxu0 0.0
    %1787 = vmatpush.msra.mxu0 %v589
    %1788 = vmatpush.msra.mxu0 %v588
    %1789 = vmatmul.f32.gmra.mxu0 %v1689
    %v1790 = vpop.f32.mrf.mxu0
    %v1791 = vadd.f32 %v812, %v1790
    %1792 = vdwg.mxu0
    %v1793 = vmul.f32 %v1731, %v1791
    %v1794 = vadd.f32 %v1687, %v1793
    %v1795 = vtanh.pop %v1794
    %v1796 = vsub.f32 1.0, %v1772
    %v1797 = vmul.f32 %v1796, %v1795
    %v1798 = vmul.f32 %v1772, %v1559
    %v1799 = vadd.f32 %v1797, %v1798
    %s1800 = scalar_lea.vmem [#allocation8], 32
    %1801 = vst.msk [vmem:[%s1800] sm:$0xff] %vm414, %v1681
    %s1802 = scalar_lea.vmem [#allocation9], 24
    %1803 = vst.msk [vmem:[%s1802] sm:$0xff] %vm414, %v1799
    %s1804 = scalar_lea.vmem [#allocation2], 40
    %v1805 = vld [vmem:[%s1804] sm:$0xff]
    %s1806 = scalar_lea.vmem [#allocation3], 40
    %v1807 = vld [vmem:[%s1806] sm:$0xff]
    %s1808 = scalar_lea.vmem [#allocation4], 40
    %v1809 = vld [vmem:[%s1808] sm:$0xff]
    %v1811 = vsel %vm414, %v1681, 0
    %1813 = vmatpush.msra.mxu0 0.0
    %1814 = vmatpush.msra.mxu0 0.0
    %1815 = vmatpush.msra.mxu0 0.0
    %1816 = vmatpush.msra.mxu0 0.0
    %1817 = vmatpush.msra.mxu0 0.0
    %1818 = vmatpush.msra.mxu0 0.0
    %1819 = vmatpush.msra.mxu0 0.0
    %1820 = vmatpush.msra.mxu0 0.0
    %1821 = vmatpush.msra.mxu0 0.0
    %1822 = vmatpush.msra.mxu0 0.0
    %1823 = vmatpush.msra.mxu0 0.0
    %1824 = vmatpush.msra.mxu0 0.0
    %1825 = vmatpush.msra.mxu0 0.0
    %1826 = vmatpush.msra.mxu0 0.0
    %1827 = vmatpush.msra.mxu0 %v576
    %1828 = vmatpush.msra.mxu0 %v575
    %1829 = vmatmul.f32.gmra.mxu0 %v1811
    %v1830 = vpop.f32.mrf.mxu0
    %v1831 = vadd.f32 0.0, %v1830
    %1832 = vdwg.mxu0
    %v1833 = vadd.f32 %v1805, %v1831
    %v1834 = vadd.f32 %v1833, %v621
    %v1835 = vxor.u32 %v1834, 2147483648
    %v1836 = vmul.f32 %v1835, 1.442695
    %v1837 = vpow.pop %v1836
    %v1838 = vadd.f32 %v1837, 1.0
    %v1839 = vrcp.pop %v1838
    %v1840 = vmul.f32 %v1838, %v1839
    %v1841 = vsub.f32 1.0, %v1840
    %v1842 = vmul.f32 %v1839, %v1841
    %v1843 = vadd.f32 %v1839, %v1842
    %vm1844 = vweird.f32 %v1838
    %vm1845 = vweird.f32 %v1839
    %vm1846 = vmor %vm1844, %vm1845
    %v1847 = vsel %vm1846, %v1839, %v1843
    %v1848 = vand.u32 2147483647, %v1838
    %vm1849 = vcmp.eq.f32.partialorder %v1848, 8.507059e+37
    %v1850 = vand.u32 %v1838, 2147483648
    %v1851 = vor.u32 1.1754944e-38, %v1850
    %v1852 = vsel %vm1849, %v1851, %v1847
    %v1853 = vmul.f32 1.0, %v1852
    %1854 = vmatpush.msra.mxu0 0.0
    %1855 = vmatpush.msra.mxu0 0.0
    %1856 = vmatpush.msra.mxu0 0.0
    %1857 = vmatpush.msra.mxu0 0.0
    %1858 = vmatpush.msra.mxu0 0.0
    %1859 = vmatpush.msra.mxu0 0.0
    %1860 = vmatpush.msra.mxu0 0.0
    %1861 = vmatpush.msra.mxu0 0.0
    %1862 = vmatpush.msra.mxu0 0.0
    %1863 = vmatpush.msra.mxu0 0.0
    %1864 = vmatpush.msra.mxu0 0.0
    %1865 = vmatpush.msra.mxu0 0.0
    %1866 = vmatpush.msra.mxu0 0.0
    %1867 = vmatpush.msra.mxu0 0.0
    %1868 = vmatpush.msra.mxu0 %v578
    %1869 = vmatpush.msra.mxu0 %v577
    %1870 = vmatmul.f32.gmra.mxu0 %v1811
    %v1871 = vpop.f32.mrf.mxu0
    %v1872 = vadd.f32 0.0, %v1871
    %1873 = vdwg.mxu0
    %v1874 = vadd.f32 %v1807, %v1872
    %v1875 = vadd.f32 %v1874, %v665
    %v1876 = vxor.u32 %v1875, 2147483648
    %v1877 = vmul.f32 %v1876, 1.442695
    %v1878 = vpow.pop %v1877
    %v1879 = vadd.f32 %v1878, 1.0
    %v1880 = vrcp.pop %v1879
    %v1881 = vmul.f32 %v1879, %v1880
    %v1882 = vsub.f32 1.0, %v1881
    %v1883 = vmul.f32 %v1880, %v1882
    %v1884 = vadd.f32 %v1880, %v1883
    %vm1885 = vweird.f32 %v1879
    %vm1886 = vweird.f32 %v1880
    %vm1887 = vmor %vm1885, %vm1886
    %v1888 = vsel %vm1887, %v1880, %v1884
    %v1889 = vand.u32 2147483647, %v1879
    %vm1890 = vcmp.eq.f32.partialorder %v1889, 8.507059e+37
    %v1891 = vand.u32 %v1879, 2147483648
    %v1892 = vor.u32 1.1754944e-38, %v1891
    %v1893 = vsel %vm1890, %v1892, %v1888
    %v1894 = vmul.f32 1.0, %v1893
    %1895 = vmatpush.msra.mxu0 0.0
    %1896 = vmatpush.msra.mxu0 0.0
    %1897 = vmatpush.msra.mxu0 0.0
    %1898 = vmatpush.msra.mxu0 0.0
    %1899 = vmatpush.msra.mxu0 0.0
    %1900 = vmatpush.msra.mxu0 0.0
    %1901 = vmatpush.msra.mxu0 0.0
    %1902 = vmatpush.msra.mxu0 0.0
    %1903 = vmatpush.msra.mxu0 0.0
    %1904 = vmatpush.msra.mxu0 0.0
    %1905 = vmatpush.msra.mxu0 0.0
    %1906 = vmatpush.msra.mxu0 0.0
    %1907 = vmatpush.msra.mxu0 0.0
    %1908 = vmatpush.msra.mxu0 0.0
    %1909 = vmatpush.msra.mxu0 %v580
    %1910 = vmatpush.msra.mxu0 %v579
    %1911 = vmatmul.f32.gmra.mxu0 %v1811
    %v1912 = vpop.f32.mrf.mxu0
    %v1913 = vadd.f32 %v688, %v1912
    %1914 = vdwg.mxu0
    %v1915 = vmul.f32 %v1853, %v1913
    %v1916 = vadd.f32 %v1809, %v1915
    %v1917 = vtanh.pop %v1916
    %v1918 = vsub.f32 1.0, %v1894
    %v1919 = vmul.f32 %v1918, %v1917
    %v1920 = vmul.f32 %v1894, %v1681
    %v1921 = vadd.f32 %v1919, %v1920
    %s1922 = scalar_lea.vmem [#allocation5], 16
    %v1923 = vld [vmem:[%s1922] sm:$0xff]
    %s1924 = scalar_lea.vmem [#allocation6], 16
    %v1925 = vld [vmem:[%s1924] sm:$0xff]
    %s1926 = scalar_lea.vmem [#allocation7], 16
    %v1927 = vld [vmem:[%s1926] sm:$0xff]
    %v1929 = vsel %vm414, %v1799, 0
    %1931 = vmatpush.msra.mxu0 0.0
    %1932 = vmatpush.msra.mxu0 0.0
    %1933 = vmatpush.msra.mxu0 0.0
    %1934 = vmatpush.msra.mxu0 0.0
    %1935 = vmatpush.msra.mxu0 0.0
    %1936 = vmatpush.msra.mxu0 0.0
    %1937 = vmatpush.msra.mxu0 0.0
    %1938 = vmatpush.msra.mxu0 0.0
    %1939 = vmatpush.msra.mxu0 0.0
    %1940 = vmatpush.msra.mxu0 0.0
    %1941 = vmatpush.msra.mxu0 0.0
    %1942 = vmatpush.msra.mxu0 0.0
    %1943 = vmatpush.msra.mxu0 0.0
    %1944 = vmatpush.msra.mxu0 0.0
    %1945 = vmatpush.msra.mxu0 %v585
    %1946 = vmatpush.msra.mxu0 %v584
    %1947 = vmatmul.f32.gmra.mxu0 %v1929
    %v1948 = vpop.f32.mrf.mxu0
    %v1949 = vadd.f32 0.0, %v1948
    %1950 = vdwg.mxu0
    %v1951 = vadd.f32 %v1923, %v1949
    %v1952 = vadd.f32 %v1951, %v745
    %v1953 = vxor.u32 %v1952, 2147483648
    %v1954 = vmul.f32 %v1953, 1.442695
    %v1955 = vpow.pop %v1954
    %v1956 = vadd.f32 %v1955, 1.0
    %v1957 = vrcp.pop %v1956
    %v1958 = vmul.f32 %v1956, %v1957
    %v1959 = vsub.f32 1.0, %v1958
    %v1960 = vmul.f32 %v1957, %v1959
    %v1961 = vadd.f32 %v1957, %v1960
    %vm1962 = vweird.f32 %v1956
    %vm1963 = vweird.f32 %v1957
    %vm1964 = vmor %vm1962, %vm1963
    %v1965 = vsel %vm1964, %v1957, %v1961
    %v1966 = vand.u32 2147483647, %v1956
    %vm1967 = vcmp.eq.f32.partialorder %v1966, 8.507059e+37
    %v1968 = vand.u32 %v1956, 2147483648
    %v1969 = vor.u32 1.1754944e-38, %v1968
    %v1970 = vsel %vm1967, %v1969, %v1965
    %v1971 = vmul.f32 1.0, %v1970
    %1972 = vmatpush.msra.mxu0 0.0
    %1973 = vmatpush.msra.mxu0 0.0
    %1974 = vmatpush.msra.mxu0 0.0
    %1975 = vmatpush.msra.mxu0 0.0
    %1976 = vmatpush.msra.mxu0 0.0
    %1977 = vmatpush.msra.mxu0 0.0
    %1978 = vmatpush.msra.mxu0 0.0
    %1979 = vmatpush.msra.mxu0 0.0
    %1980 = vmatpush.msra.mxu0 0.0
    %1981 = vmatpush.msra.mxu0 0.0
    %1982 = vmatpush.msra.mxu0 0.0
    %1983 = vmatpush.msra.mxu0 0.0
    %1984 = vmatpush.msra.mxu0 0.0
    %1985 = vmatpush.msra.mxu0 0.0
    %1986 = vmatpush.msra.mxu0 %v587
    %1987 = vmatpush.msra.mxu0 %v586
    %1988 = vmatmul.f32.gmra.mxu0 %v1929
    %v1989 = vpop.f32.mrf.mxu0
    %v1990 = vadd.f32 0.0, %v1989
    %1991 = vdwg.mxu0
    %v1992 = vadd.f32 %v1925, %v1990
    %v1993 = vadd.f32 %v1992, %v789
    %v1994 = vxor.u32 %v1993, 2147483648
    %v1995 = vmul.f32 %v1994, 1.442695
    %v1996 = vpow.pop %v1995
    %v1997 = vadd.f32 %v1996, 1.0
    %v1998 = vrcp.pop %v1997
    %v1999 = vmul.f32 %v1997, %v1998
    %v2000 = vsub.f32 1.0, %v1999
    %v2001 = vmul.f32 %v1998, %v2000
    %v2002 = vadd.f32 %v1998, %v2001
    %vm2003 = vweird.f32 %v1997
    %vm2004 = vweird.f32 %v1998
    %vm2005 = vmor %vm2003, %vm2004
    %v2006 = vsel %vm2005, %v1998, %v2002
    %v2007 = vand.u32 2147483647, %v1997
    %vm2008 = vcmp.eq.f32.partialorder %v2007, 8.507059e+37
    %v2009 = vand.u32 %v1997, 2147483648
    %v2010 = vor.u32 1.1754944e-38, %v2009
    %v2011 = vsel %vm2008, %v2010, %v2006
    %v2012 = vmul.f32 1.0, %v2011
    %2013 = vmatpush.msra.mxu0 0.0
    %2014 = vmatpush.msra.mxu0 0.0
    %2015 = vmatpush.msra.mxu0 0.0
    %2016 = vmatpush.msra.mxu0 0.0
    %2017 = vmatpush.msra.mxu0 0.0
    %2018 = vmatpush.msra.mxu0 0.0
    %2019 = vmatpush.msra.mxu0 0.0
    %2020 = vmatpush.msra.mxu0 0.0
    %2021 = vmatpush.msra.mxu0 0.0
    %2022 = vmatpush.msra.mxu0 0.0
    %2023 = vmatpush.msra.mxu0 0.0
    %2024 = vmatpush.msra.mxu0 0.0
    %2025 = vmatpush.msra.mxu0 0.0
    %2026 = vmatpush.msra.mxu0 0.0
    %2027 = vmatpush.msra.mxu0 %v589
    %2028 = vmatpush.msra.mxu0 %v588
    %2029 = vmatmul.f32.gmra.mxu0 %v1929
    %v2030 = vpop.f32.mrf.mxu0
    %v2031 = vadd.f32 %v812, %v2030
    %2032 = vdwg.mxu0
    %v2033 = vmul.f32 %v1971, %v2031
    %v2034 = vadd.f32 %v1927, %v2033
    %v2035 = vtanh.pop %v2034
    %v2036 = vsub.f32 1.0, %v2012
    %v2037 = vmul.f32 %v2036, %v2035
    %v2038 = vmul.f32 %v2012, %v1799
    %v2039 = vadd.f32 %v2037, %v2038
    %s2040 = scalar_lea.vmem [#allocation8], 40
    %2041 = vst.msk [vmem:[%s2040] sm:$0xff] %vm414, %v1921
    %s2042 = scalar_lea.vmem [#allocation9], 16
    %2043 = vst.msk [vmem:[%s2042] sm:$0xff] %vm414, %v2039
    %s2044 = scalar_lea.vmem [#allocation2], 48
    %v2045 = vld [vmem:[%s2044] sm:$0xff]
    %s2046 = scalar_lea.vmem [#allocation3], 48
    %v2047 = vld [vmem:[%s2046] sm:$0xff]
    %s2048 = scalar_lea.vmem [#allocation4], 48
    %v2049 = vld [vmem:[%s2048] sm:$0xff]
    %v2051 = vsel %vm414, %v1921, 0
    %2053 = vmatpush.msra.mxu0 0.0
    %2054 = vmatpush.msra.mxu0 0.0
    %2055 = vmatpush.msra.mxu0 0.0
    %2056 = vmatpush.msra.mxu0 0.0
    %2057 = vmatpush.msra.mxu0 0.0
    %2058 = vmatpush.msra.mxu0 0.0
    %2059 = vmatpush.msra.mxu0 0.0
    %2060 = vmatpush.msra.mxu0 0.0
    %2061 = vmatpush.msra.mxu0 0.0
    %2062 = vmatpush.msra.mxu0 0.0
    %2063 = vmatpush.msra.mxu0 0.0
    %2064 = vmatpush.msra.mxu0 0.0
    %2065 = vmatpush.msra.mxu0 0.0
    %2066 = vmatpush.msra.mxu0 0.0
    %2067 = vmatpush.msra.mxu0 %v576
    %2068 = vmatpush.msra.mxu0 %v575
    %2069 = vmatmul.f32.gmra.mxu0 %v2051
    %v2070 = vpop.f32.mrf.mxu0
    %v2071 = vadd.f32 0.0, %v2070
    %2072 = vdwg.mxu0
    %v2073 = vadd.f32 %v2045, %v2071
    %v2074 = vadd.f32 %v2073, %v621
    %v2075 = vxor.u32 %v2074, 2147483648
    %v2076 = vmul.f32 %v2075, 1.442695
    %v2077 = vpow.pop %v2076
    %v2078 = vadd.f32 %v2077, 1.0
    %v2079 = vrcp.pop %v2078
    %v2080 = vmul.f32 %v2078, %v2079
    %v2081 = vsub.f32 1.0, %v2080
    %v2082 = vmul.f32 %v2079, %v2081
    %v2083 = vadd.f32 %v2079, %v2082
    %vm2084 = vweird.f32 %v2078
    %vm2085 = vweird.f32 %v2079
    %vm2086 = vmor %vm2084, %vm2085
    %v2087 = vsel %vm2086, %v2079, %v2083
    %v2088 = vand.u32 2147483647, %v2078
    %vm2089 = vcmp.eq.f32.partialorder %v2088, 8.507059e+37
    %v2090 = vand.u32 %v2078, 2147483648
    %v2091 = vor.u32 1.1754944e-38, %v2090
    %v2092 = vsel %vm2089, %v2091, %v2087
    %v2093 = vmul.f32 1.0, %v2092
    %2094 = vmatpush.msra.mxu0 0.0
    %2095 = vmatpush.msra.mxu0 0.0
    %2096 = vmatpush.msra.mxu0 0.0
    %2097 = vmatpush.msra.mxu0 0.0
    %2098 = vmatpush.msra.mxu0 0.0
    %2099 = vmatpush.msra.mxu0 0.0
    %2100 = vmatpush.msra.mxu0 0.0
    %2101 = vmatpush.msra.mxu0 0.0
    %2102 = vmatpush.msra.mxu0 0.0
    %2103 = vmatpush.msra.mxu0 0.0
    %2104 = vmatpush.msra.mxu0 0.0
    %2105 = vmatpush.msra.mxu0 0.0
    %2106 = vmatpush.msra.mxu0 0.0
    %2107 = vmatpush.msra.mxu0 0.0
    %2108 = vmatpush.msra.mxu0 %v578
    %2109 = vmatpush.msra.mxu0 %v577
    %2110 = vmatmul.f32.gmra.mxu0 %v2051
    %v2111 = vpop.f32.mrf.mxu0
    %v2112 = vadd.f32 0.0, %v2111
    %2113 = vdwg.mxu0
    %v2114 = vadd.f32 %v2047, %v2112
    %v2115 = vadd.f32 %v2114, %v665
    %v2116 = vxor.u32 %v2115, 2147483648
    %v2117 = vmul.f32 %v2116, 1.442695
    %v2118 = vpow.pop %v2117
    %v2119 = vadd.f32 %v2118, 1.0
    %v2120 = vrcp.pop %v2119
    %v2121 = vmul.f32 %v2119, %v2120
    %v2122 = vsub.f32 1.0, %v2121
    %v2123 = vmul.f32 %v2120, %v2122
    %v2124 = vadd.f32 %v2120, %v2123
    %vm2125 = vweird.f32 %v2119
    %vm2126 = vweird.f32 %v2120
    %vm2127 = vmor %vm2125, %vm2126
    %v2128 = vsel %vm2127, %v2120, %v2124
    %v2129 = vand.u32 2147483647, %v2119
    %vm2130 = vcmp.eq.f32.partialorder %v2129, 8.507059e+37
    %v2131 = vand.u32 %v2119, 2147483648
    %v2132 = vor.u32 1.1754944e-38, %v2131
    %v2133 = vsel %vm2130, %v2132, %v2128
    %v2134 = vmul.f32 1.0, %v2133
    %2135 = vmatpush.msra.mxu0 0.0
    %2136 = vmatpush.msra.mxu0 0.0
    %2137 = vmatpush.msra.mxu0 0.0
    %2138 = vmatpush.msra.mxu0 0.0
    %2139 = vmatpush.msra.mxu0 0.0
    %2140 = vmatpush.msra.mxu0 0.0
    %2141 = vmatpush.msra.mxu0 0.0
    %2142 = vmatpush.msra.mxu0 0.0
    %2143 = vmatpush.msra.mxu0 0.0
    %2144 = vmatpush.msra.mxu0 0.0
    %2145 = vmatpush.msra.mxu0 0.0
    %2146 = vmatpush.msra.mxu0 0.0
    %2147 = vmatpush.msra.mxu0 0.0
    %2148 = vmatpush.msra.mxu0 0.0
    %2149 = vmatpush.msra.mxu0 %v580
    %2150 = vmatpush.msra.mxu0 %v579
    %2151 = vmatmul.f32.gmra.mxu0 %v2051
    %v2152 = vpop.f32.mrf.mxu0
    %v2153 = vadd.f32 %v688, %v2152
    %2154 = vdwg.mxu0
    %v2155 = vmul.f32 %v2093, %v2153
    %v2156 = vadd.f32 %v2049, %v2155
    %v2157 = vtanh.pop %v2156
    %v2158 = vsub.f32 1.0, %v2134
    %v2159 = vmul.f32 %v2158, %v2157
    %v2160 = vmul.f32 %v2134, %v1921
    %v2161 = vadd.f32 %v2159, %v2160
    %s2162 = scalar_lea.vmem [#allocation5], 8
    %v2163 = vld [vmem:[%s2162] sm:$0xff]
    %s2164 = scalar_lea.vmem [#allocation6], 8
    %v2165 = vld [vmem:[%s2164] sm:$0xff]
    %s2166 = scalar_lea.vmem [#allocation7], 8
    %v2167 = vld [vmem:[%s2166] sm:$0xff]
    %v2169 = vsel %vm414, %v2039, 0
    %2171 = vmatpush.msra.mxu0 0.0
    %2172 = vmatpush.msra.mxu0 0.0
    %2173 = vmatpush.msra.mxu0 0.0
    %2174 = vmatpush.msra.mxu0 0.0
    %2175 = vmatpush.msra.mxu0 0.0
    %2176 = vmatpush.msra.mxu0 0.0
    %2177 = vmatpush.msra.mxu0 0.0
    %2178 = vmatpush.msra.mxu0 0.0
    %2179 = vmatpush.msra.mxu0 0.0
    %2180 = vmatpush.msra.mxu0 0.0
    %2181 = vmatpush.msra.mxu0 0.0
    %2182 = vmatpush.msra.mxu0 0.0
    %2183 = vmatpush.msra.mxu0 0.0
    %2184 = vmatpush.msra.mxu0 0.0
    %2185 = vmatpush.msra.mxu0 %v585
    %2186 = vmatpush.msra.mxu0 %v584
    %2187 = vmatmul.f32.gmra.mxu0 %v2169
    %v2188 = vpop.f32.mrf.mxu0
    %v2189 = vadd.f32 0.0, %v2188
    %2190 = vdwg.mxu0
    %v2191 = vadd.f32 %v2163, %v2189
    %v2192 = vadd.f32 %v2191, %v745
    %v2193 = vxor.u32 %v2192, 2147483648
    %v2194 = vmul.f32 %v2193, 1.442695
    %v2195 = vpow.pop %v2194
    %v2196 = vadd.f32 %v2195, 1.0
    %v2197 = vrcp.pop %v2196
    %v2198 = vmul.f32 %v2196, %v2197
    %v2199 = vsub.f32 1.0, %v2198
    %v2200 = vmul.f32 %v2197, %v2199
    %v2201 = vadd.f32 %v2197, %v2200
    %vm2202 = vweird.f32 %v2196
    %vm2203 = vweird.f32 %v2197
    %vm2204 = vmor %vm2202, %vm2203
    %v2205 = vsel %vm2204, %v2197, %v2201
    %v2206 = vand.u32 2147483647, %v2196
    %vm2207 = vcmp.eq.f32.partialorder %v2206, 8.507059e+37
    %v2208 = vand.u32 %v2196, 2147483648
    %v2209 = vor.u32 1.1754944e-38, %v2208
    %v2210 = vsel %vm2207, %v2209, %v2205
    %v2211 = vmul.f32 1.0, %v2210
    %2212 = vmatpush.msra.mxu0 0.0
    %2213 = vmatpush.msra.mxu0 0.0
    %2214 = vmatpush.msra.mxu0 0.0
    %2215 = vmatpush.msra.mxu0 0.0
    %2216 = vmatpush.msra.mxu0 0.0
    %2217 = vmatpush.msra.mxu0 0.0
    %2218 = vmatpush.msra.mxu0 0.0
    %2219 = vmatpush.msra.mxu0 0.0
    %2220 = vmatpush.msra.mxu0 0.0
    %2221 = vmatpush.msra.mxu0 0.0
    %2222 = vmatpush.msra.mxu0 0.0
    %2223 = vmatpush.msra.mxu0 0.0
    %2224 = vmatpush.msra.mxu0 0.0
    %2225 = vmatpush.msra.mxu0 0.0
    %2226 = vmatpush.msra.mxu0 %v587
    %2227 = vmatpush.msra.mxu0 %v586
    %2228 = vmatmul.f32.gmra.mxu0 %v2169
    %v2229 = vpop.f32.mrf.mxu0
    %v2230 = vadd.f32 0.0, %v2229
    %2231 = vdwg.mxu0
    %v2232 = vadd.f32 %v2165, %v2230
    %v2233 = vadd.f32 %v2232, %v789
    %v2234 = vxor.u32 %v2233, 2147483648
    %v2235 = vmul.f32 %v2234, 1.442695
    %v2236 = vpow.pop %v2235
    %v2237 = vadd.f32 %v2236, 1.0
    %v2238 = vrcp.pop %v2237
    %v2239 = vmul.f32 %v2237, %v2238
    %v2240 = vsub.f32 1.0, %v2239
    %v2241 = vmul.f32 %v2238, %v2240
    %v2242 = vadd.f32 %v2238, %v2241
    %vm2243 = vweird.f32 %v2237
    %vm2244 = vweird.f32 %v2238
    %vm2245 = vmor %vm2243, %vm2244
    %v2246 = vsel %vm2245, %v2238, %v2242
    %v2247 = vand.u32 2147483647, %v2237
    %vm2248 = vcmp.eq.f32.partialorder %v2247, 8.507059e+37
    %v2249 = vand.u32 %v2237, 2147483648
    %v2250 = vor.u32 1.1754944e-38, %v2249
    %v2251 = vsel %vm2248, %v2250, %v2246
    %v2252 = vmul.f32 1.0, %v2251
    %2253 = vmatpush.msra.mxu0 0.0
    %2254 = vmatpush.msra.mxu0 0.0
    %2255 = vmatpush.msra.mxu0 0.0
    %2256 = vmatpush.msra.mxu0 0.0
    %2257 = vmatpush.msra.mxu0 0.0
    %2258 = vmatpush.msra.mxu0 0.0
    %2259 = vmatpush.msra.mxu0 0.0
    %2260 = vmatpush.msra.mxu0 0.0
    %2261 = vmatpush.msra.mxu0 0.0
    %2262 = vmatpush.msra.mxu0 0.0
    %2263 = vmatpush.msra.mxu0 0.0
    %2264 = vmatpush.msra.mxu0 0.0
    %2265 = vmatpush.msra.mxu0 0.0
    %2266 = vmatpush.msra.mxu0 0.0
    %2267 = vmatpush.msra.mxu0 %v589
    %2268 = vmatpush.msra.mxu0 %v588
    %2269 = vmatmul.f32.gmra.mxu0 %v2169
    %v2270 = vpop.f32.mrf.mxu0
    %v2271 = vadd.f32 %v812, %v2270
    %2272 = vdwg.mxu0
    %v2273 = vmul.f32 %v2211, %v2271
    %v2274 = vadd.f32 %v2167, %v2273
    %v2275 = vtanh.pop %v2274
    %v2276 = vsub.f32 1.0, %v2252
    %v2277 = vmul.f32 %v2276, %v2275
    %v2278 = vmul.f32 %v2252, %v2039
    %v2279 = vadd.f32 %v2277, %v2278
    %s2280 = scalar_lea.vmem [#allocation8], 48
    %2281 = vst.msk [vmem:[%s2280] sm:$0xff] %vm414, %v2161
    %s2282 = scalar_lea.vmem [#allocation9], 8
    %2283 = vst.msk [vmem:[%s2282] sm:$0xff] %vm414, %v2279
    %s2284 = scalar_lea.vmem [#allocation2], 56
    %v2285 = vld [vmem:[%s2284] sm:$0xff]
    %s2286 = scalar_lea.vmem [#allocation3], 56
    %v2287 = vld [vmem:[%s2286] sm:$0xff]
    %s2288 = scalar_lea.vmem [#allocation4], 56
    %v2289 = vld [vmem:[%s2288] sm:$0xff]
    %v2291 = vsel %vm414, %v2161, 0
    %2293 = vmatpush.msra.mxu0 0.0
    %2294 = vmatpush.msra.mxu0 0.0
    %2295 = vmatpush.msra.mxu0 0.0
    %2296 = vmatpush.msra.mxu0 0.0
    %2297 = vmatpush.msra.mxu0 0.0
    %2298 = vmatpush.msra.mxu0 0.0
    %2299 = vmatpush.msra.mxu0 0.0
    %2300 = vmatpush.msra.mxu0 0.0
    %2301 = vmatpush.msra.mxu0 0.0
    %2302 = vmatpush.msra.mxu0 0.0
    %2303 = vmatpush.msra.mxu0 0.0
    %2304 = vmatpush.msra.mxu0 0.0
    %2305 = vmatpush.msra.mxu0 0.0
    %2306 = vmatpush.msra.mxu0 0.0
    %2307 = vmatpush.msra.mxu0 %v576
    %2308 = vmatpush.msra.mxu0 %v575
    %2309 = vmatmul.f32.gmra.mxu0 %v2291
    %v2310 = vpop.f32.mrf.mxu0
    %v2311 = vadd.f32 0.0, %v2310
    %2312 = vdwg.mxu0
    %v2313 = vadd.f32 %v2285, %v2311
    %v2314 = vadd.f32 %v2313, %v621
    %v2315 = vxor.u32 %v2314, 2147483648
    %v2316 = vmul.f32 %v2315, 1.442695
    %v2317 = vpow.pop %v2316
    %v2318 = vadd.f32 %v2317, 1.0
    %v2319 = vrcp.pop %v2318
    %v2320 = vmul.f32 %v2318, %v2319
    %v2321 = vsub.f32 1.0, %v2320
    %v2322 = vmul.f32 %v2319, %v2321
    %v2323 = vadd.f32 %v2319, %v2322
    %vm2324 = vweird.f32 %v2318
    %vm2325 = vweird.f32 %v2319
    %vm2326 = vmor %vm2324, %vm2325
    %v2327 = vsel %vm2326, %v2319, %v2323
    %v2328 = vand.u32 2147483647, %v2318
    %vm2329 = vcmp.eq.f32.partialorder %v2328, 8.507059e+37
    %v2330 = vand.u32 %v2318, 2147483648
    %v2331 = vor.u32 1.1754944e-38, %v2330
    %v2332 = vsel %vm2329, %v2331, %v2327
    %v2333 = vmul.f32 1.0, %v2332
    %2334 = vmatpush.msra.mxu0 0.0
    %2335 = vmatpush.msra.mxu0 0.0
    %2336 = vmatpush.msra.mxu0 0.0
    %2337 = vmatpush.msra.mxu0 0.0
    %2338 = vmatpush.msra.mxu0 0.0
    %2339 = vmatpush.msra.mxu0 0.0
    %2340 = vmatpush.msra.mxu0 0.0
    %2341 = vmatpush.msra.mxu0 0.0
    %2342 = vmatpush.msra.mxu0 0.0
    %2343 = vmatpush.msra.mxu0 0.0
    %2344 = vmatpush.msra.mxu0 0.0
    %2345 = vmatpush.msra.mxu0 0.0
    %2346 = vmatpush.msra.mxu0 0.0
    %2347 = vmatpush.msra.mxu0 0.0
    %2348 = vmatpush.msra.mxu0 %v578
    %2349 = vmatpush.msra.mxu0 %v577
    %2350 = vmatmul.f32.gmra.mxu0 %v2291
    %v2351 = vpop.f32.mrf.mxu0
    %v2352 = vadd.f32 0.0, %v2351
    %2353 = vdwg.mxu0
    %v2354 = vadd.f32 %v2287, %v2352
    %v2355 = vadd.f32 %v2354, %v665
    %v2356 = vxor.u32 %v2355, 2147483648
    %v2357 = vmul.f32 %v2356, 1.442695
    %v2358 = vpow.pop %v2357
    %v2359 = vadd.f32 %v2358, 1.0
    %v2360 = vrcp.pop %v2359
    %v2361 = vmul.f32 %v2359, %v2360
    %v2362 = vsub.f32 1.0, %v2361
    %v2363 = vmul.f32 %v2360, %v2362
    %v2364 = vadd.f32 %v2360, %v2363
    %vm2365 = vweird.f32 %v2359
    %vm2366 = vweird.f32 %v2360
    %vm2367 = vmor %vm2365, %vm2366
    %v2368 = vsel %vm2367, %v2360, %v2364
    %v2369 = vand.u32 2147483647, %v2359
    %vm2370 = vcmp.eq.f32.partialorder %v2369, 8.507059e+37
    %v2371 = vand.u32 %v2359, 2147483648
    %v2372 = vor.u32 1.1754944e-38, %v2371
    %v2373 = vsel %vm2370, %v2372, %v2368
    %v2374 = vmul.f32 1.0, %v2373
    %2375 = vmatpush.msra.mxu0 0.0
    %2376 = vmatpush.msra.mxu0 0.0
    %2377 = vmatpush.msra.mxu0 0.0
    %2378 = vmatpush.msra.mxu0 0.0
    %2379 = vmatpush.msra.mxu0 0.0
    %2380 = vmatpush.msra.mxu0 0.0
    %2381 = vmatpush.msra.mxu0 0.0
    %2382 = vmatpush.msra.mxu0 0.0
    %2383 = vmatpush.msra.mxu0 0.0
    %2384 = vmatpush.msra.mxu0 0.0
    %2385 = vmatpush.msra.mxu0 0.0
    %2386 = vmatpush.msra.mxu0 0.0
    %2387 = vmatpush.msra.mxu0 0.0
    %2388 = vmatpush.msra.mxu0 0.0
    %2389 = vmatpush.msra.mxu0 %v580
    %2390 = vmatpush.msra.mxu0 %v579
    %2391 = vmatmul.f32.gmra.mxu0 %v2291
    %v2392 = vpop.f32.mrf.mxu0
    %v2393 = vadd.f32 %v688, %v2392
    %2394 = vdwg.mxu0
    %v2395 = vmul.f32 %v2333, %v2393
    %v2396 = vadd.f32 %v2289, %v2395
    %v2397 = vtanh.pop %v2396
    %v2398 = vsub.f32 1.0, %v2374
    %v2399 = vmul.f32 %v2398, %v2397
    %v2400 = vmul.f32 %v2374, %v2161
    %v2401 = vadd.f32 %v2399, %v2400
    %v2402 = vld [vmem:[#allocation5] sm:$0xff]
    %v2403 = vld [vmem:[#allocation6] sm:$0xff]
    %v2404 = vld [vmem:[#allocation7] sm:$0xff]
    %v2406 = vsel %vm414, %v2279, 0
    %2408 = vmatpush.msra.mxu0 0.0
    %2409 = vmatpush.msra.mxu0 0.0
    %2410 = vmatpush.msra.mxu0 0.0
    %2411 = vmatpush.msra.mxu0 0.0
    %2412 = vmatpush.msra.mxu0 0.0
    %2413 = vmatpush.msra.mxu0 0.0
    %2414 = vmatpush.msra.mxu0 0.0
    %2415 = vmatpush.msra.mxu0 0.0
    %2416 = vmatpush.msra.mxu0 0.0
    %2417 = vmatpush.msra.mxu0 0.0
    %2418 = vmatpush.msra.mxu0 0.0
    %2419 = vmatpush.msra.mxu0 0.0
    %2420 = vmatpush.msra.mxu0 0.0
    %2421 = vmatpush.msra.mxu0 0.0
    %2422 = vmatpush.msra.mxu0 %v585
    %2423 = vmatpush.msra.mxu0 %v584
    %2424 = vmatmul.f32.gmra.mxu0 %v2406
    %v2425 = vpop.f32.mrf.mxu0
    %v2426 = vadd.f32 0.0, %v2425
    %2427 = vdwg.mxu0
    %v2428 = vadd.f32 %v2402, %v2426
    %v2429 = vadd.f32 %v2428, %v745
    %v2430 = vxor.u32 %v2429, 2147483648
    %v2431 = vmul.f32 %v2430, 1.442695
    %v2432 = vpow.pop %v2431
    %v2433 = vadd.f32 %v2432, 1.0
    %v2434 = vrcp.pop %v2433
    %v2435 = vmul.f32 %v2433, %v2434
    %v2436 = vsub.f32 1.0, %v2435
    %v2437 = vmul.f32 %v2434, %v2436
    %v2438 = vadd.f32 %v2434, %v2437
    %vm2439 = vweird.f32 %v2433
    %vm2440 = vweird.f32 %v2434
    %vm2441 = vmor %vm2439, %vm2440
    %v2442 = vsel %vm2441, %v2434, %v2438
    %v2443 = vand.u32 2147483647, %v2433
    %vm2444 = vcmp.eq.f32.partialorder %v2443, 8.507059e+37
    %v2445 = vand.u32 %v2433, 2147483648
    %v2446 = vor.u32 1.1754944e-38, %v2445
    %v2447 = vsel %vm2444, %v2446, %v2442
    %v2448 = vmul.f32 1.0, %v2447
    %2449 = vmatpush.msra.mxu0 0.0
    %2450 = vmatpush.msra.mxu0 0.0
    %2451 = vmatpush.msra.mxu0 0.0
    %2452 = vmatpush.msra.mxu0 0.0
    %2453 = vmatpush.msra.mxu0 0.0
    %2454 = vmatpush.msra.mxu0 0.0
    %2455 = vmatpush.msra.mxu0 0.0
    %2456 = vmatpush.msra.mxu0 0.0
    %2457 = vmatpush.msra.mxu0 0.0
    %2458 = vmatpush.msra.mxu0 0.0
    %2459 = vmatpush.msra.mxu0 0.0
    %2460 = vmatpush.msra.mxu0 0.0
    %2461 = vmatpush.msra.mxu0 0.0
    %2462 = vmatpush.msra.mxu0 0.0
    %2463 = vmatpush.msra.mxu0 %v587
    %2464 = vmatpush.msra.mxu0 %v586
    %2465 = vmatmul.f32.gmra.mxu0 %v2406
    %v2466 = vpop.f32.mrf.mxu0
    %v2467 = vadd.f32 0.0, %v2466
    %2468 = vdwg.mxu0
    %v2469 = vadd.f32 %v2403, %v2467
    %v2470 = vadd.f32 %v2469, %v789
    %v2471 = vxor.u32 %v2470, 2147483648
    %v2472 = vmul.f32 %v2471, 1.442695
    %v2473 = vpow.pop %v2472
    %v2474 = vadd.f32 %v2473, 1.0
    %v2475 = vrcp.pop %v2474
    %v2476 = vmul.f32 %v2474, %v2475
    %v2477 = vsub.f32 1.0, %v2476
    %v2478 = vmul.f32 %v2475, %v2477
    %v2479 = vadd.f32 %v2475, %v2478
    %vm2480 = vweird.f32 %v2474
    %vm2481 = vweird.f32 %v2475
    %vm2482 = vmor %vm2480, %vm2481
    %v2483 = vsel %vm2482, %v2475, %v2479
    %v2484 = vand.u32 2147483647, %v2474
    %vm2485 = vcmp.eq.f32.partialorder %v2484, 8.507059e+37
    %v2486 = vand.u32 %v2474, 2147483648
    %v2487 = vor.u32 1.1754944e-38, %v2486
    %v2488 = vsel %vm2485, %v2487, %v2483
    %v2489 = vmul.f32 1.0, %v2488
    %2490 = vmatpush.msra.mxu0 0.0
    %2491 = vmatpush.msra.mxu0 0.0
    %2492 = vmatpush.msra.mxu0 0.0
    %2493 = vmatpush.msra.mxu0 0.0
    %2494 = vmatpush.msra.mxu0 0.0
    %2495 = vmatpush.msra.mxu0 0.0
    %2496 = vmatpush.msra.mxu0 0.0
    %2497 = vmatpush.msra.mxu0 0.0
    %2498 = vmatpush.msra.mxu0 0.0
    %2499 = vmatpush.msra.mxu0 0.0
    %2500 = vmatpush.msra.mxu0 0.0
    %2501 = vmatpush.msra.mxu0 0.0
    %2502 = vmatpush.msra.mxu0 0.0
    %2503 = vmatpush.msra.mxu0 0.0
    %2504 = vmatpush.msra.mxu0 %v589
    %2505 = vmatpush.msra.mxu0 %v588
    %2506 = vmatmul.f32.gmra.mxu0 %v2406
    %v2507 = vpop.f32.mrf.mxu0
    %v2508 = vadd.f32 %v812, %v2507
    %2509 = vdwg.mxu0
    %v2510 = vmul.f32 %v2448, %v2508
    %v2511 = vadd.f32 %v2404, %v2510
    %v2512 = vtanh.pop %v2511
    %v2513 = vsub.f32 1.0, %v2489
    %v2514 = vmul.f32 %v2513, %v2512
    %v2515 = vmul.f32 %v2489, %v2279
    %v2516 = vadd.f32 %v2514, %v2515
    %s2517 = scalar_lea.vmem [#allocation8], 56
    %2518 = vst.msk [vmem:[%s2517] sm:$0xff] %vm414, %v2401
    %2519 = vst.msk [vmem:[#allocation9] sm:$0xff] %vm414, %v2516
    %v2520 = vld [vmem:[#allocation8] sm:$0xff]
    %v2521 = vld [vmem:[#allocation8 + $0x8] sm:$0xff]
    %v2522 = vld [vmem:[#allocation8 + $0x10] sm:$0xff]
    %v2523 = vld [vmem:[#allocation8 + $0x18] sm:$0xff]
    %v2524 = vld [vmem:[#allocation8 + $0x20] sm:$0xff]
    %v2525 = vld [vmem:[#allocation8 + $0x28] sm:$0xff]
    %v2526 = vld [vmem:[#allocation8 + $0x30] sm:$0xff]
    %v2527 = vld [vmem:[#allocation8 + $0x38] sm:$0xff]
    %v2528 = vld [vmem:[#allocation9] sm:$0xff]
    %v2529 = vld [vmem:[#allocation9 + $0x8] sm:$0xff]
    %v2530 = vld [vmem:[#allocation9 + $0x10] sm:$0xff]
    %v2531 = vld [vmem:[#allocation9 + $0x18] sm:$0xff]
    %v2532 = vld [vmem:[#allocation9 + $0x20] sm:$0xff]
    %v2533 = vld [vmem:[#allocation9 + $0x28] sm:$0xff]
    %v2534 = vld [vmem:[#allocation9 + $0x30] sm:$0xff]
    %v2535 = vld [vmem:[#allocation9 + $0x38] sm:$0xff]
    %v2536 = vld [vmem:[%s17] sm:$0xff]
    %v2537 = vld [vmem:[%s17 + $0x8] sm:$0xff]
    %v2538 = vld [vmem:[%s18] sm:$0xff]
    %v2539 = vld [vmem:[%s18 + $0x8] sm:$0xff]
    %v2541 = vsel %vm414, %v2528, 0
    %v2544 = vsel %vm414, %v2529, 0
    %v2547 = vsel %vm414, %v2530, 0
    %v2550 = vsel %vm414, %v2531, 0
    %v2553 = vsel %vm414, %v2532, 0
    %v2556 = vsel %vm414, %v2533, 0
    %v2559 = vsel %vm414, %v2534, 0
    %v2562 = vsel %vm414, %v2535, 0
    %2564 = vmatpush.msra.mxu0 0.0
    %2565 = vmatpush.msra.mxu0 0.0
    %2566 = vmatpush.msra.mxu0 0.0
    %2567 = vmatpush.msra.mxu0 0.0
    %2568 = vmatpush.msra.mxu0 0.0
    %2569 = vmatpush.msra.mxu0 0.0
    %2570 = vmatpush.msra.mxu0 0.0
    %2571 = vmatpush.msra.mxu0 0.0
    %2572 = vmatpush.msra.mxu0 0.0
    %2573 = vmatpush.msra.mxu0 0.0
    %2574 = vmatpush.msra.mxu0 0.0
    %2575 = vmatpush.msra.mxu0 0.0
    %2576 = vmatpush.msra.mxu0 0.0
    %2577 = vmatpush.msra.mxu0 0.0
    %2578 = vmatpush.msra.mxu0 %v2539
    %2579 = vmatpush.msra.mxu0 %v2538
    %2580 = vmatmul.f32.gmra.mxu0 %v2541
    %v2581 = vpop.f32.mrf.mxu0
    %v2582 = vadd.f32 0.0, %v2581
    %2583 = vmatmul.f32.gmra.mxu0 %v2544
    %v2584 = vpop.f32.mrf.mxu0
    %v2585 = vadd.f32 0.0, %v2584
    %2586 = vmatmul.f32.gmra.mxu0 %v2547
    %v2587 = vpop.f32.mrf.mxu0
    %v2588 = vadd.f32 0.0, %v2587
    %2589 = vmatmul.f32.gmra.mxu0 %v2550
    %v2590 = vpop.f32.mrf.mxu0
    %v2591 = vadd.f32 0.0, %v2590
    %2592 = vmatmul.f32.gmra.mxu0 %v2553
    %v2593 = vpop.f32.mrf.mxu0
    %v2594 = vadd.f32 0.0, %v2593
    %2595 = vmatmul.f32.gmra.mxu0 %v2556
    %v2596 = vpop.f32.mrf.mxu0
    %v2597 = vadd.f32 0.0, %v2596
    %2598 = vmatmul.f32.gmra.mxu0 %v2559
    %v2599 = vpop.f32.mrf.mxu0
    %v2600 = vadd.f32 0.0, %v2599
    %2601 = vmatmul.f32.gmra.mxu0 %v2562
    %v2602 = vpop.f32.mrf.mxu0
    %v2603 = vadd.f32 0.0, %v2602
    %2604 = vdwg.mxu0
    %v2606 = vsel %vm414, %v2520, 0
    %v2609 = vsel %vm414, %v2521, 0
    %v2612 = vsel %vm414, %v2522, 0
    %v2615 = vsel %vm414, %v2523, 0
    %v2618 = vsel %vm414, %v2524, 0
    %v2621 = vsel %vm414, %v2525, 0
    %v2624 = vsel %vm414, %v2526, 0
    %v2627 = vsel %vm414, %v2527, 0
    %2629 = vmatpush.msra.mxu0 0.0
    %2630 = vmatpush.msra.mxu0 0.0
    %2631 = vmatpush.msra.mxu0 0.0
    %2632 = vmatpush.msra.mxu0 0.0
    %2633 = vmatpush.msra.mxu0 0.0
    %2634 = vmatpush.msra.mxu0 0.0
    %2635 = vmatpush.msra.mxu0 0.0
    %2636 = vmatpush.msra.mxu0 0.0
    %2637 = vmatpush.msra.mxu0 0.0
    %2638 = vmatpush.msra.mxu0 0.0
    %2639 = vmatpush.msra.mxu0 0.0
    %2640 = vmatpush.msra.mxu0 0.0
    %2641 = vmatpush.msra.mxu0 0.0
    %2642 = vmatpush.msra.mxu0 0.0
    %2643 = vmatpush.msra.mxu0 %v2537
    %2644 = vmatpush.msra.mxu0 %v2536
    %2645 = vmatmul.f32.gmra.mxu0 %v2606
    %v2646 = vpop.f32.mrf.mxu0
    %v2647 = vadd.f32 %v2582, %v2646
    %2648 = vmatmul.f32.gmra.mxu0 %v2609
    %v2649 = vpop.f32.mrf.mxu0
    %v2650 = vadd.f32 %v2585, %v2649
    %2651 = vmatmul.f32.gmra.mxu0 %v2612
    %v2652 = vpop.f32.mrf.mxu0
    %v2653 = vadd.f32 %v2588, %v2652
    %2654 = vmatmul.f32.gmra.mxu0 %v2615
    %v2655 = vpop.f32.mrf.mxu0
    %v2656 = vadd.f32 %v2591, %v2655
    %2657 = vmatmul.f32.gmra.mxu0 %v2618
    %v2658 = vpop.f32.mrf.mxu0
    %v2659 = vadd.f32 %v2594, %v2658
    %2660 = vmatmul.f32.gmra.mxu0 %v2621
    %v2661 = vpop.f32.mrf.mxu0
    %v2662 = vadd.f32 %v2597, %v2661
    %2663 = vmatmul.f32.gmra.mxu0 %v2624
    %v2664 = vpop.f32.mrf.mxu0
    %v2665 = vadd.f32 %v2600, %v2664
    %2666 = vmatmul.f32.gmra.mxu0 %v2627
    %v2667 = vpop.f32.mrf.mxu0
    %v2668 = vadd.f32 %v2603, %v2667
    %2669 = vdwg.mxu0
    %v2670 = vld [vmem:[%s19] sm:$0x1]
    %v2672 = vperm.slane %v2670, 0
    %v2674 = vadd.f32 %v2647, %v2672
    %v2675 = vadd.f32 %v2650, %v2672
    %v2676 = vadd.f32 %v2653, %v2672
    %v2677 = vadd.f32 %v2656, %v2672
    %v2678 = vadd.f32 %v2659, %v2672
    %v2679 = vadd.f32 %v2662, %v2672
    %v2680 = vadd.f32 %v2665, %v2672
    %v2681 = vadd.f32 %v2668, %v2672
    %vm2682 = vcmask 64512
    %2683 = vst.msk [vmem:[#allocation34] sm:$0xff] %vm2682, %v2674
    %2684 = vst.msk [vmem:[#allocation34 + $0x8] sm:$0xff] %vm2682, %v2675
    %2685 = vst.msk [vmem:[#allocation34 + $0x10] sm:$0xff] %vm2682, %v2676
    %2686 = vst.msk [vmem:[#allocation34 + $0x18] sm:$0xff] %vm2682, %v2677
    %2687 = vst.msk [vmem:[#allocation34 + $0x20] sm:$0xff] %vm2682, %v2678
    %2688 = vst.msk [vmem:[#allocation34 + $0x28] sm:$0xff] %vm2682, %v2679
    %2689 = vst.msk [vmem:[#allocation34 + $0x30] sm:$0xff] %vm2682, %v2680
    %2690 = vst.msk [vmem:[#allocation34 + $0x38] sm:$0xff] %vm2682, %v2681
    // Predicated region
    $region142: #{tpu_custom_call.1} parent=1 // pred_check
      _
    $region143: #{tpu_custom_call.1} parent=1 // pred_check_branch
      %2692 = sbr.rel (0) target = $region145
    $region144: #{tpu_custom_call.1} parent=1 // pred_region
      %2694 = vsyncadd [#allocation12], 0
      %s2695 = sshll.u32 [#allocation34], 4
      %s2696 = int_to_ptr.vmem [resolvable:$true] %s2695
      %s2697 = sshll.u32 %s20, 4
      %s2698 = int_to_ptr.hbm [resolvable:$true] %s2697
      %2703 = dma.vmem_to_hbm [thread:$0]  %s2696, 1024, %s2698, [#allocation12], 128, 128, 8
    $region145: #{tpu_custom_call.1} parent=1 // pred_fallthru
      _
    // Predicated region
    $region146: #{tpu_custom_call.1} parent=1 // pred_check
      _
    $region147: #{tpu_custom_call.1} parent=1 // pred_check_branch
      %2705 = sbr.rel (0) target = $region149
    $region148: #{tpu_custom_call.1} parent=1 // pred_region
      %2707 = dma.done [#allocation12], 1024
    $region149: #{tpu_custom_call.1} parent=1 // pred_fallthru
      _
    %2708 = vsyncpa [#allocation11], 1
    %2709 = vsyncpa [#allocation14], 1
    %2710 = vsyncpa [#allocation17], 1
    %2711 = vsyncpa [#allocation20], 1
    %2712 = vsyncpa [#allocation23], 1
    %2713 = vsyncpa [#allocation26], 1
    %2714 = vsyncpa [#allocation29], 1
    %2715 = vsyncpa [#allocation32], 1
    %2716 = vsyncpa [#allocation12], 1

</llo_original>
